<compile_context>
chip_gen: v5e
topology: v5e:2x2
jax: 0.10.0
libtpu: 0.0.40
codegen_flags: <defaults>
</compile_context>

<pallas_src>
import functools

import numpy as np
import jax
import jax.numpy as jnp
from jax import lax
from jax.experimental import pallas as pl
from jax.experimental.pallas import tpu as pltpu

MAX_INST = 8            # static upper bound on instances per sample
N_SIGMA = 3
FG_WEIGHT = 10.0
DEFAULT_TILE_N = 32768  # voxels per tile (multiple of 128)
VMEM_LIMIT_BYTES = 48 * 1024 * 1024   # safe on v5e/v6e (128 MiB) and v7x (64 MiB)


def _round_up(x, m):
    return ((x + m - 1) // m) * m


def _cdiv(a, b):
    return (a + b - 1) // b


def _divmod_const(v, c):
    """Vector divmod by a compile-time constant (shift/mask when power of two)."""
    c = int(c)
    if c & (c - 1) == 0:
        shift = c.bit_length() - 1
        return v >> shift, v & (c - 1)
    # TODO(synk): generic path relies on vector int32 div/rem lowering in Mosaic.
    q = v // c
    return q, v - q * c


def _tile_coords(t, *, tile_n, n_vox, height, width, steps):
    """In-kernel xyz grid (3, TN) + validity mask (1, TN) from iota (no HBM DMA)."""
    base = t * tile_n
    valid = (base + lax.broadcasted_iota(jnp.int32, (1, tile_n), 1)) < n_vox
    v = base + lax.broadcasted_iota(jnp.int32, (3, tile_n), 1)      # global voxel idx
    d, r = _divmod_const(v, height * width)
    h, w = _divmod_const(r, width)
    row = lax.broadcasted_iota(jnp.int32, (3, tile_n), 0)
    coord = jnp.where(row == 0, w, jnp.where(row == 1, h, d)).astype(jnp.float32)
    step = jnp.where(row == 0, steps[0], jnp.where(row == 1, steps[1], steps[2]))
    xyz = coord * step.astype(jnp.float32)                          # row0=x, row1=y, row2=z
    return xyz, valid


# ----------------------------------------------------------------------------
# Pass 1: per-instance masked sums via MXU dots contracting the voxel axis.
# ----------------------------------------------------------------------------
def _stats_kernel(ids_ref, pred_ref, inst_ref, cimg_ref, stats_ref, *,
                  n_sigma, tile_n, n_vox, height, width, steps):
    t = pl.program_id(1)
    xyz, valid = _tile_coords(t, tile_n=tile_n, n_vox=n_vox, height=height,
                              width=width, steps=steps)

    ids = ids_ref[0]                                   # (MI, 1) int32
    inst = inst_ref[0]                                 # (1, TN) int32
    cimg = cimg_ref[0]                                 # (1, TN) int32

    # sanitize pred-derived values on the (possibly OOB) tail so 0*NaN never
    # reaches the MXU accumulation
    sig = jnp.where(valid, pred_ref[0, 3:3 + n_sigma, :], 0.0)      # (n_sigma, TN)

    m = jnp.where((inst == ids) & (ids != 0) & valid, 1.0, 0.0)     # (MI, TN)
    cf = jnp.where(cimg != 0, 1.0, 0.0)                             # (1, TN)
    mcf = m * cf

    dn = (((1,), (1,)), ((), ()))                                   # contract lanes
    sums_xyz = lax.dot_general(m, xyz, dn, preferred_element_type=jnp.float32)
    sums_cxyz = lax.dot_general(mcf, xyz, dn, preferred_element_type=jnp.float32)
    sums_sig = lax.dot_general(m, sig, dn, preferred_element_type=jnp.float32)
    sums_sig2 = lax.dot_general(m, sig * sig, dn, preferred_element_type=jnp.float32)
    cnt = jnp.sum(m, axis=1, keepdims=True)                         # (MI, 1)
    ccnt = jnp.sum(mcf, axis=1, keepdims=True)                      # (MI, 1)

    # tiny lane-concat -> one (MI, 14) partial per (b, t)
    stats_ref[0, 0] = jnp.concatenate(
        [cnt, ccnt, sums_xyz, sums_cxyz, sums_sig, sums_sig2], axis=1)


# ----------------------------------------------------------------------------
# Pass 2: dense (MAX_INST, TILE_N) dist maps (MXU) + per-tile seed-loss partial.
# ----------------------------------------------------------------------------
def _dist_seed_kernel(ids_ref, par_ref, pred_ref, inst_ref, lab_ref,
                      dist_ref, seed_ref, *,
                      n_sigma, fg_weight, tile_n, n_vox, height, width, steps):
    t = pl.program_id(1)
    xyz, valid = _tile_coords(t, tile_n=tile_n, n_vox=n_vox, height=height,
                              width=width, steps=steps)

    ids = ids_ref[0]                                   # (MI, 1) int32
    par = par_ref[0]                                   # (MI, 7): [s(3), -2sc(3), sum s c^2]
    inst = inst_ref[0]                                 # (1, TN)
    lab = lab_ref[0]                                   # (1, TN)

    emb = jnp.tanh(pred_ref[0, 0:3, :]) + xyz                              # (3, TN)
    seed = jax.nn.sigmoid(pred_ref[0, 3 + n_sigma:3 + n_sigma + 1, :])     # (1, TN)

    # arg[j, n] = sum_k s_jk * (emb_k(n) - c_jk)^2 in MXU coefficient form
    s_mat = par[:, 0:3]
    b_mat = par[:, 3:6]
    c0 = par[:, 6:7]
    dn = (((1,), (0,)), ((), ()))
    arg = (lax.dot_general(s_mat, emb * emb, dn, preferred_element_type=jnp.float32)
           + lax.dot_general(b_mat, emb, dn, preferred_element_type=jnp.float32)
           + c0)                                                           # (MI, TN)
    dist = jnp.exp(-arg)                                                   # (MI, TN)
    dist_ref[0] = dist.astype(jnp.bfloat16)            # lane-dense bf16 tile write

    # seed loss partial: bg seed^2 + fg_weight * sum_j mask_j*(seed - dist_j)^2
    matches = (inst == ids) & (ids != 0) & valid                           # (MI, TN)
    bg = jnp.where((lab == 0) & valid, seed * seed, 0.0)                   # (1, TN)
    fg = jnp.where(matches, (seed - dist) ** 2, 0.0)                       # (MI, TN)
    bg_sum = jnp.sum(bg, axis=1, keepdims=True)                            # (1, 1)
    fg_sum = jnp.sum(jnp.sum(fg, axis=1, keepdims=True), axis=0, keepdims=True)
    seed_ref[0, 0] = bg_sum + fg_weight * fg_sum


# ----------------------------------------------------------------------------
# Plain-JAX glue: Lovasz hinge (sort + cumsum -> no clean Pallas equivalent).
# ----------------------------------------------------------------------------
def _lovasz_hinge_flat(logits, labels):
    signs = 2.0 * labels - 1.0
    errors = 1.0 - logits * signs
    neg_err_sorted, gt_sorted = lax.sort((-errors, labels), num_keys=1)
    errors_sorted = -neg_err_sorted                     # descending errors
    gts = jnp.sum(labels)
    intersection = gts - jnp.cumsum(gt_sorted)
    union = gts + jnp.cumsum(1.0 - gt_sorted)
    jaccard = 1.0 - intersection / union
    jaccard = jnp.concatenate([jaccard[:1], jaccard[1:] - jaccard[:-1]])
    return jnp.dot(jax.nn.relu(errors_sorted), jaccard)


# ----------------------------------------------------------------------------
# Wrapper reproducing SpatialEmbLoss_3d.forward (use_costmap=False path).
# Fully jittable.
# ----------------------------------------------------------------------------
def spatial_emb_loss_forward(prediction, instances, labels, center_images,
                             w_inst=1.0, w_var=10.0, w_seed=1.0,
                             grid_z=32, grid_y=1024, grid_x=1024,
                             pixel_z=1.0, pixel_y=1.0, pixel_x=1.0,
                             n_sigma=N_SIGMA, foreground_weight=FG_WEIGHT,
                             max_inst=MAX_INST, tile_n=None):
    B, C, D, H, W = prediction.shape
    assert C == 3 + n_sigma + 1
    assert n_sigma == 3
    N = D * H * W
    lane = 128

    if tile_n is None:
        tile_n = DEFAULT_TILE_N
    tile_n = max(lane, (int(tile_n) // lane) * lane)
    tile_n = min(tile_n, _round_up(N, lane))
    nt = _cdiv(N, tile_n)

    # torch.linspace(0, pixel, grid)[:dim] == index * pixel / (grid - 1)
    steps = (pixel_x / max(grid_x - 1, 1),
             pixel_y / max(grid_y - 1, 1),
             pixel_z / max(grid_z - 1, 1))

    pred = prediction.reshape(B, C, N).astype(jnp.float32)
    inst = instances.reshape(B, 1, N).astype(jnp.int32)
    lab = labels.reshape(B, 1, N).astype(jnp.int32)
    cimg = center_images.reshape(B, 1, N).astype(jnp.int32)
    inst_flat = inst[:, 0, :]                                           # (B, N)

    # ---- jit-compatible instance-id extraction (torch .unique()) ----
    # TODO(synk): ids beyond max_inst per sample are silently truncated
    # (the max_inst smallest nonzero ids are kept).
    int_max = jnp.iinfo(jnp.int32).max
    id_rows = []
    for b in range(B):
        masked = jnp.where(inst_flat[b] == 0, int_max, inst_flat[b])
        u = jnp.unique(masked, size=max_inst, fill_value=int_max)
        id_rows.append(jnp.where(u == int_max, 0, u))
    ids = jnp.stack(id_rows, axis=0).astype(jnp.int32)                  # (B, MI)
    ids_arr = ids[:, :, None]                                           # (B, MI, 1)

    f_dim = 8 + 2 * n_sigma   # [cnt, ccnt, xyz(3), c*xyz(3), sigma(3), sigma^2(3)]

    # ------------------- pass 1: per-instance masked sums -------------------
    stats_parts = pl.pallas_call(
        functools.partial(_stats_kernel, n_sigma=n_sigma, tile_n=tile_n,
                          n_vox=N, height=H, width=W, steps=steps),
        out_shape=jax.ShapeDtypeStruct((B, nt, max_inst, f_dim), jnp.float32),
        grid_spec=pltpu.PrefetchScalarGridSpec(
            num_scalar_prefetch=0,
            grid=(B, nt),
            in_specs=[
                pl.BlockSpec((1, max_inst, 1), lambda b, t: (b, 0, 0)),   # ids
                pl.BlockSpec((1, C, tile_n), lambda b, t: (b, 0, t)),     # prediction
                pl.BlockSpec((1, 1, tile_n), lambda b, t: (b, 0, t)),     # instances
                pl.BlockSpec((1, 1, tile_n), lambda b, t: (b, 0, t)),     # center imgs
            ],
            out_specs=pl.BlockSpec((1, 1, max_inst, f_dim),
                                   lambda b, t: (b, t, 0, 0)),
        ),
        compiler_params=pltpu.CompilerParams(
            dimension_semantics=("parallel", "parallel"),
            vmem_limit_bytes=VMEM_LIMIT_BYTES),
    )(ids_arr, pred, inst, cimg)
    stats = jnp.sum(stats_parts, axis=1)                                 # (B, MI, F)

    # ---------------- finalize centers / sigma stats (tiny glue) ------------
    valid_i = ids != 0                                                   # (B, MI)
    cnt = stats[..., 0]
    ccnt = stats[..., 1]
    sxyz = stats[..., 2:5]
    scxyz = stats[..., 5:8]
    ssig = stats[..., 8:8 + n_sigma]
    ssig2 = stats[..., 8 + n_sigma:8 + 2 * n_sigma]

    cnt_c = jnp.maximum(cnt, 1.0)[..., None]                             # (B, MI, 1)
    center = jnp.where((ccnt == 1.0)[..., None], scxyz, sxyz / cnt_c)
    smean = ssig / cnt_c
    s = jnp.exp(10.0 * smean)
    var_per = jnp.maximum(jnp.sum(ssig2 - cnt_c * smean * smean, axis=-1),
                          0.0) / (n_sigma * cnt_c[..., 0])               # (B, MI)

    # invalid slots -> huge center / unit bandwidth so their dist rows are ~0
    vmask = valid_i[..., None]
    c_use = jnp.where(vmask, center, 1.0e4)
    s_use = jnp.where(vmask, s, 1.0)
    params = jnp.concatenate(
        [s_use, -2.0 * s_use * c_use,
         jnp.sum(s_use * c_use * c_use, axis=-1, keepdims=True)], axis=-1)  # (B, MI, 7)

    # ------------------- pass 2: dist maps + seed loss ----------------------
    dist, seed_parts = pl.pallas_call(
        functools.partial(_dist_seed_kernel, n_sigma=n_sigma,
                          fg_weight=float(foreground_weight),
                          tile_n=tile_n, n_vox=N, height=H, width=W, steps=steps),
        out_shape=(jax.ShapeDtypeStruct((B, max_inst, N), jnp.bfloat16),
                   jax.ShapeDtypeStruct((B, nt, 1, 1), jnp.float32)),
        grid_spec=pltpu.PrefetchScalarGridSpec(
            num_scalar_prefetch=0,
            grid=(B, nt),
            in_specs=[
                pl.BlockSpec((1, max_inst, 1), lambda b, t: (b, 0, 0)),   # ids
                pl.BlockSpec((1, max_inst, 7), lambda b, t: (b, 0, 0)),   # coeffs
                pl.BlockSpec((1, C, tile_n), lambda b, t: (b, 0, t)),     # prediction
                pl.BlockSpec((1, 1, tile_n), lambda b, t: (b, 0, t)),     # instances
                pl.BlockSpec((1, 1, tile_n), lambda b, t: (b, 0, t)),     # labels
            ],
            out_specs=[
                pl.BlockSpec((1, max_inst, tile_n), lambda b, t: (b, 0, t)),
                pl.BlockSpec((1, 1, 1, 1), lambda b, t: (b, t, 0, 0)),
            ],
        ),
        compiler_params=pltpu.CompilerParams(
            dimension_semantics=("parallel", "parallel"),
            vmem_limit_bytes=VMEM_LIMIT_BYTES),
    )(ids_arr, params, pred, inst, lab)

    seed_loss_b = jnp.sum(seed_parts, axis=(1, 2, 3)) / float(N)         # (B,)

    # --------- Lovasz hinge per instance (plain JAX, vmapped) ---------------
    # TODO(synk): lovasz_hinge's sort/cumsum has no clean Pallas TPU equivalent.
    def _per_instance_loss(dist_row, id_, inst_vec):
        lbl = (inst_vec == id_).astype(jnp.float32)
        logits = 2.0 * dist_row.astype(jnp.float32) - 1.0
        return _lovasz_hinge_flat(logits, lbl)

    inst_losses = jax.vmap(jax.vmap(_per_instance_loss, in_axes=(0, 0, None)),
                           in_axes=(0, 0, 0))(dist, ids, inst_flat)      # (B, MI)

    n_obj = jnp.sum(valid_i, axis=1).astype(jnp.float32)                 # (B,)
    denom = jnp.maximum(n_obj, 1.0)
    instance_loss_b = jnp.sum(jnp.where(valid_i, inst_losses, 0.0), axis=1) / denom
    var_loss_b = jnp.sum(jnp.where(valid_i, var_per, 0.0), axis=1) / denom

    loss_b = w_inst * instance_loss_b + w_var * var_loss_b + w_seed * seed_loss_b
    return jnp.mean(loss_b) + 0.0 * jnp.sum(prediction)


if __name__ == "__main__":
    key = jax.random.PRNGKey(0)
    B, D, H, W = 2, 6, 16, 16          # N = 1536 -> ragged last tile at tile_n=1024
    C = 3 + N_SIGMA + 1                # 7 channels: 3 emb offsets, 3 sigma, 1 seed

    k1, k2, k3 = jax.random.split(key, 3)
    prediction = jax.random.normal(k1, (B, C, D, H, W), dtype=jnp.float32)
    instances = jax.random.randint(k2, (B, 1, D, H, W), 0, MAX_INST + 1,
                                   dtype=jnp.int32)
    labels = (instances > 0).astype(jnp.int32)
    center_images = (jax.random.uniform(k3, (B, 1, D, H, W)) < 0.01).astype(jnp.int32)

    loss_fn = jax.jit(functools.partial(spatial_emb_loss_forward, tile_n=1024))
    loss = jax.block_until_ready(loss_fn(prediction, instances, labels, center_images))
    assert np.isfinite(np.asarray(loss)), loss
    print("KERNEL_OK")
</pallas_src>

<mosaic_0001>
module attributes {stable_mosaic.version = 11 : i64} {
  func.func @_stats_kernel(%arg0: i32, %arg1: i32, %arg2: memref<1x8x1xi32, #tpu.memory_space<vmem>>, %arg3: memref<1x7x1024xf32, #tpu.memory_space<vmem>>, %arg4: memref<1x1x1024xi32, #tpu.memory_space<vmem>>, %arg5: memref<1x1x1024xi32, #tpu.memory_space<vmem>>, %arg6: memref<1x1x8x14xf32, #tpu.memory_space<vmem>>) attributes {dimension_semantics = [#tpu.dimension_semantics<parallel>, #tpu.dimension_semantics<parallel>], iteration_bounds = array<i64: 2, 2>, scalar_prefetch = 0 : i64, scratch_operands = 0 : i64, tpu.core_type = #tpu.core_type<tc>, window_params = [{transform_indices = @transform_0, window_bounds = array<i64: 1, 8, 1>}, {transform_indices = @transform_1, window_bounds = array<i64: 1, 7, 1024>}, {transform_indices = @transform_2, window_bounds = array<i64: 1, 1, 1024>}, {transform_indices = @transform_3, window_bounds = array<i64: 1, 1, 1024>}, {transform_indices = @transform_4, window_bounds = array<i64: 1, 1, 8, 14>}]} {
    %c1024_i32 = arith.constant 1024 : i32
    %0 = arith.muli %arg1, %c1024_i32 : i32
    %1 = tpu.iota {dimensions = array<i32: 1>} : vector<1x1024xi32>
    %2 = vector.broadcast %0 : i32 to vector<1x1024xi32>
    %3 = arith.addi %2, %1 : vector<1x1024xi32>
    %c1536_i32 = arith.constant 1536 : i32
    %4 = vector.broadcast %c1536_i32 : i32 to vector<1x1024xi32>
    %5 = arith.cmpi slt, %3, %4 : vector<1x1024xi32>
    %6 = tpu.iota {dimensions = array<i32: 1>} : vector<3x1024xi32>
    %7 = vector.broadcast %0 : i32 to vector<3x1024xi32>
    %8 = arith.addi %7, %6 : vector<3x1024xi32>
    %c8_i32 = arith.constant 8 : i32
    %9 = vector.broadcast %c8_i32 : i32 to vector<3x1024xi32>
    %10 = arith.shrsi %8, %9 : vector<3x1024xi32>
    %c255_i32 = arith.constant 255 : i32
    %11 = vector.broadcast %c255_i32 : i32 to vector<3x1024xi32>
    %12 = arith.andi %8, %11 : vector<3x1024xi32>
    %c4_i32 = arith.constant 4 : i32
    %13 = vector.broadcast %c4_i32 : i32 to vector<3x1024xi32>
    %14 = arith.shrsi %12, %13 : vector<3x1024xi32>
    %c15_i32 = arith.constant 15 : i32
    %15 = vector.broadcast %c15_i32 : i32 to vector<3x1024xi32>
    %16 = arith.andi %12, %15 : vector<3x1024xi32>
    %17 = tpu.iota {dimensions = array<i32: 0>} : vector<3x1024xi32>
    %c0_i32 = arith.constant 0 : i32
    %18 = vector.broadcast %c0_i32 : i32 to vector<3x1024xi32>
    %19 = arith.cmpi eq, %17, %18 : vector<3x1024xi32>
    %c1_i32 = arith.constant 1 : i32
    %20 = vector.broadcast %c1_i32 : i32 to vector<3x1024xi32>
    %21 = arith.cmpi eq, %17, %20 : vector<3x1024xi32>
    %22 = arith.select %21, %14, %10 : vector<3x1024xi1>, vector<3x1024xi32>
    %23 = arith.select %19, %16, %22 : vector<3x1024xi1>, vector<3x1024xi32>
    %24 = arith.sitofp %23 : vector<3x1024xi32> to vector<3x1024xf32>
    %c0_i32_0 = arith.constant 0 : i32
    %25 = vector.broadcast %c0_i32_0 : i32 to vector<3x1024xi32>
    %26 = arith.cmpi eq, %17, %25 : vector<3x1024xi32>
    %c1_i32_1 = arith.constant 1 : i32
    %27 = vector.broadcast %c1_i32_1 : i32 to vector<3x1024xi32>
    %28 = arith.cmpi eq, %17, %27 : vector<3x1024xi32>
    %cst = arith.constant 9.77517105E-4 : f32
    %cst_2 = arith.constant 0.0322580636 : f32
    %29 = vector.broadcast %cst : f32 to vector<3x1024xf32>
    %30 = vector.broadcast %cst_2 : f32 to vector<3x1024xf32>
    %31 = arith.select %28, %29, %30 : vector<3x1024xi1>, vector<3x1024xf32>
    %cst_3 = arith.constant 9.77517105E-4 : f32
    %32 = vector.broadcast %cst_3 : f32 to vector<3x1024xf32>
    %33 = arith.select %26, %32, %31 : vector<3x1024xi1>, vector<3x1024xf32>
    %34 = arith.mulf %24, %33 : vector<3x1024xf32>
    %c0 = arith.constant 0 : index
    %c0_4 = arith.constant 0 : index
    %c0_5 = arith.constant 0 : index
    %35 = vector.load %arg2[%c0, %c0_4, %c0_5] : memref<1x8x1xi32, #tpu.memory_space<vmem>>, vector<1x8x1xi32>
    %36 = vector.shape_cast %35 : vector<1x8x1xi32> to vector<8x1xi32>
    %c0_6 = arith.constant 0 : index
    %c0_7 = arith.constant 0 : index
    %c0_8 = arith.constant 0 : index
    %37 = vector.load %arg4[%c0_6, %c0_7, %c0_8] : memref<1x1x1024xi32, #tpu.memory_space<vmem>>, vector<1x1x1024xi32>
    %38 = vector.shape_cast %37 : vector<1x1x1024xi32> to vector<1x1024xi32>
    %c0_9 = arith.constant 0 : index
    %c0_10 = arith.constant 0 : index
    %c0_11 = arith.constant 0 : index
    %39 = vector.load %arg5[%c0_9, %c0_10, %c0_11] : memref<1x1x1024xi32, #tpu.memory_space<vmem>>, vector<1x1x1024xi32>
    %40 = vector.shape_cast %39 : vector<1x1x1024xi32> to vector<1x1024xi32>
    %c0_12 = arith.constant 0 : index
    %c3 = arith.constant 3 : index
    %c0_13 = arith.constant 0 : index
    %41 = vector.load %arg3[%c0_12, %c3, %c0_13] : memref<1x7x1024xf32, #tpu.memory_space<vmem>>, vector<1x3x1024xf32>
    %42 = vector.shape_cast %41 : vector<1x3x1024xf32> to vector<3x1024xf32>
    %cst_14 = arith.constant 0.000000e+00 : f32
    %43 = vector.shape_cast %5 : vector<1x1024xi1> to vector<1x1024xi1>
    %44 = vector.broadcast %43 : vector<1x1024xi1> to vector<3x1024xi1>
    %45 = vector.broadcast %cst_14 : f32 to vector<3x1024xf32>
    %46 = arith.select %44, %42, %45 : vector<3x1024xi1>, vector<3x1024xf32>
    %47 = vector.broadcast %38 : vector<1x1024xi32> to vector<8x1024xi32>
    %48 = vector.broadcast %36 : vector<8x1xi32> to vector<8x1024xi32>
    %49 = arith.cmpi eq, %47, %48 : vector<8x1024xi32>
    %c0_i32_15 = arith.constant 0 : i32
    %50 = vector.broadcast %c0_i32_15 : i32 to vector<8x1xi32>
    %51 = arith.cmpi ne, %36, %50 : vector<8x1xi32>
    %52 = vector.broadcast %51 : vector<8x1xi1> to vector<8x1024xi1>
    %53 = arith.andi %49, %52 : vector<8x1024xi1>
    %54 = vector.broadcast %5 : vector<1x1024xi1> to vector<8x1024xi1>
    %55 = arith.andi %53, %54 : vector<8x1024xi1>
    %cst_16 = arith.constant 1.000000e+00 : f32
    %cst_17 = arith.constant 0.000000e+00 : f32
    %56 = vector.broadcast %cst_16 : f32 to vector<8x1024xf32>
    %57 = vector.broadcast %cst_17 : f32 to vector<8x1024xf32>
    %58 = arith.select %55, %56, %57 : vector<8x1024xi1>, vector<8x1024xf32>
    %c0_i32_18 = arith.constant 0 : i32
    %59 = vector.broadcast %c0_i32_18 : i32 to vector<1x1024xi32>
    %60 = arith.cmpi ne, %40, %59 : vector<1x1024xi32>
    %cst_19 = arith.constant 1.000000e+00 : f32
    %cst_20 = arith.constant 0.000000e+00 : f32
    %61 = vector.broadcast %cst_19 : f32 to vector<1x1024xf32>
    %62 = vector.broadcast %cst_20 : f32 to vector<1x1024xf32>
    %63 = arith.select %60, %61, %62 : vector<1x1024xi1>, vector<1x1024xf32>
    %64 = vector.broadcast %63 : vector<1x1024xf32> to vector<8x1024xf32>
    %65 = arith.mulf %58, %64 : vector<8x1024xf32>
    %cst_21 = arith.constant dense<0.000000e+00> : vector<8x3xf32>
    %66 = tpu.matmul %58, %34, %cst_21 {dimension_numbers = #tpu.dot_dimension_numbers<[1], [1], [0], [0], [0, 0, 1, 0], [], []>} : vector<8x1024xf32>, vector<3x1024xf32>, vector<8x3xf32> -> vector<8x3xf32>
    %cst_22 = arith.constant dense<0.000000e+00> : vector<8x3xf32>
    %67 = tpu.matmul %65, %34, %cst_22 {dimension_numbers = #tpu.dot_dimension_numbers<[1], [1], [0], [0], [0, 0, 1, 0], [], []>} : vector<8x1024xf32>, vector<3x1024xf32>, vector<8x3xf32> -> vector<8x3xf32>
    %cst_23 = arith.constant dense<0.000000e+00> : vector<8x3xf32>
    %68 = tpu.matmul %58, %46, %cst_23 {dimension_numbers = #tpu.dot_dimension_numbers<[1], [1], [0], [0], [0, 0, 1, 0], [], []>} : vector<8x1024xf32>, vector<3x1024xf32>, vector<8x3xf32> -> vector<8x3xf32>
    %69 = arith.mulf %46, %46 : vector<3x1024xf32>
    %cst_24 = arith.constant dense<0.000000e+00> : vector<8x3xf32>
    %70 = tpu.matmul %58, %69, %cst_24 {dimension_numbers = #tpu.dot_dimension_numbers<[1], [1], [0], [0], [0, 0, 1, 0], [], []>} : vector<8x1024xf32>, vector<3x1024xf32>, vector<8x3xf32> -> vector<8x3xf32>
    %cst_25 = arith.constant dense<0.000000e+00> : vector<8xf32>
    %71 = vector.multi_reduction <add>, %58, %cst_25 [1] : vector<8x1024xf32> to vector<8xf32>
    %72 = vector.shape_cast %71 : vector<8xf32> to vector<8x1xf32>
    %cst_26 = arith.constant dense<0.000000e+00> : vector<8xf32>
    %73 = vector.multi_reduction <add>, %65, %cst_26 [1] : vector<8x1024xf32> to vector<8xf32>
    %74 = vector.shape_cast %73 : vector<8xf32> to vector<8x1xf32>
    %75 = tpu.concatenate %72, %74, %66, %67, %68, %70 in 1 : vector<8x1xf32>, vector<8x1xf32>, vector<8x3xf32>, vector<8x3xf32>, vector<8x3xf32>, vector<8x3xf32> -> vector<8x14xf32>
    %c0_27 = arith.constant 0 : index
    %c0_28 = arith.constant 0 : index
    %c0_29 = arith.constant 0 : index
    %c0_30 = arith.constant 0 : index
    %76 = vector.load %arg6[%c0_27, %c0_28, %c0_29, %c0_30] : memref<1x1x8x14xf32, #tpu.memory_space<vmem>>, vector<1x1x8x14xf32>
    %77 = vector.shape_cast %76 : vector<1x1x8x14xf32> to vector<8x14xf32>
    %78 = vector.shape_cast %75 : vector<8x14xf32> to vector<1x1x8x14xf32>
    tpu.vector_store %arg6[%c0_27, %c0_28, %c0_29, %c0_30], %78 {strides = array<i32>} : memref<1x1x8x14xf32, #tpu.memory_space<vmem>>, vector<1x1x8x14xf32>,
    return
  }
  func.func @transform_0(%arg0: i32, %arg1: i32) -> (i32, i32, i32) {
    %c0_i32 = arith.constant 0 : i32
    %c0_i32_0 = arith.constant 0 : i32
    %c0_i32_1 = arith.constant 0 : i32
    return %arg0, %c0_i32, %c0_i32_0 : i32, i32, i32
  }
  func.func @transform_1(%arg0: i32, %arg1: i32) -> (i32, i32, i32) {
    %c0_i32 = arith.constant 0 : i32
    %c0_i32_0 = arith.constant 0 : i32
    return %arg0, %c0_i32, %arg1 : i32, i32, i32
  }
  func.func @transform_2(%arg0: i32, %arg1: i32) -> (i32, i32, i32) {
    %c0_i32 = arith.constant 0 : i32
    %c0_i32_0 = arith.constant 0 : i32
    return %arg0, %c0_i32, %arg1 : i32, i32, i32
  }
  func.func @transform_3(%arg0: i32, %arg1: i32) -> (i32, i32, i32) {
    %c0_i32 = arith.constant 0 : i32
    %c0_i32_0 = arith.constant 0 : i32
    return %arg0, %c0_i32, %arg1 : i32, i32, i32
  }
  func.func @transform_4(%arg0: i32, %arg1: i32) -> (i32, i32, i32, i32) {
    %c0_i32 = arith.constant 0 : i32
    %c0_i32_0 = arith.constant 0 : i32
    %c0_i32_1 = arith.constant 0 : i32
    return %arg0, %arg1, %c0_i32, %c0_i32_0 : i32, i32, i32, i32
  }
}

module attributes {stable_mosaic.version = 11 : i64} {
  func.func @_dist_seed_kernel(%arg0: i32, %arg1: i32, %arg2: memref<1x8x1xi32, #tpu.memory_space<vmem>>, %arg3: memref<1x8x7xf32, #tpu.memory_space<vmem>>, %arg4: memref<1x7x1024xf32, #tpu.memory_space<vmem>>, %arg5: memref<1x1x1024xi32, #tpu.memory_space<vmem>>, %arg6: memref<1x1x1024xi32, #tpu.memory_space<vmem>>, %arg7: memref<1x8x1024xbf16, #tpu.memory_space<vmem>>, %arg8: memref<1x1x1x1xf32, #tpu.memory_space<vmem>>) attributes {dimension_semantics = [#tpu.dimension_semantics<parallel>, #tpu.dimension_semantics<parallel>], iteration_bounds = array<i64: 2, 2>, scalar_prefetch = 0 : i64, scratch_operands = 0 : i64, tpu.core_type = #tpu.core_type<tc>, window_params = [{transform_indices = @transform_0, window_bounds = array<i64: 1, 8, 1>}, {transform_indices = @transform_1, window_bounds = array<i64: 1, 8, 7>}, {transform_indices = @transform_2, window_bounds = array<i64: 1, 7, 1024>}, {transform_indices = @transform_3, window_bounds = array<i64: 1, 1, 1024>}, {transform_indices = @transform_4, window_bounds = array<i64: 1, 1, 1024>}, {transform_indices = @transform_5, window_bounds = array<i64: 1, 8, 1024>}, {transform_indices = @transform_6, window_bounds = array<i64: 1, 1, 1, 1>}]} {
    %c1024_i32 = arith.constant 1024 : i32
    %0 = arith.muli %arg1, %c1024_i32 : i32
    %1 = tpu.iota {dimensions = array<i32: 1>} : vector<1x1024xi32>
    %2 = vector.broadcast %0 : i32 to vector<1x1024xi32>
    %3 = arith.addi %2, %1 : vector<1x1024xi32>
    %c1536_i32 = arith.constant 1536 : i32
    %4 = vector.broadcast %c1536_i32 : i32 to vector<1x1024xi32>
    %5 = arith.cmpi slt, %3, %4 : vector<1x1024xi32>
    %6 = tpu.iota {dimensions = array<i32: 1>} : vector<3x1024xi32>
    %7 = vector.broadcast %0 : i32 to vector<3x1024xi32>
    %8 = arith.addi %7, %6 : vector<3x1024xi32>
    %c8_i32 = arith.constant 8 : i32
    %9 = vector.broadcast %c8_i32 : i32 to vector<3x1024xi32>
    %10 = arith.shrsi %8, %9 : vector<3x1024xi32>
    %c255_i32 = arith.constant 255 : i32
    %11 = vector.broadcast %c255_i32 : i32 to vector<3x1024xi32>
    %12 = arith.andi %8, %11 : vector<3x1024xi32>
    %c4_i32 = arith.constant 4 : i32
    %13 = vector.broadcast %c4_i32 : i32 to vector<3x1024xi32>
    %14 = arith.shrsi %12, %13 : vector<3x1024xi32>
    %c15_i32 = arith.constant 15 : i32
    %15 = vector.broadcast %c15_i32 : i32 to vector<3x1024xi32>
    %16 = arith.andi %12, %15 : vector<3x1024xi32>
    %17 = tpu.iota {dimensions = array<i32: 0>} : vector<3x1024xi32>
    %c0_i32 = arith.constant 0 : i32
    %18 = vector.broadcast %c0_i32 : i32 to vector<3x1024xi32>
    %19 = arith.cmpi eq, %17, %18 : vector<3x1024xi32>
    %c1_i32 = arith.constant 1 : i32
    %20 = vector.broadcast %c1_i32 : i32 to vector<3x1024xi32>
    %21 = arith.cmpi eq, %17, %20 : vector<3x1024xi32>
    %22 = arith.select %21, %14, %10 : vector<3x1024xi1>, vector<3x1024xi32>
    %23 = arith.select %19, %16, %22 : vector<3x1024xi1>, vector<3x1024xi32>
    %24 = arith.sitofp %23 : vector<3x1024xi32> to vector<3x1024xf32>
    %c0_i32_0 = arith.constant 0 : i32
    %25 = vector.broadcast %c0_i32_0 : i32 to vector<3x1024xi32>
    %26 = arith.cmpi eq, %17, %25 : vector<3x1024xi32>
    %c1_i32_1 = arith.constant 1 : i32
    %27 = vector.broadcast %c1_i32_1 : i32 to vector<3x1024xi32>
    %28 = arith.cmpi eq, %17, %27 : vector<3x1024xi32>
    %cst = arith.constant 9.77517105E-4 : f32
    %cst_2 = arith.constant 0.0322580636 : f32
    %29 = vector.broadcast %cst : f32 to vector<3x1024xf32>
    %30 = vector.broadcast %cst_2 : f32 to vector<3x1024xf32>
    %31 = arith.select %28, %29, %30 : vector<3x1024xi1>, vector<3x1024xf32>
    %cst_3 = arith.constant 9.77517105E-4 : f32
    %32 = vector.broadcast %cst_3 : f32 to vector<3x1024xf32>
    %33 = arith.select %26, %32, %31 : vector<3x1024xi1>, vector<3x1024xf32>
    %34 = arith.mulf %24, %33 : vector<3x1024xf32>
    %c0 = arith.constant 0 : index
    %c0_4 = arith.constant 0 : index
    %c0_5 = arith.constant 0 : index
    %35 = vector.load %arg2[%c0, %c0_4, %c0_5] : memref<1x8x1xi32, #tpu.memory_space<vmem>>, vector<1x8x1xi32>
    %36 = vector.shape_cast %35 : vector<1x8x1xi32> to vector<8x1xi32>
    %c0_6 = arith.constant 0 : index
    %c0_7 = arith.constant 0 : index
    %c0_8 = arith.constant 0 : index
    %37 = vector.load %arg3[%c0_6, %c0_7, %c0_8] : memref<1x8x7xf32, #tpu.memory_space<vmem>>, vector<1x8x7xf32>
    %38 = vector.shape_cast %37 : vector<1x8x7xf32> to vector<8x7xf32>
    %c0_9 = arith.constant 0 : index
    %c0_10 = arith.constant 0 : index
    %c0_11 = arith.constant 0 : index
    %39 = vector.load %arg5[%c0_9, %c0_10, %c0_11] : memref<1x1x1024xi32, #tpu.memory_space<vmem>>, vector<1x1x1024xi32>
    %40 = vector.shape_cast %39 : vector<1x1x1024xi32> to vector<1x1024xi32>
    %c0_12 = arith.constant 0 : index
    %c0_13 = arith.constant 0 : index
    %c0_14 = arith.constant 0 : index
    %41 = vector.load %arg6[%c0_12, %c0_13, %c0_14] : memref<1x1x1024xi32, #tpu.memory_space<vmem>>, vector<1x1x1024xi32>
    %42 = vector.shape_cast %41 : vector<1x1x1024xi32> to vector<1x1024xi32>
    %c0_15 = arith.constant 0 : index
    %c0_16 = arith.constant 0 : index
    %c0_17 = arith.constant 0 : index
    %43 = vector.load %arg4[%c0_15, %c0_16, %c0_17] : memref<1x7x1024xf32, #tpu.memory_space<vmem>>, vector<1x3x1024xf32>
    %44 = vector.shape_cast %43 : vector<1x3x1024xf32> to vector<3x1024xf32>
    %45 = math.tanh %44 : vector<3x1024xf32>
    %46 = arith.addf %45, %34 : vector<3x1024xf32>
    %c0_18 = arith.constant 0 : index
    %c6 = arith.constant 6 : index
    %c0_19 = arith.constant 0 : index
    %47 = vector.load %arg4[%c0_18, %c6, %c0_19] : memref<1x7x1024xf32, #tpu.memory_space<vmem>>, vector<1x1x1024xf32>
    %48 = vector.shape_cast %47 : vector<1x1x1024xf32> to vector<1x1024xf32>
    %49 = arith.negf %48 : vector<1x1024xf32>
    %50 = math.exp %49 : vector<1x1024xf32>
    %cst_20 = arith.constant 1.000000e+00 : f32
    %51 = vector.broadcast %cst_20 : f32 to vector<1x1024xf32>
    %52 = arith.addf %51, %50 : vector<1x1024xf32>
    %53 = arith.divf %51, %52 : vector<1x1024xf32>
    %54 = vector.extract_strided_slice %38 {offsets = [0, 0], sizes = [8, 3], strides = [1, 1]} : vector<8x7xf32> to vector<8x3xf32>
    %55 = vector.extract_strided_slice %38 {offsets = [0, 3], sizes = [8, 3], strides = [1, 1]} : vector<8x7xf32> to vector<8x3xf32>
    %56 = vector.extract_strided_slice %38 {offsets = [0, 6], sizes = [8, 1], strides = [1, 1]} : vector<8x7xf32> to vector<8x1xf32>
    %57 = arith.mulf %46, %46 : vector<3x1024xf32>
    %cst_21 = arith.constant dense<0.000000e+00> : vector<8x1024xf32>
    %58 = tpu.matmul %54, %57, %cst_21 {dimension_numbers = #tpu.dot_dimension_numbers<[1], [0], [0], [1], [0, 0, 1, 1], [], []>} : vector<8x3xf32>, vector<3x1024xf32>, vector<8x1024xf32> -> vector<8x1024xf32>
    %cst_22 = arith.constant dense<0.000000e+00> : vector<8x1024xf32>
    %59 = tpu.matmul %55, %46, %cst_22 {dimension_numbers = #tpu.dot_dimension_numbers<[1], [0], [0], [1], [0, 0, 1, 1], [], []>} : vector<8x3xf32>, vector<3x1024xf32>, vector<8x1024xf32> -> vector<8x1024xf32>
    %60 = arith.addf %58, %59 : vector<8x1024xf32>
    %61 = vector.broadcast %56 : vector<8x1xf32> to vector<8x1024xf32>
    %62 = arith.addf %60, %61 : vector<8x1024xf32>
    %cst_23 = arith.constant 0.000000e+00 : f32
    %63 = vector.broadcast %cst_23 : f32 to vector<8x1024xf32>
    %64 = arith.subf %63, %62 : vector<8x1024xf32>
    %65 = math.exp %64 : vector<8x1024xf32>
    %66 = arith.truncf %65 : vector<8x1024xf32> to vector<8x1024xbf16>
    %c0_24 = arith.constant 0 : index
    %c0_25 = arith.constant 0 : index
    %c0_26 = arith.constant 0 : index
    %67 = vector.load %arg7[%c0_24, %c0_25, %c0_26] : memref<1x8x1024xbf16, #tpu.memory_space<vmem>>, vector<1x8x1024xbf16>
    %68 = vector.shape_cast %67 : vector<1x8x1024xbf16> to vector<8x1024xbf16>
    %69 = vector.shape_cast %66 : vector<8x1024xbf16> to vector<1x8x1024xbf16>
    tpu.vector_store %arg7[%c0_24, %c0_25, %c0_26], %69 {strides = array<i32>} : memref<1x8x1024xbf16, #tpu.memory_space<vmem>>, vector<1x8x1024xbf16>,
    %70 = vector.broadcast %40 : vector<1x1024xi32> to vector<8x1024xi32>
    %71 = vector.broadcast %36 : vector<8x1xi32> to vector<8x1024xi32>
    %72 = arith.cmpi eq, %70, %71 : vector<8x1024xi32>
    %c0_i32_27 = arith.constant 0 : i32
    %73 = vector.broadcast %c0_i32_27 : i32 to vector<8x1xi32>
    %74 = arith.cmpi ne, %36, %73 : vector<8x1xi32>
    %75 = vector.broadcast %74 : vector<8x1xi1> to vector<8x1024xi1>
    %76 = arith.andi %72, %75 : vector<8x1024xi1>
    %77 = vector.broadcast %5 : vector<1x1024xi1> to vector<8x1024xi1>
    %78 = arith.andi %76, %77 : vector<8x1024xi1>
    %c0_i32_28 = arith.constant 0 : i32
    %79 = vector.broadcast %c0_i32_28 : i32 to vector<1x1024xi32>
    %80 = arith.cmpi eq, %42, %79 : vector<1x1024xi32>
    %81 = arith.andi %80, %5 : vector<1x1024xi1>
    %82 = arith.mulf %53, %53 : vector<1x1024xf32>
    %cst_29 = arith.constant 0.000000e+00 : f32
    %83 = vector.broadcast %cst_29 : f32 to vector<1x1024xf32>
    %84 = arith.select %81, %82, %83 : vector<1x1024xi1>, vector<1x1024xf32>
    %85 = vector.broadcast %53 : vector<1x1024xf32> to vector<8x1024xf32>
    %86 = arith.subf %85, %65 : vector<8x1024xf32>
    %87 = arith.mulf %86, %86 : vector<8x1024xf32>
    %cst_30 = arith.constant 0.000000e+00 : f32
    %88 = vector.broadcast %cst_30 : f32 to vector<8x1024xf32>
    %89 = arith.select %78, %87, %88 : vector<8x1024xi1>, vector<8x1024xf32>
    %cst_31 = arith.constant dense<0.000000e+00> : vector<1xf32>
    %90 = vector.multi_reduction <add>, %84, %cst_31 [1] : vector<1x1024xf32> to vector<1xf32>
    %91 = vector.shape_cast %90 : vector<1xf32> to vector<1x1xf32>
    %cst_32 = arith.constant dense<0.000000e+00> : vector<8xf32>
    %92 = vector.multi_reduction <add>, %89, %cst_32 [1] : vector<8x1024xf32> to vector<8xf32>
    %93 = vector.shape_cast %92 : vector<8xf32> to vector<8x1xf32>
    %cst_33 = arith.constant dense<0.000000e+00> : vector<1xf32>
    %94 = vector.multi_reduction <add>, %93, %cst_33 [0] : vector<8x1xf32> to vector<1xf32>
    %95 = vector.shape_cast %94 : vector<1xf32> to vector<1x1xf32>
    %cst_34 = arith.constant 1.000000e+01 : f32
    %96 = vector.broadcast %cst_34 : f32 to vector<1x1xf32>
    %97 = arith.mulf %96, %95 : vector<1x1xf32>
    %98 = arith.addf %91, %97 : vector<1x1xf32>
    %c0_35 = arith.constant 0 : index
    %c0_36 = arith.constant 0 : index
    %c0_37 = arith.constant 0 : index
    %c0_38 = arith.constant 0 : index
    %99 = vector.load %arg8[%c0_35, %c0_36, %c0_37, %c0_38] : memref<1x1x1x1xf32, #tpu.memory_space<vmem>>, vector<1x1x1x1xf32>
    %100 = vector.shape_cast %99 : vector<1x1x1x1xf32> to vector<1x1xf32>
    %101 = vector.shape_cast %98 : vector<1x1xf32> to vector<1x1x1x1xf32>
    tpu.vector_store %arg8[%c0_35, %c0_36, %c0_37, %c0_38], %101 {strides = array<i32>} : memref<1x1x1x1xf32, #tpu.memory_space<vmem>>, vector<1x1x1x1xf32>,
    return
  }
  func.func @transform_0(%arg0: i32, %arg1: i32) -> (i32, i32, i32) {
    %c0_i32 = arith.constant 0 : i32
    %c0_i32_0 = arith.constant 0 : i32
    %c0_i32_1 = arith.constant 0 : i32
    return %arg0, %c0_i32, %c0_i32_0 : i32, i32, i32
  }
  func.func @transform_1(%arg0: i32, %arg1: i32) -> (i32, i32, i32) {
    %c0_i32 = arith.constant 0 : i32
    %c0_i32_0 = arith.constant 0 : i32
    %c0_i32_1 = arith.constant 0 : i32
    return %arg0, %c0_i32, %c0_i32_0 : i32, i32, i32
  }
  func.func @transform_2(%arg0: i32, %arg1: i32) -> (i32, i32, i32) {
    %c0_i32 = arith.constant 0 : i32
    %c0_i32_0 = arith.constant 0 : i32
    return %arg0, %c0_i32, %arg1 : i32, i32, i32
  }
  func.func @transform_3(%arg0: i32, %arg1: i32) -> (i32, i32, i32) {
    %c0_i32 = arith.constant 0 : i32
    %c0_i32_0 = arith.constant 0 : i32
    return %arg0, %c0_i32, %arg1 : i32, i32, i32
  }
  func.func @transform_4(%arg0: i32, %arg1: i32) -> (i32, i32, i32) {
    %c0_i32 = arith.constant 0 : i32
    %c0_i32_0 = arith.constant 0 : i32
    return %arg0, %c0_i32, %arg1 : i32, i32, i32
  }
  func.func @transform_5(%arg0: i32, %arg1: i32) -> (i32, i32, i32) {
    %c0_i32 = arith.constant 0 : i32
    %c0_i32_0 = arith.constant 0 : i32
    return %arg0, %c0_i32, %arg1 : i32, i32, i32
  }
  func.func @transform_6(%arg0: i32, %arg1: i32) -> (i32, i32, i32, i32) {
    %c0_i32 = arith.constant 0 : i32
    %c0_i32_0 = arith.constant 0 : i32
    %c0_i32_1 = arith.constant 0 : i32
    return %arg0, %arg1, %c0_i32, %c0_i32_0 : i32, i32, i32, i32
  }
}

</mosaic_0001>

<llo_original>
// kernel: squeeze.8
$region0: #{squeeze.8}
  %s0 = inlined_call_operand.vmem [shape: s32[1,1,6,16,16], index: 0, kind: input, shape index: {}]
  %s1 = inlined_call_operand.vmem [shape: s32[1536], index: 1, kind: output, shape index: {}]
  %v2 = vld [vmem:[%s0] ss:$8 sm:$0xf]
  %v3 = vld [vmem:[%s0] ss:$8 sm:$0xf0]
  %vm4 = vcmask 1047556
  %v5 = vsel %vm4, %v3, %v2
  %vm6 = vcmask 130048
  %7 = vst.msk [vmem:[%s1] sm:$0xff] %vm6, %v5
  %s8 = scalar_lea.vmem %s0, 64
  %v9 = vld [vmem:[%s8] ss:$8 sm:$0xf]
  %vm10 = vcmask 130048
  %s11 = scalar_lea.vmem %s1, 8
  %12 = vst.msk [vmem:[%s11] sm:$0xf] %vm10, %v9
  %s13 = scalar_lea.vmem %s0, 7
  %v14 = vld [vmem:[%s13] ss:$8 sm:$0xf]
  %s15 = scalar_lea.vmem %s0, 7
  %v16 = vld [vmem:[%s15] ss:$8 sm:$0xf0]
  %vm17 = vcmask 1047556
  %v18 = vsel %vm17, %v16, %v14
  %19 = vrot.lane.b32.xlu0 %v18, 112
  %v20 = vpop.permute.xlu0 %19
  %vm21 = vcmask 1048448
  %22 = vst.msk [vmem:[%s1] sm:$0xff] %vm21, %v20
  %s23 = scalar_lea.vmem %s0, 71
  %v24 = vld [vmem:[%s23] ss:$8 sm:$0xf]
  %25 = vrot.lane.b32.xlu0 %v24, 112
  %v26 = vpop.permute.xlu0 %25
  %vm27 = vcmask 1048448
  %s28 = scalar_lea.vmem %s1, 8
  %29 = vst.msk [vmem:[%s28] sm:$0xf] %vm27, %v26
  %s30 = scalar_lea.vmem %s0, 6
  %v31 = vld [vmem:[%s30] ss:$8 sm:$0xf]
  %s32 = scalar_lea.vmem %s0, 6
  %v33 = vld [vmem:[%s32] ss:$8 sm:$0xf0]
  %vm34 = vcmask 1047556
  %v35 = vsel %vm34, %v33, %v31
  %36 = vrot.lane.b32.xlu0 %v35, 96
  %v37 = vpop.permute.xlu0 %36
  %vm38 = vcmask 917248
  %39 = vst.msk [vmem:[%s1] sm:$0xff] %vm38, %v37
  %s40 = scalar_lea.vmem %s0, 70
  %v41 = vld [vmem:[%s40] ss:$8 sm:$0xf]
  %42 = vrot.lane.b32.xlu0 %v41, 96
  %v43 = vpop.permute.xlu0 %42
  %vm44 = vcmask 917248
  %s45 = scalar_lea.vmem %s1, 8
  %46 = vst.msk [vmem:[%s45] sm:$0xf] %vm44, %v43
  %s47 = scalar_lea.vmem %s0, 5
  %v48 = vld [vmem:[%s47] ss:$8 sm:$0xf]
  %s49 = scalar_lea.vmem %s0, 5
  %v50 = vld [vmem:[%s49] ss:$8 sm:$0xf0]
  %vm51 = vcmask 1047556
  %v52 = vsel %vm51, %v50, %v48
  %53 = vrot.lane.b32.xlu0 %v52, 80
  %v54 = vpop.permute.xlu0 %53
  %vm55 = vcmask 786048
  %56 = vst.msk [vmem:[%s1] sm:$0xff] %vm55, %v54
  %s57 = scalar_lea.vmem %s0, 69
  %v58 = vld [vmem:[%s57] ss:$8 sm:$0xf]
  %59 = vrot.lane.b32.xlu0 %v58, 80
  %v60 = vpop.permute.xlu0 %59
  %vm61 = vcmask 786048
  %s62 = scalar_lea.vmem %s1, 8
  %63 = vst.msk [vmem:[%s62] sm:$0xf] %vm61, %v60
  %s64 = scalar_lea.vmem %s0, 4
  %v65 = vld [vmem:[%s64] ss:$8 sm:$0xf]
  %s66 = scalar_lea.vmem %s0, 4
  %v67 = vld [vmem:[%s66] ss:$8 sm:$0xf0]
  %vm68 = vcmask 1047556
  %v69 = vsel %vm68, %v67, %v65
  %70 = vrot.lane.b32.xlu0 %v69, 64
  %v71 = vpop.permute.xlu0 %70
  %vm72 = vcmask 654848
  %73 = vst.msk [vmem:[%s1] sm:$0xff] %vm72, %v71
  %s74 = scalar_lea.vmem %s0, 68
  %v75 = vld [vmem:[%s74] ss:$8 sm:$0xf]
  %76 = vrot.lane.b32.xlu0 %v75, 64
  %v77 = vpop.permute.xlu0 %76
  %vm78 = vcmask 654848
  %s79 = scalar_lea.vmem %s1, 8
  %80 = vst.msk [vmem:[%s79] sm:$0xf] %vm78, %v77
  %s81 = scalar_lea.vmem %s0, 3
  %v82 = vld [vmem:[%s81] ss:$8 sm:$0xf]
  %s83 = scalar_lea.vmem %s0, 3
  %v84 = vld [vmem:[%s83] ss:$8 sm:$0xf0]
  %vm85 = vcmask 1047556
  %v86 = vsel %vm85, %v84, %v82
  %87 = vrot.lane.b32.xlu0 %v86, 48
  %v88 = vpop.permute.xlu0 %87
  %vm89 = vcmask 523648
  %90 = vst.msk [vmem:[%s1] sm:$0xff] %vm89, %v88
  %s91 = scalar_lea.vmem %s0, 67
  %v92 = vld [vmem:[%s91] ss:$8 sm:$0xf]
  %93 = vrot.lane.b32.xlu0 %v92, 48
  %v94 = vpop.permute.xlu0 %93
  %vm95 = vcmask 523648
  %s96 = scalar_lea.vmem %s1, 8
  %97 = vst.msk [vmem:[%s96] sm:$0xf] %vm95, %v94
  %s98 = scalar_lea.vmem %s0, 2
  %v99 = vld [vmem:[%s98] ss:$8 sm:$0xf]
  %s100 = scalar_lea.vmem %s0, 2
  %v101 = vld [vmem:[%s100] ss:$8 sm:$0xf0]
  %vm102 = vcmask 1047556
  %v103 = vsel %vm102, %v101, %v99
  %104 = vrot.lane.b32.xlu0 %v103, 32
  %v105 = vpop.permute.xlu0 %104
  %vm106 = vcmask 392448
  %107 = vst.msk [vmem:[%s1] sm:$0xff] %vm106, %v105
  %s108 = scalar_lea.vmem %s0, 66
  %v109 = vld [vmem:[%s108] ss:$8 sm:$0xf]
  %110 = vrot.lane.b32.xlu0 %v109, 32
  %v111 = vpop.permute.xlu0 %110
  %vm112 = vcmask 392448
  %s113 = scalar_lea.vmem %s1, 8
  %114 = vst.msk [vmem:[%s113] sm:$0xf] %vm112, %v111
  %s115 = scalar_lea.vmem %s0, 1
  %v116 = vld [vmem:[%s115] ss:$8 sm:$0xf]
  %s117 = scalar_lea.vmem %s0, 1
  %v118 = vld [vmem:[%s117] ss:$8 sm:$0xf0]
  %vm119 = vcmask 1047556
  %v120 = vsel %vm119, %v118, %v116
  %121 = vrot.lane.b32.xlu0 %v120, 16
  %v122 = vpop.permute.xlu0 %121
  %vm123 = vcmask 261248
  %124 = vst.msk [vmem:[%s1] sm:$0xff] %vm123, %v122
  %s125 = scalar_lea.vmem %s0, 65
  %v126 = vld [vmem:[%s125] ss:$8 sm:$0xf]
  %127 = vrot.lane.b32.xlu0 %v126, 16
  %v128 = vpop.permute.xlu0 %127
  %vm129 = vcmask 261248
  %s130 = scalar_lea.vmem %s1, 8
  %131 = vst.msk [vmem:[%s130] sm:$0xf] %vm129, %v128

// kernel: spatial_emb_loss_forward.2
$region0: #{spatial_emb_loss_forward.2}
  #allocation0 [shape = 'u32[]', space=smem, size = 0x4, offset = 0x4, fixed_abs, tag = 'smem constant byte address 0x4 - core index']
  #allocation1 [shape = 'u32[72,128]{1,0:T(1,128)}', space=vmem, size = 0x9000, scoped, tag = 'internal scratch']
  %s0 = inlined_call_operand.vmem [shape: s32[2,8,1], index: 0, kind: input, shape index: {}]
  %s1 = inlined_call_operand.vmem [shape: f32[2,7,1536], index: 1, kind: input, shape index: {}]
  %s2 = inlined_call_operand.vmem [shape: s32[2,1,1536], index: 2, kind: input, shape index: {}]
  %s3 = inlined_call_operand.vmem [shape: s32[2,1,1536], index: 3, kind: input, shape index: {}]
  %s4 = inlined_call_operand.vmem [shape: f32[2,2,8,14], index: 4, kind: output, shape index: {}]
  %s5 = sld [smem:[#allocation0]]
  $region49: #{spatial_emb_loss_forward.2} parent=0
    _
  %s7 = ssub.s32 1, %s5
  %s8 = scalar_select 0, %s7, %s5
  loop: start=0, step=1, limit=6
  $region2: #{spatial_emb_loss_forward.2} parent=0 // loop_pre_header
    _
  $region3: #{spatial_emb_loss_forward.2} parent=0 // loop_header
    %s10 = sphi 0, %s14
    %p11 = scmp.ge.s32.totalorder %s10, 6
    %s17 = sphi 0, %s29
    %s18 = sphi 0, %s25
    %s19 = sphi 0, %s17
    %s20 = sphi 0, %s18
    %s21 = sphi 0, %s19
    %s22 = sphi 0, %s20
    %s32 = sphi 0, %s34
    %s35 = sphi 0, %s32
    %s36 = sphi 0, %s35
    %s52 = sphi 0, %s36
    %s60 = sphi 0, %s62
    %s63 = sphi 0, %s60
    %s64 = sphi 0, %s63
    %s80 = sphi 0, %s64
    %s88 = sphi 0, %s90
    %s91 = sphi 0, %s88
    %s92 = sphi 0, %s91
    %s108 = sphi 0, %s92
    %s116 = sphi 0, %s118
    %s119 = sphi 0, %s116
    %s120 = sphi 0, %s119
    %s136 = sphi 0, %s120
    %s144 = sphi 0, %s146
    %s147 = sphi 0, %s144
    %s148 = sphi 0, %s147
    %s164 = sphi 0, %s148
  $region4: #{spatial_emb_loss_forward.2} parent=0 // loop_header_branch
    %13 = sbr.rel (%p11) target = $region8
  $region5: #{spatial_emb_loss_forward.2} parent=0 // loop_body
    %s15 = ssub.s32 %s10, 1
    %s16 = ssub.s32 %s10, 2
    %s23 = sadd.s32 1, %s18
    %p24 = scmp.ge.s32.totalorder %s23, 2
    %s25 = scalar_select %p24, 0, %s23
    %s26 = sadd.s32 1, %s17
    %s27 = scalar_select %p24, %s26, %s17
    %p28 = scmp.ge.s32.totalorder %s27, 2
    %s29 = scalar_select %p28, 0, %s27
    %s30 = ssub.s32 %s17, %s29
    %p31 = scmp.eq.s32.totalorder %s30, 0
    %s33 = sadd.s32 %s32, 1
    %s34 = scalar_select %p31, %s32, %s33
    %p37 = pneg %p31
    %p38 = scmp.eq.s32.totalorder %s10, 3
    %p39 = por %p37, %p38
    %p40 = scmp.ne.s32.totalorder %s32, %s35
    %p41 = scmp.eq.s32.totalorder %s10, 0
    %p42 = por %p40, %p41
    %p43 = scmp.ne.s32.totalorder %s32, %s35
    %p44 = scmp.eq.s32.totalorder %s15, 3
    %p45 = por %p43, %p44
    %p46 = scmp.ne.s32.totalorder %s35, %s36
    %p47 = scmp.eq.s32.totalorder %s15, 0
    %p48 = por %p46, %p47
    %p49 = scmp.ne.s32.totalorder %s35, %s36
    %p50 = scmp.eq.s32.totalorder %s16, 3
    %p51 = por %p49, %p50
    %p53 = scmp.ne.s32.totalorder %s36, %s52
    %p54 = scmp.eq.s32.totalorder %s16, 0
    %p55 = por %p53, %p54
    %s56 = ssub.s32 %s17, %s29
    %s57 = ssub.s32 %s18, %s25
    %s58 = sor.u32 %s56, %s57
    %p59 = scmp.eq.s32.totalorder %s58, 0
    %s61 = sadd.s32 %s60, 1
    %s62 = scalar_select %p59, %s60, %s61
    %p65 = pneg %p59
    %p66 = scmp.eq.s32.totalorder %s10, 3
    %p67 = por %p65, %p66
    %p68 = scmp.ne.s32.totalorder %s60, %s63
    %p69 = scmp.eq.s32.totalorder %s10, 0
    %p70 = por %p68, %p69
    %p71 = scmp.ne.s32.totalorder %s60, %s63
    %p72 = scmp.eq.s32.totalorder %s15, 3
    %p73 = por %p71, %p72
    %p74 = scmp.ne.s32.totalorder %s63, %s64
    %p75 = scmp.eq.s32.totalorder %s15, 0
    %p76 = por %p74, %p75
    %p77 = scmp.ne.s32.totalorder %s63, %s64
    %p78 = scmp.eq.s32.totalorder %s16, 3
    %p79 = por %p77, %p78
    %p81 = scmp.ne.s32.totalorder %s64, %s80
    %p82 = scmp.eq.s32.totalorder %s16, 0
    %p83 = por %p81, %p82
    %s84 = ssub.s32 %s17, %s29
    %s85 = ssub.s32 %s18, %s25
    %s86 = sor.u32 %s84, %s85
    %p87 = scmp.eq.s32.totalorder %s86, 0
    %s89 = sadd.s32 %s88, 1
    %s90 = scalar_select %p87, %s88, %s89
    %p93 = pneg %p87
    %p94 = scmp.eq.s32.totalorder %s10, 3
    %p95 = por %p93, %p94
    %p96 = scmp.ne.s32.totalorder %s88, %s91
    %p97 = scmp.eq.s32.totalorder %s10, 0
    %p98 = por %p96, %p97
    %p99 = scmp.ne.s32.totalorder %s88, %s91
    %p100 = scmp.eq.s32.totalorder %s15, 3
    %p101 = por %p99, %p100
    %p102 = scmp.ne.s32.totalorder %s91, %s92
    %p103 = scmp.eq.s32.totalorder %s15, 0
    %p104 = por %p102, %p103
    %p105 = scmp.ne.s32.totalorder %s91, %s92
    %p106 = scmp.eq.s32.totalorder %s16, 3
    %p107 = por %p105, %p106
    %p109 = scmp.ne.s32.totalorder %s92, %s108
    %p110 = scmp.eq.s32.totalorder %s16, 0
    %p111 = por %p109, %p110
    %s112 = ssub.s32 %s17, %s29
    %s113 = ssub.s32 %s18, %s25
    %s114 = sor.u32 %s112, %s113
    %p115 = scmp.eq.s32.totalorder %s114, 0
    %s117 = sadd.s32 %s116, 1
    %s118 = scalar_select %p115, %s116, %s117
    %p121 = pneg %p115
    %p122 = scmp.eq.s32.totalorder %s10, 3
    %p123 = por %p121, %p122
    %p124 = scmp.ne.s32.totalorder %s116, %s119
    %p125 = scmp.eq.s32.totalorder %s10, 0
    %p126 = por %p124, %p125
    %p127 = scmp.ne.s32.totalorder %s116, %s119
    %p128 = scmp.eq.s32.totalorder %s15, 3
    %p129 = por %p127, %p128
    %p130 = scmp.ne.s32.totalorder %s119, %s120
    %p131 = scmp.eq.s32.totalorder %s15, 0
    %p132 = por %p130, %p131
    %p133 = scmp.ne.s32.totalorder %s119, %s120
    %p134 = scmp.eq.s32.totalorder %s16, 3
    %p135 = por %p133, %p134
    %p137 = scmp.ne.s32.totalorder %s120, %s136
    %p138 = scmp.eq.s32.totalorder %s16, 0
    %p139 = por %p137, %p138
    %s140 = ssub.s32 %s17, %s29
    %s141 = ssub.s32 %s18, %s25
    %s142 = sor.u32 %s140, %s141
    %p143 = scmp.eq.s32.totalorder %s142, 0
    %s145 = sadd.s32 %s144, 1
    %s146 = scalar_select %p143, %s144, %s145
    %p149 = pneg %p143
    %p150 = scmp.eq.s32.totalorder %s10, 3
    %p151 = por %p149, %p150
    %p152 = scmp.ne.s32.totalorder %s144, %s147
    %p153 = scmp.eq.s32.totalorder %s10, 0
    %p154 = por %p152, %p153
    %p155 = scmp.ne.s32.totalorder %s144, %s147
    %p156 = scmp.eq.s32.totalorder %s15, 3
    %p157 = por %p155, %p156
    %p158 = scmp.ne.s32.totalorder %s147, %s148
    %p159 = scmp.eq.s32.totalorder %s15, 0
    %p160 = por %p158, %p159
    %p161 = scmp.ne.s32.totalorder %s147, %s148
    %p162 = scmp.eq.s32.totalorder %s16, 3
    %p163 = por %p161, %p162
    %p165 = scmp.ne.s32.totalorder %s148, %s164
    %p166 = scmp.eq.s32.totalorder %s16, 0
    %p167 = por %p165, %p166
    %p168 = scmp.le.s32.totalorder 1, %s10
    %p169 = scmp.lt.s32.totalorder %s10, 5
    %p170 = pnand %p168, %p169
    %p171 = pneg %p170
    // Predicated region
    $region9: #{spatial_emb_loss_forward.2} parent=5 // pred_check
      _
    $region10: #{spatial_emb_loss_forward.2} parent=5 // pred_check_branch
      %173 = sbr.rel (%p170) target = $region12
    $region11: #{spatial_emb_loss_forward.2} parent=5 // pred_region
      %s174 = ssub.s32 %s10, 1
    $region12: #{spatial_emb_loss_forward.2} parent=5 // pred_fallthru
      _
    %p175 = scmp.lt.s32.totalorder %s10, 4
    // Predicated region
    $region13: #{spatial_emb_loss_forward.2} parent=5 // pred_check
      %p176 = pneg %p175
    $region14: #{spatial_emb_loss_forward.2} parent=5 // pred_check_branch
      %178 = sbr.rel (%p176) target = $region16
    $region15: #{spatial_emb_loss_forward.2} parent=5 // pred_region
      // Predicated region
      $region17: #{spatial_emb_loss_forward.2} parent=15 // pred_check
        %p179 = pneg %p42
      $region18: #{spatial_emb_loss_forward.2} parent=15 // pred_check_branch
        %181 = sbr.rel (%p179) target = $region20
      $region19: #{spatial_emb_loss_forward.2} parent=15 // pred_region
        %p182 = scmp.lt.s32.totalorder %s17, 1
        %s183 = scalar_select %p182, %s17, 1
        %s184 = smul.addr %s183, 8
        %s185 = scalar_lea.vmem %s0, %s184
      $region20: #{spatial_emb_loss_forward.2} parent=15 // pred_fallthru
        _
      // Predicated region
      $region21: #{spatial_emb_loss_forward.2} parent=15 // pred_check
        %p186 = pneg %p70
      $region22: #{spatial_emb_loss_forward.2} parent=15 // pred_check_branch
        %188 = sbr.rel (%p186) target = $region24
      $region23: #{spatial_emb_loss_forward.2} parent=15 // pred_region
        %s189 = smul.u32 8, %s18
        %s190 = ssub.s32 12, %s189
        %p191 = scmp.lt.s32.totalorder %s190, 8
        %s192 = scalar_select %p191, %s190, 8
        %s193 = smul.u32 8, %s192
        %p194 = scmp.lt.s32.totalorder %s17, 1
        %s195 = scalar_select %p194, %s17, 1
        %p196 = scmp.lt.s32.totalorder %s189, 11
        %s197 = scalar_select %p196, %s189, 11
        %s198 = smul.addr %s195, 12
        %s199 = sadd.s32 %s197, %s198
        %s200 = smul.addr %s199, 8
        %s201 = scalar_lea.vmem %s1, %s200
        %s202 = smul.u32 8, %s18
        %s203 = ssub.s32 12, %s202
        %p204 = scmp.lt.s32.totalorder %s203, 8
        %s205 = scalar_select %p204, %s203, 8
        %s206 = smul.u32 8, %s205
      $region24: #{spatial_emb_loss_forward.2} parent=15 // pred_fallthru
        _
      // Predicated region
      $region25: #{spatial_emb_loss_forward.2} parent=15 // pred_check
        %p207 = pneg %p98
      $region26: #{spatial_emb_loss_forward.2} parent=15 // pred_check_branch
        %209 = sbr.rel (%p207) target = $region28
      $region27: #{spatial_emb_loss_forward.2} parent=15 // pred_region
        %s210 = smul.u32 8, %s18
        %s211 = ssub.s32 12, %s210
        %p212 = scmp.lt.s32.totalorder %s211, 8
        %s213 = scalar_select %p212, %s211, 8
        %p214 = scmp.lt.s32.totalorder %s17, 1
        %s215 = scalar_select %p214, %s17, 1
        %p216 = scmp.lt.s32.totalorder %s210, 11
        %s217 = scalar_select %p216, %s210, 11
        %s218 = smul.addr %s215, 12
        %s219 = sadd.s32 %s217, %s218
        %s220 = scalar_lea.vmem %s2, %s219
        %s221 = smul.u32 8, %s18
        %s222 = ssub.s32 12, %s221
        %p223 = scmp.lt.s32.totalorder %s222, 8
        %s224 = scalar_select %p223, %s222, 8
      $region28: #{spatial_emb_loss_forward.2} parent=15 // pred_fallthru
        _
      // Predicated region
      $region29: #{spatial_emb_loss_forward.2} parent=15 // pred_check
        %p225 = pneg %p126
      $region30: #{spatial_emb_loss_forward.2} parent=15 // pred_check_branch
        %227 = sbr.rel (%p225) target = $region32
      $region31: #{spatial_emb_loss_forward.2} parent=15 // pred_region
        %s228 = smul.u32 8, %s18
        %s229 = ssub.s32 12, %s228
        %p230 = scmp.lt.s32.totalorder %s229, 8
        %s231 = scalar_select %p230, %s229, 8
        %p232 = scmp.lt.s32.totalorder %s17, 1
        %s233 = scalar_select %p232, %s17, 1
        %p234 = scmp.lt.s32.totalorder %s228, 11
        %s235 = scalar_select %p234, %s228, 11
        %s236 = smul.addr %s233, 12
        %s237 = sadd.s32 %s235, %s236
        %s238 = scalar_lea.vmem %s3, %s237
        %s239 = smul.u32 8, %s18
        %s240 = ssub.s32 12, %s239
        %p241 = scmp.lt.s32.totalorder %s240, 8
        %s242 = scalar_select %p241, %s240, 8
      $region32: #{spatial_emb_loss_forward.2} parent=15 // pred_fallthru
        _
    $region16: #{spatial_emb_loss_forward.2} parent=5 // pred_fallthru
      _
    %p243 = scmp.le.s32.totalorder 1, %s10
    %p244 = scmp.lt.s32.totalorder %s10, 5
    %p245 = pnand %p243, %p244
    %p246 = pneg %p245
    // Predicated region
    $region33: #{spatial_emb_loss_forward.2} parent=5 // pred_check
      _
    $region34: #{spatial_emb_loss_forward.2} parent=5 // pred_check_branch
      %248 = sbr.rel (%p245) target = $region36
    $region35: #{spatial_emb_loss_forward.2} parent=5 // pred_region
      %s249 = ssub.s32 %s10, 1
      %p250 = scmp.lt.s32.totalorder %s19, 1
      %s251 = scalar_select %p250, %s19, 1
      %s252 = smul.addr %s251, 8
      %s253 = scalar_lea.vmem %s0, %s252
      %p254 = pneg %p48
      %p255 = pneg %p45
      %s256 = smul.u32 8, %s20
      %s257 = ssub.s32 12, %s256
      %p258 = scmp.lt.s32.totalorder %s257, 8
      %s259 = scalar_select %p258, %s257, 8
      %s260 = smul.u32 8, %s259
      %p261 = scmp.lt.s32.totalorder %s19, 1
      %s262 = scalar_select %p261, %s19, 1
      %p263 = scmp.lt.s32.totalorder %s256, 11
      %s264 = scalar_select %p263, %s256, 11
      %s265 = smul.addr %s262, 12
      %s266 = sadd.s32 %s264, %s265
      %s267 = smul.addr %s266, 8
      %s268 = scalar_lea.vmem %s1, %s267
      %p269 = pneg %p76
      %p270 = pneg %p73
      %s271 = smul.u32 8, %s20
      %s272 = ssub.s32 12, %s271
      %p273 = scmp.lt.s32.totalorder %s272, 8
      %s274 = scalar_select %p273, %s272, 8
      %p275 = scmp.lt.s32.totalorder %s19, 1
      %s276 = scalar_select %p275, %s19, 1
      %p277 = scmp.lt.s32.totalorder %s271, 11
      %s278 = scalar_select %p277, %s271, 11
      %s279 = smul.addr %s276, 12
      %s280 = sadd.s32 %s278, %s279
      %s281 = scalar_lea.vmem %s2, %s280
      %p282 = pneg %p104
      %p283 = pneg %p101
      %s284 = smul.u32 8, %s20
      %s285 = ssub.s32 12, %s284
      %p286 = scmp.lt.s32.totalorder %s285, 8
      %s287 = scalar_select %p286, %s285, 8
      %p288 = scmp.lt.s32.totalorder %s19, 1
      %s289 = scalar_select %p288, %s19, 1
      %p290 = scmp.lt.s32.totalorder %s284, 11
      %s291 = scalar_select %p290, %s284, 11
      %s292 = smul.addr %s289, 12
      %s293 = sadd.s32 %s291, %s292
      %s294 = scalar_lea.vmem %s3, %s293
      %p295 = pneg %p132
      %p296 = pneg %p129
      %p297 = pneg %p160
      %p298 = pneg %p157
      %p299 = scmp.lt.s32.totalorder %s19, 1
      %s300 = scalar_select %p299, %s19, 1
      %p301 = scmp.lt.s32.totalorder %s20, 1
      %s302 = scalar_select %p301, %s20, 1
      %s303 = smul.addr %s300, 2
      %s304 = sadd.s32 %s302, %s303
      %s305 = smul.addr %s304, 8
      %s306 = scalar_lea.vmem %s4, %s305
      %p307 = scmp.lt.s32.totalorder %s19, 1
      %s308 = scalar_select %p307, %s19, 1
      %s309 = smul.addr %s308, 8
      %s310 = scalar_lea.vmem %s0, %s309
      %s311 = smul.u32 8, %s20
      %s312 = ssub.s32 12, %s311
      %p313 = scmp.lt.s32.totalorder %s312, 8
      %s314 = scalar_select %p313, %s312, 8
      %s315 = smul.u32 8, %s314
      %p316 = scmp.lt.s32.totalorder %s19, 1
      %s317 = scalar_select %p316, %s19, 1
      %p318 = scmp.lt.s32.totalorder %s311, 11
      %s319 = scalar_select %p318, %s311, 11
      %s320 = smul.addr %s317, 12
      %s321 = sadd.s32 %s319, %s320
      %s322 = smul.addr %s321, 8
      %s323 = scalar_lea.vmem %s1, %s322
      %s324 = smul.u32 8, %s20
      %s325 = ssub.s32 12, %s324
      %p326 = scmp.lt.s32.totalorder %s325, 8
      %s327 = scalar_select %p326, %s325, 8
      %s328 = smul.u32 8, %s327
      %s329 = smul.u32 8, %s20
      %s330 = ssub.s32 12, %s329
      %p331 = scmp.lt.s32.totalorder %s330, 8
      %s332 = scalar_select %p331, %s330, 8
      %p333 = scmp.lt.s32.totalorder %s19, 1
      %s334 = scalar_select %p333, %s19, 1
      %p335 = scmp.lt.s32.totalorder %s329, 11
      %s336 = scalar_select %p335, %s329, 11
      %s337 = smul.addr %s334, 12
      %s338 = sadd.s32 %s336, %s337
      %s339 = scalar_lea.vmem %s2, %s338
      %s340 = smul.u32 8, %s20
      %s341 = ssub.s32 12, %s340
      %p342 = scmp.lt.s32.totalorder %s341, 8
      %s343 = scalar_select %p342, %s341, 8
      %s344 = smul.u32 8, %s20
      %s345 = ssub.s32 12, %s344
      %p346 = scmp.lt.s32.totalorder %s345, 8
      %s347 = scalar_select %p346, %s345, 8
      %p348 = scmp.lt.s32.totalorder %s19, 1
      %s349 = scalar_select %p348, %s19, 1
      %p350 = scmp.lt.s32.totalorder %s344, 11
      %s351 = scalar_select %p350, %s344, 11
      %s352 = smul.addr %s349, 12
      %s353 = sadd.s32 %s351, %s352
      %s354 = scalar_lea.vmem %s3, %s353
      %s355 = smul.u32 8, %s20
      %s356 = ssub.s32 12, %s355
      %p357 = scmp.lt.s32.totalorder %s356, 8
      %s358 = scalar_select %p357, %s356, 8
      %p359 = scmp.lt.s32.totalorder %s19, 1
      %s360 = scalar_select %p359, %s19, 1
      %p361 = scmp.lt.s32.totalorder %s20, 1
      %s362 = scalar_select %p361, %s20, 1
      %s363 = smul.addr %s360, 2
      %s364 = sadd.s32 %s362, %s363
      %s365 = smul.addr %s364, 8
      %s366 = scalar_lea.vmem %s4, %s365
      %s367 = smul.u32 %s20, 1024
      %v368 = vlaneseq
      %v369 = vand.u32 %v368, 127
      %v370 = vadd.s32 %v369, 128
      %v371 = vadd.s32 %v369, 256
      %v372 = vadd.s32 %v369, 384
      %v373 = vadd.s32 %v369, 512
      %v374 = vadd.s32 %v369, 640
      %v375 = vadd.s32 %v369, 768
      %v376 = vadd.s32 %v369, 896
      %v377 = vstv %s367
      %v378 = vadd.s32 %v377, %v369
      %v379 = vadd.s32 %v377, %v370
      %v380 = vadd.s32 %v377, %v371
      %v381 = vadd.s32 %v377, %v372
      %v382 = vadd.s32 %v377, %v373
      %v383 = vadd.s32 %v377, %v374
      %v384 = vadd.s32 %v377, %v375
      %v385 = vadd.s32 %v377, %v376
      %vm386 = vcmp.lt.s32.totalorder %v378, 1536
      %vm387 = vcmp.lt.s32.totalorder %v379, 1536
      %vm388 = vcmp.lt.s32.totalorder %v380, 1536
      %vm389 = vcmp.lt.s32.totalorder %v381, 1536
      %vm390 = vcmp.lt.s32.totalorder %v382, 1536
      %vm391 = vcmp.lt.s32.totalorder %v383, 1536
      %vm392 = vcmp.lt.s32.totalorder %v384, 1536
      %vm393 = vcmp.lt.s32.totalorder %v385, 1536
      %v394 = vshra.s32 %v378, 8
      %v395 = vshra.s32 %v379, 8
      %v396 = vshra.s32 %v380, 8
      %v397 = vshra.s32 %v381, 8
      %v398 = vshra.s32 %v382, 8
      %v399 = vshra.s32 %v383, 8
      %v400 = vshra.s32 %v384, 8
      %v401 = vshra.s32 %v385, 8
      %v402 = vand.u32 %v378, 255
      %v403 = vand.u32 %v379, 255
      %v404 = vand.u32 %v380, 255
      %v405 = vand.u32 %v381, 255
      %v406 = vand.u32 %v382, 255
      %v407 = vand.u32 %v383, 255
      %v408 = vand.u32 %v384, 255
      %v409 = vand.u32 %v385, 255
      %v410 = vshra.s32 %v402, 4
      %v411 = vshra.s32 %v403, 4
      %v412 = vshra.s32 %v404, 4
      %v413 = vshra.s32 %v405, 4
      %v414 = vshra.s32 %v406, 4
      %v415 = vshra.s32 %v407, 4
      %v416 = vshra.s32 %v408, 4
      %v417 = vshra.s32 %v409, 4
      %v418 = vand.u32 %v402, 15
      %v419 = vand.u32 %v403, 15
      %v420 = vand.u32 %v404, 15
      %v421 = vand.u32 %v405, 15
      %v422 = vand.u32 %v406, 15
      %v423 = vand.u32 %v407, 15
      %v424 = vand.u32 %v408, 15
      %v425 = vand.u32 %v409, 15
      %v426 = vlaneseq
      %v427 = vshrl.u32 %v426, 7
      %vm428 = vcmp.eq.s32.totalorder %v427, 0
      %vm429 = vcmp.eq.s32.totalorder %v427, 1
      %v430 = vsel %vm429, %v410, %v394
      %v431 = vsel %vm429, %v411, %v395
      %v432 = vsel %vm429, %v412, %v396
      %v433 = vsel %vm429, %v413, %v397
      %v434 = vsel %vm429, %v414, %v398
      %v435 = vsel %vm429, %v415, %v399
      %v436 = vsel %vm429, %v416, %v400
      %v437 = vsel %vm429, %v417, %v401
      %v438 = vsel %vm428, %v418, %v430
      %v439 = vsel %vm428, %v419, %v431
      %v440 = vsel %vm428, %v420, %v432
      %v441 = vsel %vm428, %v421, %v433
      %v442 = vsel %vm428, %v422, %v434
      %v443 = vsel %vm428, %v423, %v435
      %v444 = vsel %vm428, %v424, %v436
      %v445 = vsel %vm428, %v425, %v437
      %v446 = vcvt.s32.f32 %v438
      %v447 = vcvt.s32.f32 %v439
      %v448 = vcvt.s32.f32 %v440
      %v449 = vcvt.s32.f32 %v441
      %v450 = vcvt.s32.f32 %v442
      %v451 = vcvt.s32.f32 %v443
      %v452 = vcvt.s32.f32 %v444
      %v453 = vcvt.s32.f32 %v445
      %v454 = vsel %vm429, 0.0009775171, 0.032258064
      %v455 = vsel %vm428, 0.0009775171, %v454
      %v456 = vmul.f32 %v446, %v455
      %v457 = vmul.f32 %v447, %v455
      %v458 = vmul.f32 %v448, %v455
      %v459 = vmul.f32 %v449, %v455
      %v460 = vmul.f32 %v450, %v455
      %v461 = vmul.f32 %v451, %v455
      %v462 = vmul.f32 %v452, %v455
      %v463 = vmul.f32 %v453, %v455
      %v464 = vld [vmem:[%s310] sm:$0xff]
      %v465 = vld [vmem:[%s339] sm:$0xff]
      %v466 = vld [vmem:[%s354] sm:$0xff]
      %v467 = vld [vmem:[%s323] sm:$0x38]
      %v468 = vld [vmem:[%s323 + $0x8] sm:$0x38]
      %v469 = vld [vmem:[%s323 + $0x10] sm:$0x38]
      %v470 = vld [vmem:[%s323 + $0x18] sm:$0x38]
      %v471 = vld [vmem:[%s323 + $0x20] sm:$0x38]
      %v472 = vld [vmem:[%s323 + $0x28] sm:$0x38]
      %v473 = vld [vmem:[%s323 + $0x30] sm:$0x38]
      %v474 = vld [vmem:[%s323 + $0x38] sm:$0x38]
      %v475 = vsel %vm386, 1, 0
      %v476 = vsel %vm387, 1, 0
      %v477 = vsel %vm388, 1, 0
      %v478 = vsel %vm389, 1, 0
      %v479 = vsel %vm390, 1, 0
      %v480 = vsel %vm391, 1, 0
      %v481 = vsel %vm392, 1, 0
      %v482 = vsel %vm393, 1, 0
      %vm483 = vcmp.eq.s32.totalorder %v475, 1
      %vm484 = vcmp.eq.s32.totalorder %v476, 1
      %vm485 = vcmp.eq.s32.totalorder %v477, 1
      %vm486 = vcmp.eq.s32.totalorder %v478, 1
      %vm487 = vcmp.eq.s32.totalorder %v479, 1
      %vm488 = vcmp.eq.s32.totalorder %v480, 1
      %vm489 = vcmp.eq.s32.totalorder %v481, 1
      %vm490 = vcmp.eq.s32.totalorder %v482, 1
      %v491 = vsel %vm483, %v467, 0.0
      %v492 = vsel %vm484, %v468, 0.0
      %v493 = vsel %vm485, %v469, 0.0
      %v494 = vsel %vm486, %v470, 0.0
      %v495 = vsel %vm487, %v471, 0.0
      %v496 = vsel %vm488, %v472, 0.0
      %v497 = vsel %vm489, %v473, 0.0
      %v498 = vsel %vm490, %v474, 0.0
      %v499 = vperm.slane %v465, 0
      %v500 = vperm.slane %v465, 1
      %v501 = vperm.slane %v465, 2
      %v502 = vperm.slane %v465, 3
      %v503 = vperm.slane %v465, 4
      %v504 = vperm.slane %v465, 5
      %v505 = vperm.slane %v465, 6
      %v506 = vperm.slane %v465, 7
      %507 = vset.pattern.permute.xlu0 0
      %508 = vperm.xlu0 %507, %v464
      %v509 = vpop.permute.xlu0 %508
      %vm510 = vcmp.eq.s32.totalorder %v499, %v509
      %vm511 = vcmp.eq.s32.totalorder %v500, %v509
      %vm512 = vcmp.eq.s32.totalorder %v501, %v509
      %vm513 = vcmp.eq.s32.totalorder %v502, %v509
      %vm514 = vcmp.eq.s32.totalorder %v503, %v509
      %vm515 = vcmp.eq.s32.totalorder %v504, %v509
      %vm516 = vcmp.eq.s32.totalorder %v505, %v509
      %vm517 = vcmp.eq.s32.totalorder %v506, %v509
      %vm518 = vcmp.ne.s32.totalorder %v464, 0
      %v519 = vsel %vm518, 1, 0
      %520 = vset.pattern.permute.xlu0 0
      %521 = vperm.xlu0 %520, %v519
      %v522 = vpop.permute.xlu0 %521
      %vm523 = vcmp.eq.s32.totalorder %v522, 1
      %vm524 = vmand %vm510, %vm523
      %vm525 = vmand %vm511, %vm523
      %vm526 = vmand %vm512, %vm523
      %vm527 = vmand %vm513, %vm523
      %vm528 = vmand %vm514, %vm523
      %vm529 = vmand %vm515, %vm523
      %vm530 = vmand %vm516, %vm523
      %vm531 = vmand %vm517, %vm523
      %vm532 = vmand %vm524, %vm483
      %vm533 = vmand %vm525, %vm484
      %vm534 = vmand %vm526, %vm485
      %vm535 = vmand %vm527, %vm486
      %vm536 = vmand %vm528, %vm487
      %vm537 = vmand %vm529, %vm488
      %vm538 = vmand %vm530, %vm489
      %vm539 = vmand %vm531, %vm490
      %v540 = vsel %vm532, 1.0, 0.0
      %v541 = vsel %vm533, 1.0, 0.0
      %v542 = vsel %vm534, 1.0, 0.0
      %v543 = vsel %vm535, 1.0, 0.0
      %v544 = vsel %vm536, 1.0, 0.0
      %v545 = vsel %vm537, 1.0, 0.0
      %v546 = vsel %vm538, 1.0, 0.0
      %v547 = vsel %vm539, 1.0, 0.0
      %vm548 = vcmp.ne.s32.totalorder %v466, 0
      %v549 = vsel %vm548, 1.0, 0.0
      %v551 = vperm.slane %v549, 0
      %v552 = vperm.slane %v549, 1
      %v553 = vperm.slane %v549, 2
      %v554 = vperm.slane %v549, 3
      %v555 = vperm.slane %v549, 4
      %v556 = vperm.slane %v549, 5
      %v557 = vperm.slane %v549, 6
      %v558 = vperm.slane %v549, 7
      %v567 = vmul.f32 %v540, %v551
      %v568 = vmul.f32 %v541, %v552
      %v569 = vmul.f32 %v542, %v553
      %v570 = vmul.f32 %v543, %v554
      %v571 = vmul.f32 %v544, %v555
      %v572 = vmul.f32 %v545, %v556
      %v573 = vmul.f32 %v546, %v557
      %v574 = vmul.f32 %v547, %v558
      %575 = vmatpush.xpose.msra.mxu0 0.0
      %576 = vmatpush.xpose.msra.mxu0 0.0
      %577 = vmatpush.xpose.msra.mxu0 0.0
      %578 = vmatpush.xpose.msra.mxu0 0.0
      %579 = vmatpush.xpose.msra.mxu0 0.0
      %580 = vmatpush.xpose.msra.mxu0 0.0
      %581 = vmatpush.xpose.msra.mxu0 0.0
      %582 = vmatpush.xpose.msra.mxu0 0.0
      %583 = vmatpush.xpose.msra.mxu0 0.0
      %584 = vmatpush.xpose.msra.mxu0 0.0
      %585 = vmatpush.xpose.msra.mxu0 0.0
      %586 = vmatpush.xpose.msra.mxu0 0.0
      %587 = vmatpush.xpose.msra.mxu0 0.0
      %588 = vmatpush.xpose.msra.mxu0 0.0
      %589 = vmatpush.xpose.msra.mxu0 0.0
      %590 = vmatpush.xpose.msra.mxu0 %v456
      %591 = vmatmul.f32.gmra.mxu0 %v540
      %v592 = vpop.f32.mrf.mxu0
      %v593 = vadd.f32 0.0, %v592
      %594 = vdwg.mxu0
      %595 = vmatpush.xpose.msra.mxu0 0.0
      %596 = vmatpush.xpose.msra.mxu0 0.0
      %597 = vmatpush.xpose.msra.mxu0 0.0
      %598 = vmatpush.xpose.msra.mxu0 0.0
      %599 = vmatpush.xpose.msra.mxu0 0.0
      %600 = vmatpush.xpose.msra.mxu0 0.0
      %601 = vmatpush.xpose.msra.mxu0 0.0
      %602 = vmatpush.xpose.msra.mxu0 0.0
      %603 = vmatpush.xpose.msra.mxu0 0.0
      %604 = vmatpush.xpose.msra.mxu0 0.0
      %605 = vmatpush.xpose.msra.mxu0 0.0
      %606 = vmatpush.xpose.msra.mxu0 0.0
      %607 = vmatpush.xpose.msra.mxu0 0.0
      %608 = vmatpush.xpose.msra.mxu0 0.0
      %609 = vmatpush.xpose.msra.mxu0 0.0
      %610 = vmatpush.xpose.msra.mxu0 %v457
      %611 = vmatmul.f32.gmra.mxu0 %v541
      %v612 = vpop.f32.mrf.mxu0
      %v613 = vadd.f32 %v593, %v612
      %614 = vdwg.mxu0
      %615 = vmatpush.xpose.msra.mxu0 0.0
      %616 = vmatpush.xpose.msra.mxu0 0.0
      %617 = vmatpush.xpose.msra.mxu0 0.0
      %618 = vmatpush.xpose.msra.mxu0 0.0
      %619 = vmatpush.xpose.msra.mxu0 0.0
      %620 = vmatpush.xpose.msra.mxu0 0.0
      %621 = vmatpush.xpose.msra.mxu0 0.0
      %622 = vmatpush.xpose.msra.mxu0 0.0
      %623 = vmatpush.xpose.msra.mxu0 0.0
      %624 = vmatpush.xpose.msra.mxu0 0.0
      %625 = vmatpush.xpose.msra.mxu0 0.0
      %626 = vmatpush.xpose.msra.mxu0 0.0
      %627 = vmatpush.xpose.msra.mxu0 0.0
      %628 = vmatpush.xpose.msra.mxu0 0.0
      %629 = vmatpush.xpose.msra.mxu0 0.0
      %630 = vmatpush.xpose.msra.mxu0 %v458
      %631 = vmatmul.f32.gmra.mxu0 %v542
      %v632 = vpop.f32.mrf.mxu0
      %v633 = vadd.f32 %v613, %v632
      %634 = vdwg.mxu0
      %635 = vmatpush.xpose.msra.mxu0 0.0
      %636 = vmatpush.xpose.msra.mxu0 0.0
      %637 = vmatpush.xpose.msra.mxu0 0.0
      %638 = vmatpush.xpose.msra.mxu0 0.0
      %639 = vmatpush.xpose.msra.mxu0 0.0
      %640 = vmatpush.xpose.msra.mxu0 0.0
      %641 = vmatpush.xpose.msra.mxu0 0.0
      %642 = vmatpush.xpose.msra.mxu0 0.0
      %643 = vmatpush.xpose.msra.mxu0 0.0
      %644 = vmatpush.xpose.msra.mxu0 0.0
      %645 = vmatpush.xpose.msra.mxu0 0.0
      %646 = vmatpush.xpose.msra.mxu0 0.0
      %647 = vmatpush.xpose.msra.mxu0 0.0
      %648 = vmatpush.xpose.msra.mxu0 0.0
      %649 = vmatpush.xpose.msra.mxu0 0.0
      %650 = vmatpush.xpose.msra.mxu0 %v459
      %651 = vmatmul.f32.gmra.mxu0 %v543
      %v652 = vpop.f32.mrf.mxu0
      %v653 = vadd.f32 %v633, %v652
      %654 = vdwg.mxu0
      %655 = vmatpush.xpose.msra.mxu0 0.0
      %656 = vmatpush.xpose.msra.mxu0 0.0
      %657 = vmatpush.xpose.msra.mxu0 0.0
      %658 = vmatpush.xpose.msra.mxu0 0.0
      %659 = vmatpush.xpose.msra.mxu0 0.0
      %660 = vmatpush.xpose.msra.mxu0 0.0
      %661 = vmatpush.xpose.msra.mxu0 0.0
      %662 = vmatpush.xpose.msra.mxu0 0.0
      %663 = vmatpush.xpose.msra.mxu0 0.0
      %664 = vmatpush.xpose.msra.mxu0 0.0
      %665 = vmatpush.xpose.msra.mxu0 0.0
      %666 = vmatpush.xpose.msra.mxu0 0.0
      %667 = vmatpush.xpose.msra.mxu0 0.0
      %668 = vmatpush.xpose.msra.mxu0 0.0
      %669 = vmatpush.xpose.msra.mxu0 0.0
      %670 = vmatpush.xpose.msra.mxu0 %v460
      %671 = vmatmul.f32.gmra.mxu0 %v544
      %v672 = vpop.f32.mrf.mxu0
      %v673 = vadd.f32 %v653, %v672
      %674 = vdwg.mxu0
      %675 = vmatpush.xpose.msra.mxu0 0.0
      %676 = vmatpush.xpose.msra.mxu0 0.0
      %677 = vmatpush.xpose.msra.mxu0 0.0
      %678 = vmatpush.xpose.msra.mxu0 0.0
      %679 = vmatpush.xpose.msra.mxu0 0.0
      %680 = vmatpush.xpose.msra.mxu0 0.0
      %681 = vmatpush.xpose.msra.mxu0 0.0
      %682 = vmatpush.xpose.msra.mxu0 0.0
      %683 = vmatpush.xpose.msra.mxu0 0.0
      %684 = vmatpush.xpose.msra.mxu0 0.0
      %685 = vmatpush.xpose.msra.mxu0 0.0
      %686 = vmatpush.xpose.msra.mxu0 0.0
      %687 = vmatpush.xpose.msra.mxu0 0.0
      %688 = vmatpush.xpose.msra.mxu0 0.0
      %689 = vmatpush.xpose.msra.mxu0 0.0
      %690 = vmatpush.xpose.msra.mxu0 %v461
      %691 = vmatmul.f32.gmra.mxu0 %v545
      %v692 = vpop.f32.mrf.mxu0
      %v693 = vadd.f32 %v673, %v692
      %694 = vdwg.mxu0
      %695 = vmatpush.xpose.msra.mxu0 0.0
      %696 = vmatpush.xpose.msra.mxu0 0.0
      %697 = vmatpush.xpose.msra.mxu0 0.0
      %698 = vmatpush.xpose.msra.mxu0 0.0
      %699 = vmatpush.xpose.msra.mxu0 0.0
      %700 = vmatpush.xpose.msra.mxu0 0.0
      %701 = vmatpush.xpose.msra.mxu0 0.0
      %702 = vmatpush.xpose.msra.mxu0 0.0
      %703 = vmatpush.xpose.msra.mxu0 0.0
      %704 = vmatpush.xpose.msra.mxu0 0.0
      %705 = vmatpush.xpose.msra.mxu0 0.0
      %706 = vmatpush.xpose.msra.mxu0 0.0
      %707 = vmatpush.xpose.msra.mxu0 0.0
      %708 = vmatpush.xpose.msra.mxu0 0.0
      %709 = vmatpush.xpose.msra.mxu0 0.0
      %710 = vmatpush.xpose.msra.mxu0 %v462
      %711 = vmatmul.f32.gmra.mxu0 %v546
      %v712 = vpop.f32.mrf.mxu0
      %v713 = vadd.f32 %v693, %v712
      %714 = vdwg.mxu0
      %715 = vmatpush.xpose.msra.mxu0 0.0
      %716 = vmatpush.xpose.msra.mxu0 0.0
      %717 = vmatpush.xpose.msra.mxu0 0.0
      %718 = vmatpush.xpose.msra.mxu0 0.0
      %719 = vmatpush.xpose.msra.mxu0 0.0
      %720 = vmatpush.xpose.msra.mxu0 0.0
      %721 = vmatpush.xpose.msra.mxu0 0.0
      %722 = vmatpush.xpose.msra.mxu0 0.0
      %723 = vmatpush.xpose.msra.mxu0 0.0
      %724 = vmatpush.xpose.msra.mxu0 0.0
      %725 = vmatpush.xpose.msra.mxu0 0.0
      %726 = vmatpush.xpose.msra.mxu0 0.0
      %727 = vmatpush.xpose.msra.mxu0 0.0
      %728 = vmatpush.xpose.msra.mxu0 0.0
      %729 = vmatpush.xpose.msra.mxu0 0.0
      %730 = vmatpush.xpose.msra.mxu0 %v463
      %731 = vmatmul.f32.gmra.mxu0 %v547
      %v732 = vpop.f32.mrf.mxu0
      %v733 = vadd.f32 %v713, %v732
      %734 = vdwg.mxu0
      %735 = vmatpush.xpose.msra.mxu0 0.0
      %736 = vmatpush.xpose.msra.mxu0 0.0
      %737 = vmatpush.xpose.msra.mxu0 0.0
      %738 = vmatpush.xpose.msra.mxu0 0.0
      %739 = vmatpush.xpose.msra.mxu0 0.0
      %740 = vmatpush.xpose.msra.mxu0 0.0
      %741 = vmatpush.xpose.msra.mxu0 0.0
      %742 = vmatpush.xpose.msra.mxu0 0.0
      %743 = vmatpush.xpose.msra.mxu0 0.0
      %744 = vmatpush.xpose.msra.mxu0 0.0
      %745 = vmatpush.xpose.msra.mxu0 0.0
      %746 = vmatpush.xpose.msra.mxu0 0.0
      %747 = vmatpush.xpose.msra.mxu0 0.0
      %748 = vmatpush.xpose.msra.mxu0 0.0
      %749 = vmatpush.xpose.msra.mxu0 0.0
      %750 = vmatpush.xpose.msra.mxu0 %v456
      %751 = vmatmul.f32.gmra.mxu0 %v567
      %v752 = vpop.f32.mrf.mxu0
      %v753 = vadd.f32 0.0, %v752
      %754 = vdwg.mxu0
      %755 = vmatpush.xpose.msra.mxu0 0.0
      %756 = vmatpush.xpose.msra.mxu0 0.0
      %757 = vmatpush.xpose.msra.mxu0 0.0
      %758 = vmatpush.xpose.msra.mxu0 0.0
      %759 = vmatpush.xpose.msra.mxu0 0.0
      %760 = vmatpush.xpose.msra.mxu0 0.0
      %761 = vmatpush.xpose.msra.mxu0 0.0
      %762 = vmatpush.xpose.msra.mxu0 0.0
      %763 = vmatpush.xpose.msra.mxu0 0.0
      %764 = vmatpush.xpose.msra.mxu0 0.0
      %765 = vmatpush.xpose.msra.mxu0 0.0
      %766 = vmatpush.xpose.msra.mxu0 0.0
      %767 = vmatpush.xpose.msra.mxu0 0.0
      %768 = vmatpush.xpose.msra.mxu0 0.0
      %769 = vmatpush.xpose.msra.mxu0 0.0
      %770 = vmatpush.xpose.msra.mxu0 %v457
      %771 = vmatmul.f32.gmra.mxu0 %v568
      %v772 = vpop.f32.mrf.mxu0
      %v773 = vadd.f32 %v753, %v772
      %774 = vdwg.mxu0
      %775 = vmatpush.xpose.msra.mxu0 0.0
      %776 = vmatpush.xpose.msra.mxu0 0.0
      %777 = vmatpush.xpose.msra.mxu0 0.0
      %778 = vmatpush.xpose.msra.mxu0 0.0
      %779 = vmatpush.xpose.msra.mxu0 0.0
      %780 = vmatpush.xpose.msra.mxu0 0.0
      %781 = vmatpush.xpose.msra.mxu0 0.0
      %782 = vmatpush.xpose.msra.mxu0 0.0
      %783 = vmatpush.xpose.msra.mxu0 0.0
      %784 = vmatpush.xpose.msra.mxu0 0.0
      %785 = vmatpush.xpose.msra.mxu0 0.0
      %786 = vmatpush.xpose.msra.mxu0 0.0
      %787 = vmatpush.xpose.msra.mxu0 0.0
      %788 = vmatpush.xpose.msra.mxu0 0.0
      %789 = vmatpush.xpose.msra.mxu0 0.0
      %790 = vmatpush.xpose.msra.mxu0 %v458
      %791 = vmatmul.f32.gmra.mxu0 %v569
      %v792 = vpop.f32.mrf.mxu0
      %v793 = vadd.f32 %v773, %v792
      %794 = vdwg.mxu0
      %795 = vmatpush.xpose.msra.mxu0 0.0
      %796 = vmatpush.xpose.msra.mxu0 0.0
      %797 = vmatpush.xpose.msra.mxu0 0.0
      %798 = vmatpush.xpose.msra.mxu0 0.0
      %799 = vmatpush.xpose.msra.mxu0 0.0
      %800 = vmatpush.xpose.msra.mxu0 0.0
      %801 = vmatpush.xpose.msra.mxu0 0.0
      %802 = vmatpush.xpose.msra.mxu0 0.0
      %803 = vmatpush.xpose.msra.mxu0 0.0
      %804 = vmatpush.xpose.msra.mxu0 0.0
      %805 = vmatpush.xpose.msra.mxu0 0.0
      %806 = vmatpush.xpose.msra.mxu0 0.0
      %807 = vmatpush.xpose.msra.mxu0 0.0
      %808 = vmatpush.xpose.msra.mxu0 0.0
      %809 = vmatpush.xpose.msra.mxu0 0.0
      %810 = vmatpush.xpose.msra.mxu0 %v459
      %811 = vmatmul.f32.gmra.mxu0 %v570
      %v812 = vpop.f32.mrf.mxu0
      %v813 = vadd.f32 %v793, %v812
      %814 = vdwg.mxu0
      %815 = vmatpush.xpose.msra.mxu0 0.0
      %816 = vmatpush.xpose.msra.mxu0 0.0
      %817 = vmatpush.xpose.msra.mxu0 0.0
      %818 = vmatpush.xpose.msra.mxu0 0.0
      %819 = vmatpush.xpose.msra.mxu0 0.0
      %820 = vmatpush.xpose.msra.mxu0 0.0
      %821 = vmatpush.xpose.msra.mxu0 0.0
      %822 = vmatpush.xpose.msra.mxu0 0.0
      %823 = vmatpush.xpose.msra.mxu0 0.0
      %824 = vmatpush.xpose.msra.mxu0 0.0
      %825 = vmatpush.xpose.msra.mxu0 0.0
      %826 = vmatpush.xpose.msra.mxu0 0.0
      %827 = vmatpush.xpose.msra.mxu0 0.0
      %828 = vmatpush.xpose.msra.mxu0 0.0
      %829 = vmatpush.xpose.msra.mxu0 0.0
      %830 = vmatpush.xpose.msra.mxu0 %v460
      %831 = vmatmul.f32.gmra.mxu0 %v571
      %v832 = vpop.f32.mrf.mxu0
      %v833 = vadd.f32 %v813, %v832
      %834 = vdwg.mxu0
      %835 = vmatpush.xpose.msra.mxu0 0.0
      %836 = vmatpush.xpose.msra.mxu0 0.0
      %837 = vmatpush.xpose.msra.mxu0 0.0
      %838 = vmatpush.xpose.msra.mxu0 0.0
      %839 = vmatpush.xpose.msra.mxu0 0.0
      %840 = vmatpush.xpose.msra.mxu0 0.0
      %841 = vmatpush.xpose.msra.mxu0 0.0
      %842 = vmatpush.xpose.msra.mxu0 0.0
      %843 = vmatpush.xpose.msra.mxu0 0.0
      %844 = vmatpush.xpose.msra.mxu0 0.0
      %845 = vmatpush.xpose.msra.mxu0 0.0
      %846 = vmatpush.xpose.msra.mxu0 0.0
      %847 = vmatpush.xpose.msra.mxu0 0.0
      %848 = vmatpush.xpose.msra.mxu0 0.0
      %849 = vmatpush.xpose.msra.mxu0 0.0
      %850 = vmatpush.xpose.msra.mxu0 %v461
      %851 = vmatmul.f32.gmra.mxu0 %v572
      %v852 = vpop.f32.mrf.mxu0
      %v853 = vadd.f32 %v833, %v852
      %854 = vdwg.mxu0
      %855 = vmatpush.xpose.msra.mxu0 0.0
      %856 = vmatpush.xpose.msra.mxu0 0.0
      %857 = vmatpush.xpose.msra.mxu0 0.0
      %858 = vmatpush.xpose.msra.mxu0 0.0
      %859 = vmatpush.xpose.msra.mxu0 0.0
      %860 = vmatpush.xpose.msra.mxu0 0.0
      %861 = vmatpush.xpose.msra.mxu0 0.0
      %862 = vmatpush.xpose.msra.mxu0 0.0
      %863 = vmatpush.xpose.msra.mxu0 0.0
      %864 = vmatpush.xpose.msra.mxu0 0.0
      %865 = vmatpush.xpose.msra.mxu0 0.0
      %866 = vmatpush.xpose.msra.mxu0 0.0
      %867 = vmatpush.xpose.msra.mxu0 0.0
      %868 = vmatpush.xpose.msra.mxu0 0.0
      %869 = vmatpush.xpose.msra.mxu0 0.0
      %870 = vmatpush.xpose.msra.mxu0 %v462
      %871 = vmatmul.f32.gmra.mxu0 %v573
      %v872 = vpop.f32.mrf.mxu0
      %v873 = vadd.f32 %v853, %v872
      %874 = vdwg.mxu0
      %875 = vmatpush.xpose.msra.mxu0 0.0
      %876 = vmatpush.xpose.msra.mxu0 0.0
      %877 = vmatpush.xpose.msra.mxu0 0.0
      %878 = vmatpush.xpose.msra.mxu0 0.0
      %879 = vmatpush.xpose.msra.mxu0 0.0
      %880 = vmatpush.xpose.msra.mxu0 0.0
      %881 = vmatpush.xpose.msra.mxu0 0.0
      %882 = vmatpush.xpose.msra.mxu0 0.0
      %883 = vmatpush.xpose.msra.mxu0 0.0
      %884 = vmatpush.xpose.msra.mxu0 0.0
      %885 = vmatpush.xpose.msra.mxu0 0.0
      %886 = vmatpush.xpose.msra.mxu0 0.0
      %887 = vmatpush.xpose.msra.mxu0 0.0
      %888 = vmatpush.xpose.msra.mxu0 0.0
      %889 = vmatpush.xpose.msra.mxu0 0.0
      %890 = vmatpush.xpose.msra.mxu0 %v463
      %891 = vmatmul.f32.gmra.mxu0 %v574
      %v892 = vpop.f32.mrf.mxu0
      %v893 = vadd.f32 %v873, %v892
      %894 = vdwg.mxu0
      %v903 = vrot.slane %v491, 3
      %v904 = vrot.slane %v492, 3
      %v905 = vrot.slane %v493, 3
      %v906 = vrot.slane %v494, 3
      %v907 = vrot.slane %v495, 3
      %v908 = vrot.slane %v496, 3
      %v909 = vrot.slane %v497, 3
      %v910 = vrot.slane %v498, 3
      %919 = vmatpush.xpose.msra.mxu0 0.0
      %920 = vmatpush.xpose.msra.mxu0 0.0
      %921 = vmatpush.xpose.msra.mxu0 0.0
      %922 = vmatpush.xpose.msra.mxu0 0.0
      %923 = vmatpush.xpose.msra.mxu0 0.0
      %924 = vmatpush.xpose.msra.mxu0 0.0
      %925 = vmatpush.xpose.msra.mxu0 0.0
      %926 = vmatpush.xpose.msra.mxu0 0.0
      %927 = vmatpush.xpose.msra.mxu0 0.0
      %928 = vmatpush.xpose.msra.mxu0 0.0
      %929 = vmatpush.xpose.msra.mxu0 0.0
      %930 = vmatpush.xpose.msra.mxu0 0.0
      %931 = vmatpush.xpose.msra.mxu0 0.0
      %932 = vmatpush.xpose.msra.mxu0 0.0
      %933 = vmatpush.xpose.msra.mxu0 0.0
      %934 = vmatpush.xpose.msra.mxu0 %v903
      %935 = vmatmul.f32.gmra.mxu0 %v540
      %v936 = vpop.f32.mrf.mxu0
      %v937 = vadd.f32 0.0, %v936
      %938 = vdwg.mxu0
      %939 = vmatpush.xpose.msra.mxu0 0.0
      %940 = vmatpush.xpose.msra.mxu0 0.0
      %941 = vmatpush.xpose.msra.mxu0 0.0
      %942 = vmatpush.xpose.msra.mxu0 0.0
      %943 = vmatpush.xpose.msra.mxu0 0.0
      %944 = vmatpush.xpose.msra.mxu0 0.0
      %945 = vmatpush.xpose.msra.mxu0 0.0
      %946 = vmatpush.xpose.msra.mxu0 0.0
      %947 = vmatpush.xpose.msra.mxu0 0.0
      %948 = vmatpush.xpose.msra.mxu0 0.0
      %949 = vmatpush.xpose.msra.mxu0 0.0
      %950 = vmatpush.xpose.msra.mxu0 0.0
      %951 = vmatpush.xpose.msra.mxu0 0.0
      %952 = vmatpush.xpose.msra.mxu0 0.0
      %953 = vmatpush.xpose.msra.mxu0 0.0
      %954 = vmatpush.xpose.msra.mxu0 %v904
      %955 = vmatmul.f32.gmra.mxu0 %v541
      %v956 = vpop.f32.mrf.mxu0
      %v957 = vadd.f32 %v937, %v956
      %958 = vdwg.mxu0
      %959 = vmatpush.xpose.msra.mxu0 0.0
      %960 = vmatpush.xpose.msra.mxu0 0.0
      %961 = vmatpush.xpose.msra.mxu0 0.0
      %962 = vmatpush.xpose.msra.mxu0 0.0
      %963 = vmatpush.xpose.msra.mxu0 0.0
      %964 = vmatpush.xpose.msra.mxu0 0.0
      %965 = vmatpush.xpose.msra.mxu0 0.0
      %966 = vmatpush.xpose.msra.mxu0 0.0
      %967 = vmatpush.xpose.msra.mxu0 0.0
      %968 = vmatpush.xpose.msra.mxu0 0.0
      %969 = vmatpush.xpose.msra.mxu0 0.0
      %970 = vmatpush.xpose.msra.mxu0 0.0
      %971 = vmatpush.xpose.msra.mxu0 0.0
      %972 = vmatpush.xpose.msra.mxu0 0.0
      %973 = vmatpush.xpose.msra.mxu0 0.0
      %974 = vmatpush.xpose.msra.mxu0 %v905
      %975 = vmatmul.f32.gmra.mxu0 %v542
      %v976 = vpop.f32.mrf.mxu0
      %v977 = vadd.f32 %v957, %v976
      %978 = vdwg.mxu0
      %979 = vmatpush.xpose.msra.mxu0 0.0
      %980 = vmatpush.xpose.msra.mxu0 0.0
      %981 = vmatpush.xpose.msra.mxu0 0.0
      %982 = vmatpush.xpose.msra.mxu0 0.0
      %983 = vmatpush.xpose.msra.mxu0 0.0
      %984 = vmatpush.xpose.msra.mxu0 0.0
      %985 = vmatpush.xpose.msra.mxu0 0.0
      %986 = vmatpush.xpose.msra.mxu0 0.0
      %987 = vmatpush.xpose.msra.mxu0 0.0
      %988 = vmatpush.xpose.msra.mxu0 0.0
      %989 = vmatpush.xpose.msra.mxu0 0.0
      %990 = vmatpush.xpose.msra.mxu0 0.0
      %991 = vmatpush.xpose.msra.mxu0 0.0
      %992 = vmatpush.xpose.msra.mxu0 0.0
      %993 = vmatpush.xpose.msra.mxu0 0.0
      %994 = vmatpush.xpose.msra.mxu0 %v906
      %995 = vmatmul.f32.gmra.mxu0 %v543
      %v996 = vpop.f32.mrf.mxu0
      %v997 = vadd.f32 %v977, %v996
      %998 = vdwg.mxu0
      %999 = vmatpush.xpose.msra.mxu0 0.0
      %1000 = vmatpush.xpose.msra.mxu0 0.0
      %1001 = vmatpush.xpose.msra.mxu0 0.0
      %1002 = vmatpush.xpose.msra.mxu0 0.0
      %1003 = vmatpush.xpose.msra.mxu0 0.0
      %1004 = vmatpush.xpose.msra.mxu0 0.0
      %1005 = vmatpush.xpose.msra.mxu0 0.0
      %1006 = vmatpush.xpose.msra.mxu0 0.0
      %1007 = vmatpush.xpose.msra.mxu0 0.0
      %1008 = vmatpush.xpose.msra.mxu0 0.0
      %1009 = vmatpush.xpose.msra.mxu0 0.0
      %1010 = vmatpush.xpose.msra.mxu0 0.0
      %1011 = vmatpush.xpose.msra.mxu0 0.0
      %1012 = vmatpush.xpose.msra.mxu0 0.0
      %1013 = vmatpush.xpose.msra.mxu0 0.0
      %1014 = vmatpush.xpose.msra.mxu0 %v907
      %1015 = vmatmul.f32.gmra.mxu0 %v544
      %v1016 = vpop.f32.mrf.mxu0
      %v1017 = vadd.f32 %v997, %v1016
      %1018 = vdwg.mxu0
      %1019 = vmatpush.xpose.msra.mxu0 0.0
      %1020 = vmatpush.xpose.msra.mxu0 0.0
      %1021 = vmatpush.xpose.msra.mxu0 0.0
      %1022 = vmatpush.xpose.msra.mxu0 0.0
      %1023 = vmatpush.xpose.msra.mxu0 0.0
      %1024 = vmatpush.xpose.msra.mxu0 0.0
      %1025 = vmatpush.xpose.msra.mxu0 0.0
      %1026 = vmatpush.xpose.msra.mxu0 0.0
      %1027 = vmatpush.xpose.msra.mxu0 0.0
      %1028 = vmatpush.xpose.msra.mxu0 0.0
      %1029 = vmatpush.xpose.msra.mxu0 0.0
      %1030 = vmatpush.xpose.msra.mxu0 0.0
      %1031 = vmatpush.xpose.msra.mxu0 0.0
      %1032 = vmatpush.xpose.msra.mxu0 0.0
      %1033 = vmatpush.xpose.msra.mxu0 0.0
      %1034 = vmatpush.xpose.msra.mxu0 %v908
      %1035 = vmatmul.f32.gmra.mxu0 %v545
      %v1036 = vpop.f32.mrf.mxu0
      %v1037 = vadd.f32 %v1017, %v1036
      %1038 = vdwg.mxu0
      %1039 = vmatpush.xpose.msra.mxu0 0.0
      %1040 = vmatpush.xpose.msra.mxu0 0.0
      %1041 = vmatpush.xpose.msra.mxu0 0.0
      %1042 = vmatpush.xpose.msra.mxu0 0.0
      %1043 = vmatpush.xpose.msra.mxu0 0.0
      %1044 = vmatpush.xpose.msra.mxu0 0.0
      %1045 = vmatpush.xpose.msra.mxu0 0.0
      %1046 = vmatpush.xpose.msra.mxu0 0.0
      %1047 = vmatpush.xpose.msra.mxu0 0.0
      %1048 = vmatpush.xpose.msra.mxu0 0.0
      %1049 = vmatpush.xpose.msra.mxu0 0.0
      %1050 = vmatpush.xpose.msra.mxu0 0.0
      %1051 = vmatpush.xpose.msra.mxu0 0.0
      %1052 = vmatpush.xpose.msra.mxu0 0.0
      %1053 = vmatpush.xpose.msra.mxu0 0.0
      %1054 = vmatpush.xpose.msra.mxu0 %v909
      %1055 = vmatmul.f32.gmra.mxu0 %v546
      %v1056 = vpop.f32.mrf.mxu0
      %v1057 = vadd.f32 %v1037, %v1056
      %1058 = vdwg.mxu0
      %1059 = vmatpush.xpose.msra.mxu0 0.0
      %1060 = vmatpush.xpose.msra.mxu0 0.0
      %1061 = vmatpush.xpose.msra.mxu0 0.0
      %1062 = vmatpush.xpose.msra.mxu0 0.0
      %1063 = vmatpush.xpose.msra.mxu0 0.0
      %1064 = vmatpush.xpose.msra.mxu0 0.0
      %1065 = vmatpush.xpose.msra.mxu0 0.0
      %1066 = vmatpush.xpose.msra.mxu0 0.0
      %1067 = vmatpush.xpose.msra.mxu0 0.0
      %1068 = vmatpush.xpose.msra.mxu0 0.0
      %1069 = vmatpush.xpose.msra.mxu0 0.0
      %1070 = vmatpush.xpose.msra.mxu0 0.0
      %1071 = vmatpush.xpose.msra.mxu0 0.0
      %1072 = vmatpush.xpose.msra.mxu0 0.0
      %1073 = vmatpush.xpose.msra.mxu0 0.0
      %1074 = vmatpush.xpose.msra.mxu0 %v910
      %1075 = vmatmul.f32.gmra.mxu0 %v547
      %v1076 = vpop.f32.mrf.mxu0
      %v1077 = vadd.f32 %v1057, %v1076
      %1078 = vdwg.mxu0
      %v1079 = vmul.f32 %v491, %v491
      %v1080 = vmul.f32 %v492, %v492
      %v1081 = vmul.f32 %v493, %v493
      %v1082 = vmul.f32 %v494, %v494
      %v1083 = vmul.f32 %v495, %v495
      %v1084 = vmul.f32 %v496, %v496
      %v1085 = vmul.f32 %v497, %v497
      %v1086 = vmul.f32 %v498, %v498
      %v1095 = vrot.slane %v1079, 3
      %v1096 = vrot.slane %v1080, 3
      %v1097 = vrot.slane %v1081, 3
      %v1098 = vrot.slane %v1082, 3
      %v1099 = vrot.slane %v1083, 3
      %v1100 = vrot.slane %v1084, 3
      %v1101 = vrot.slane %v1085, 3
      %v1102 = vrot.slane %v1086, 3
      %1111 = vmatpush.xpose.msra.mxu0 0.0
      %1112 = vmatpush.xpose.msra.mxu0 0.0
      %1113 = vmatpush.xpose.msra.mxu0 0.0
      %1114 = vmatpush.xpose.msra.mxu0 0.0
      %1115 = vmatpush.xpose.msra.mxu0 0.0
      %1116 = vmatpush.xpose.msra.mxu0 0.0
      %1117 = vmatpush.xpose.msra.mxu0 0.0
      %1118 = vmatpush.xpose.msra.mxu0 0.0
      %1119 = vmatpush.xpose.msra.mxu0 0.0
      %1120 = vmatpush.xpose.msra.mxu0 0.0
      %1121 = vmatpush.xpose.msra.mxu0 0.0
      %1122 = vmatpush.xpose.msra.mxu0 0.0
      %1123 = vmatpush.xpose.msra.mxu0 0.0
      %1124 = vmatpush.xpose.msra.mxu0 0.0
      %1125 = vmatpush.xpose.msra.mxu0 0.0
      %1126 = vmatpush.xpose.msra.mxu0 %v1095
      %1127 = vmatmul.f32.gmra.mxu0 %v540
      %v1128 = vpop.f32.mrf.mxu0
      %v1129 = vadd.f32 0.0, %v1128
      %1130 = vdwg.mxu0
      %1131 = vmatpush.xpose.msra.mxu0 0.0
      %1132 = vmatpush.xpose.msra.mxu0 0.0
      %1133 = vmatpush.xpose.msra.mxu0 0.0
      %1134 = vmatpush.xpose.msra.mxu0 0.0
      %1135 = vmatpush.xpose.msra.mxu0 0.0
      %1136 = vmatpush.xpose.msra.mxu0 0.0
      %1137 = vmatpush.xpose.msra.mxu0 0.0
      %1138 = vmatpush.xpose.msra.mxu0 0.0
      %1139 = vmatpush.xpose.msra.mxu0 0.0
      %1140 = vmatpush.xpose.msra.mxu0 0.0
      %1141 = vmatpush.xpose.msra.mxu0 0.0
      %1142 = vmatpush.xpose.msra.mxu0 0.0
      %1143 = vmatpush.xpose.msra.mxu0 0.0
      %1144 = vmatpush.xpose.msra.mxu0 0.0
      %1145 = vmatpush.xpose.msra.mxu0 0.0
      %1146 = vmatpush.xpose.msra.mxu0 %v1096
      %1147 = vmatmul.f32.gmra.mxu0 %v541
      %v1148 = vpop.f32.mrf.mxu0
      %v1149 = vadd.f32 %v1129, %v1148
      %1150 = vdwg.mxu0
      %1151 = vmatpush.xpose.msra.mxu0 0.0
      %1152 = vmatpush.xpose.msra.mxu0 0.0
      %1153 = vmatpush.xpose.msra.mxu0 0.0
      %1154 = vmatpush.xpose.msra.mxu0 0.0
      %1155 = vmatpush.xpose.msra.mxu0 0.0
      %1156 = vmatpush.xpose.msra.mxu0 0.0
      %1157 = vmatpush.xpose.msra.mxu0 0.0
      %1158 = vmatpush.xpose.msra.mxu0 0.0
      %1159 = vmatpush.xpose.msra.mxu0 0.0
      %1160 = vmatpush.xpose.msra.mxu0 0.0
      %1161 = vmatpush.xpose.msra.mxu0 0.0
      %1162 = vmatpush.xpose.msra.mxu0 0.0
      %1163 = vmatpush.xpose.msra.mxu0 0.0
      %1164 = vmatpush.xpose.msra.mxu0 0.0
      %1165 = vmatpush.xpose.msra.mxu0 0.0
      %1166 = vmatpush.xpose.msra.mxu0 %v1097
      %1167 = vmatmul.f32.gmra.mxu0 %v542
      %v1168 = vpop.f32.mrf.mxu0
      %v1169 = vadd.f32 %v1149, %v1168
      %1170 = vdwg.mxu0
      %1171 = vmatpush.xpose.msra.mxu0 0.0
      %1172 = vmatpush.xpose.msra.mxu0 0.0
      %1173 = vmatpush.xpose.msra.mxu0 0.0
      %1174 = vmatpush.xpose.msra.mxu0 0.0
      %1175 = vmatpush.xpose.msra.mxu0 0.0
      %1176 = vmatpush.xpose.msra.mxu0 0.0
      %1177 = vmatpush.xpose.msra.mxu0 0.0
      %1178 = vmatpush.xpose.msra.mxu0 0.0
      %1179 = vmatpush.xpose.msra.mxu0 0.0
      %1180 = vmatpush.xpose.msra.mxu0 0.0
      %1181 = vmatpush.xpose.msra.mxu0 0.0
      %1182 = vmatpush.xpose.msra.mxu0 0.0
      %1183 = vmatpush.xpose.msra.mxu0 0.0
      %1184 = vmatpush.xpose.msra.mxu0 0.0
      %1185 = vmatpush.xpose.msra.mxu0 0.0
      %1186 = vmatpush.xpose.msra.mxu0 %v1098
      %1187 = vmatmul.f32.gmra.mxu0 %v543
      %v1188 = vpop.f32.mrf.mxu0
      %v1189 = vadd.f32 %v1169, %v1188
      %1190 = vdwg.mxu0
      %1191 = vmatpush.xpose.msra.mxu0 0.0
      %1192 = vmatpush.xpose.msra.mxu0 0.0
      %1193 = vmatpush.xpose.msra.mxu0 0.0
      %1194 = vmatpush.xpose.msra.mxu0 0.0
      %1195 = vmatpush.xpose.msra.mxu0 0.0
      %1196 = vmatpush.xpose.msra.mxu0 0.0
      %1197 = vmatpush.xpose.msra.mxu0 0.0
      %1198 = vmatpush.xpose.msra.mxu0 0.0
      %1199 = vmatpush.xpose.msra.mxu0 0.0
      %1200 = vmatpush.xpose.msra.mxu0 0.0
      %1201 = vmatpush.xpose.msra.mxu0 0.0
      %1202 = vmatpush.xpose.msra.mxu0 0.0
      %1203 = vmatpush.xpose.msra.mxu0 0.0
      %1204 = vmatpush.xpose.msra.mxu0 0.0
      %1205 = vmatpush.xpose.msra.mxu0 0.0
      %1206 = vmatpush.xpose.msra.mxu0 %v1099
      %1207 = vmatmul.f32.gmra.mxu0 %v544
      %v1208 = vpop.f32.mrf.mxu0
      %v1209 = vadd.f32 %v1189, %v1208
      %1210 = vdwg.mxu0
      %1211 = vmatpush.xpose.msra.mxu0 0.0
      %1212 = vmatpush.xpose.msra.mxu0 0.0
      %1213 = vmatpush.xpose.msra.mxu0 0.0
      %1214 = vmatpush.xpose.msra.mxu0 0.0
      %1215 = vmatpush.xpose.msra.mxu0 0.0
      %1216 = vmatpush.xpose.msra.mxu0 0.0
      %1217 = vmatpush.xpose.msra.mxu0 0.0
      %1218 = vmatpush.xpose.msra.mxu0 0.0
      %1219 = vmatpush.xpose.msra.mxu0 0.0
      %1220 = vmatpush.xpose.msra.mxu0 0.0
      %1221 = vmatpush.xpose.msra.mxu0 0.0
      %1222 = vmatpush.xpose.msra.mxu0 0.0
      %1223 = vmatpush.xpose.msra.mxu0 0.0
      %1224 = vmatpush.xpose.msra.mxu0 0.0
      %1225 = vmatpush.xpose.msra.mxu0 0.0
      %1226 = vmatpush.xpose.msra.mxu0 %v1100
      %1227 = vmatmul.f32.gmra.mxu0 %v545
      %v1228 = vpop.f32.mrf.mxu0
      %v1229 = vadd.f32 %v1209, %v1228
      %1230 = vdwg.mxu0
      %1231 = vmatpush.xpose.msra.mxu0 0.0
      %1232 = vmatpush.xpose.msra.mxu0 0.0
      %1233 = vmatpush.xpose.msra.mxu0 0.0
      %1234 = vmatpush.xpose.msra.mxu0 0.0
      %1235 = vmatpush.xpose.msra.mxu0 0.0
      %1236 = vmatpush.xpose.msra.mxu0 0.0
      %1237 = vmatpush.xpose.msra.mxu0 0.0
      %1238 = vmatpush.xpose.msra.mxu0 0.0
      %1239 = vmatpush.xpose.msra.mxu0 0.0
      %1240 = vmatpush.xpose.msra.mxu0 0.0
      %1241 = vmatpush.xpose.msra.mxu0 0.0
      %1242 = vmatpush.xpose.msra.mxu0 0.0
      %1243 = vmatpush.xpose.msra.mxu0 0.0
      %1244 = vmatpush.xpose.msra.mxu0 0.0
      %1245 = vmatpush.xpose.msra.mxu0 0.0
      %1246 = vmatpush.xpose.msra.mxu0 %v1101
      %1247 = vmatmul.f32.gmra.mxu0 %v546
      %v1248 = vpop.f32.mrf.mxu0
      %v1249 = vadd.f32 %v1229, %v1248
      %1250 = vdwg.mxu0
      %1251 = vmatpush.xpose.msra.mxu0 0.0
      %1252 = vmatpush.xpose.msra.mxu0 0.0
      %1253 = vmatpush.xpose.msra.mxu0 0.0
      %1254 = vmatpush.xpose.msra.mxu0 0.0
      %1255 = vmatpush.xpose.msra.mxu0 0.0
      %1256 = vmatpush.xpose.msra.mxu0 0.0
      %1257 = vmatpush.xpose.msra.mxu0 0.0
      %1258 = vmatpush.xpose.msra.mxu0 0.0
      %1259 = vmatpush.xpose.msra.mxu0 0.0
      %1260 = vmatpush.xpose.msra.mxu0 0.0
      %1261 = vmatpush.xpose.msra.mxu0 0.0
      %1262 = vmatpush.xpose.msra.mxu0 0.0
      %1263 = vmatpush.xpose.msra.mxu0 0.0
      %1264 = vmatpush.xpose.msra.mxu0 0.0
      %1265 = vmatpush.xpose.msra.mxu0 0.0
      %1266 = vmatpush.xpose.msra.mxu0 %v1102
      %1267 = vmatmul.f32.gmra.mxu0 %v547
      %v1268 = vpop.f32.mrf.mxu0
      %v1269 = vadd.f32 %v1249, %v1268
      %1270 = vdwg.mxu0
      %v1271 = vadd.f32 %v540, %v541
      %v1272 = vadd.f32 %v1271, %v542
      %v1273 = vadd.f32 %v1272, %v543
      %v1274 = vadd.f32 %v1273, %v544
      %v1275 = vadd.f32 %v1274, %v545
      %v1276 = vadd.f32 %v1275, %v546
      %v1277 = vadd.f32 %v1276, %v547
      %1278 = vadd.xlane.f32.xlu0 %v1277
      %v1279 = vpop.xlane.xlu0 %1278
      %v1280 = vadd.f32 %v567, %v568
      %v1281 = vadd.f32 %v1280, %v569
      %v1282 = vadd.f32 %v1281, %v570
      %v1283 = vadd.f32 %v1282, %v571
      %v1284 = vadd.f32 %v1283, %v572
      %v1285 = vadd.f32 %v1284, %v573
      %v1286 = vadd.f32 %v1285, %v574
      %1287 = vadd.xlane.f32.xlu0 %v1286
      %v1288 = vpop.xlane.xlu0 %1287
      %1290 = vrot.lane.b32.xlu0 %v733, 2
      %v1291 = vpop.permute.xlu0 %1290
      %1294 = vrot.lane.b32.xlu0 %v893, 5
      %v1295 = vpop.permute.xlu0 %1294
      %1298 = vrot.lane.b32.xlu0 %v1077, 8
      %v1299 = vpop.permute.xlu0 %1298
      %1302 = vrot.lane.b32.xlu0 %v1269, 11
      %v1303 = vpop.permute.xlu0 %1302
      %vm1305 = vcmask 7168
      %v1306 = vsel %vm1305, %v1279, %v1288
      %vm1307 = vcmask 15360
      %v1308 = vsel %vm1307, %v1306, %v1291
      %vm1309 = vcmask 39936
      %v1310 = vsel %vm1309, %v1308, %v1295
      %vm1311 = vcmask 64512
      %v1312 = vsel %vm1311, %v1310, %v1299
      %vm1313 = vcmask 89088
      %v1314 = vsel %vm1313, %v1312, %v1303
      %vm1315 = vcmask 113664
      %1316 = vst.msk [vmem:[%s366] sm:$0xff] %vm1315, %v1314
      %p1317 = scmp.lt.s32.totalorder %s19, 1
      %s1318 = scalar_select %p1317, %s19, 1
      %p1319 = scmp.lt.s32.totalorder %s20, 1
      %s1320 = scalar_select %p1319, %s20, 1
      %s1321 = smul.addr %s1318, 2
      %s1322 = sadd.s32 %s1320, %s1321
      %s1323 = smul.addr %s1322, 8
      %s1324 = scalar_lea.vmem %s4, %s1323
      // Predicated region
      $region37: #{spatial_emb_loss_forward.2} parent=35 // pred_check
        %p1325 = pneg %p157
      $region38: #{spatial_emb_loss_forward.2} parent=35 // pred_check_branch
        %1327 = sbr.rel (%p1325) target = $region40
      $region39: #{spatial_emb_loss_forward.2} parent=35 // pred_region
        _
      $region40: #{spatial_emb_loss_forward.2} parent=35 // pred_fallthru
        _
    $region36: #{spatial_emb_loss_forward.2} parent=5 // pred_fallthru
      _
    %p1328 = scmp.le.s32.totalorder 2, %s10
    // Predicated region
    $region41: #{spatial_emb_loss_forward.2} parent=5 // pred_check
      %p1329 = pneg %p1328
    $region42: #{spatial_emb_loss_forward.2} parent=5 // pred_check_branch
      %1331 = sbr.rel (%p1329) target = $region44
    $region43: #{spatial_emb_loss_forward.2} parent=5 // pred_region
      %s1332 = ssub.s32 %s10, 2
      // Predicated region
      $region45: #{spatial_emb_loss_forward.2} parent=43 // pred_check
        %p1333 = pneg %p163
      $region46: #{spatial_emb_loss_forward.2} parent=43 // pred_check_branch
        %1335 = sbr.rel (%p1333) target = $region48
      $region47: #{spatial_emb_loss_forward.2} parent=43 // pred_region
        %p1336 = scmp.lt.s32.totalorder %s21, 1
        %s1337 = scalar_select %p1336, %s21, 1
        %p1338 = scmp.lt.s32.totalorder %s22, 1
        %s1339 = scalar_select %p1338, %s22, 1
        %s1340 = smul.addr %s1337, 2
        %s1341 = sadd.s32 %s1339, %s1340
        %s1342 = smul.addr %s1341, 8
        %s1343 = scalar_lea.vmem %s4, %s1342
      $region48: #{spatial_emb_loss_forward.2} parent=43 // pred_fallthru
        _
    $region44: #{spatial_emb_loss_forward.2} parent=5 // pred_fallthru
      _
  $region6: #{spatial_emb_loss_forward.2} parent=0 // loop_footer
    %s14 = sadd.s32 1, %s10
  $region7: #{spatial_emb_loss_forward.2} parent=0 // loop_footer_branch
    %9 = sbr.rel target = $region3
  $region8: #{spatial_emb_loss_forward.2} parent=0 // loop_exit
    _

// kernel: spatial_emb_loss_forward.3
$region0: #{spatial_emb_loss_forward.3}
  #allocation0 [shape = 'u32[]', space=smem, size = 0x4, offset = 0x4, fixed_abs, tag = 'smem constant byte address 0x4 - core index']
  #allocation1 [shape = 'u32[72,128]{1,0:T(1,128)}', space=vmem, size = 0x9000, scoped, tag = 'internal scratch']
  %s0 = inlined_call_operand.vmem [shape: s32[2,8,1], index: 0, kind: input, shape index: {}]
  %s1 = inlined_call_operand.vmem [shape: f32[2,8,7], index: 1, kind: input, shape index: {}]
  %s2 = inlined_call_operand.vmem [shape: f32[2,7,1536], index: 2, kind: input, shape index: {}]
  %s3 = inlined_call_operand.vmem [shape: s32[2,1,1536], index: 3, kind: input, shape index: {}]
  %s4 = inlined_call_operand.vmem [shape: s32[2,1,1536], index: 4, kind: input, shape index: {}]
  %s5 = inlined_call_operand.vmem [shape: bf16[2,8,1536], index: 5, kind: output, shape index: {0}]
  %s6 = inlined_call_operand.vmem [shape: f32[2,2,1,1], index: 6, kind: output, shape index: {1}]
  %7 = xla_tuple %s5, %s6
  %s8 = sld [smem:[#allocation0]]
  $region123: #{spatial_emb_loss_forward.3} parent=0
    _
  %s10 = ssub.s32 1, %s8
  %s11 = scalar_select 0, %s10, %s8
  $region1: #{spatial_emb_loss_forward.3} parent=0
    #allocation2 [shape = 'u8[32768]{0}', space=vmem, size = 0x8000, scoped, tag = 'output window, operand 0']
    loop: start=0, step=1, limit=6
    $region2: #{spatial_emb_loss_forward.3} parent=1 // loop_pre_header
      _
    $region3: #{spatial_emb_loss_forward.3} parent=1 // loop_header
      %s13 = sphi 0, %s17
      %p14 = scmp.ge.s32.totalorder %s13, 6
      %s20 = sphi 0, %s32
      %s21 = sphi 0, %s28
      %s22 = sphi 0, %s20
      %s23 = sphi 0, %s21
      %s24 = sphi 0, %s22
      %s25 = sphi 0, %s23
      %s35 = sphi 0, %s37
      %s38 = sphi 0, %s35
      %s39 = sphi 0, %s38
      %s55 = sphi 0, %s39
      %s61 = sphi 0, %s63
      %s64 = sphi 0, %s61
      %s65 = sphi 0, %s64
      %s81 = sphi 0, %s65
      %s89 = sphi 0, %s91
      %s92 = sphi 0, %s89
      %s93 = sphi 0, %s92
      %s109 = sphi 0, %s93
      %s117 = sphi 0, %s119
      %s120 = sphi 0, %s117
      %s121 = sphi 0, %s120
      %s137 = sphi 0, %s121
      %s145 = sphi 0, %s147
      %s148 = sphi 0, %s145
      %s149 = sphi 0, %s148
      %s165 = sphi 0, %s149
      %s173 = sphi 0, %s175
      %s176 = sphi 0, %s173
      %s177 = sphi 0, %s176
      %s193 = sphi 0, %s177
      %s201 = sphi 0, %s203
      %s204 = sphi 0, %s201
      %s205 = sphi 0, %s204
      %s221 = sphi 0, %s205
    $region4: #{spatial_emb_loss_forward.3} parent=1 // loop_header_branch
      %16 = sbr.rel (%p14) target = $region8
    $region5: #{spatial_emb_loss_forward.3} parent=1 // loop_body
      %s18 = ssub.s32 %s13, 1
      %s19 = ssub.s32 %s13, 2
      %s26 = sadd.s32 1, %s21
      %p27 = scmp.ge.s32.totalorder %s26, 2
      %s28 = scalar_select %p27, 0, %s26
      %s29 = sadd.s32 1, %s20
      %s30 = scalar_select %p27, %s29, %s20
      %p31 = scmp.ge.s32.totalorder %s30, 2
      %s32 = scalar_select %p31, 0, %s30
      %s33 = ssub.s32 %s20, %s32
      %p34 = scmp.eq.s32.totalorder %s33, 0
      %s36 = sadd.s32 %s35, 1
      %s37 = scalar_select %p34, %s35, %s36
      %p40 = pneg %p34
      %p41 = scmp.eq.s32.totalorder %s13, 3
      %p42 = por %p40, %p41
      %p43 = scmp.ne.s32.totalorder %s35, %s38
      %p44 = scmp.eq.s32.totalorder %s13, 0
      %p45 = por %p43, %p44
      %p46 = scmp.ne.s32.totalorder %s35, %s38
      %p47 = scmp.eq.s32.totalorder %s18, 3
      %p48 = por %p46, %p47
      %p49 = scmp.ne.s32.totalorder %s38, %s39
      %p50 = scmp.eq.s32.totalorder %s18, 0
      %p51 = por %p49, %p50
      %p52 = scmp.ne.s32.totalorder %s38, %s39
      %p53 = scmp.eq.s32.totalorder %s19, 3
      %p54 = por %p52, %p53
      %p56 = scmp.ne.s32.totalorder %s39, %s55
      %p57 = scmp.eq.s32.totalorder %s19, 0
      %p58 = por %p56, %p57
      %s59 = ssub.s32 %s20, %s32
      %p60 = scmp.eq.s32.totalorder %s59, 0
      %s62 = sadd.s32 %s61, 1
      %s63 = scalar_select %p60, %s61, %s62
      %p66 = pneg %p60
      %p67 = scmp.eq.s32.totalorder %s13, 3
      %p68 = por %p66, %p67
      %p69 = scmp.ne.s32.totalorder %s61, %s64
      %p70 = scmp.eq.s32.totalorder %s13, 0
      %p71 = por %p69, %p70
      %p72 = scmp.ne.s32.totalorder %s61, %s64
      %p73 = scmp.eq.s32.totalorder %s18, 3
      %p74 = por %p72, %p73
      %p75 = scmp.ne.s32.totalorder %s64, %s65
      %p76 = scmp.eq.s32.totalorder %s18, 0
      %p77 = por %p75, %p76
      %p78 = scmp.ne.s32.totalorder %s64, %s65
      %p79 = scmp.eq.s32.totalorder %s19, 3
      %p80 = por %p78, %p79
      %p82 = scmp.ne.s32.totalorder %s65, %s81
      %p83 = scmp.eq.s32.totalorder %s19, 0
      %p84 = por %p82, %p83
      %s85 = ssub.s32 %s20, %s32
      %s86 = ssub.s32 %s21, %s28
      %s87 = sor.u32 %s85, %s86
      %p88 = scmp.eq.s32.totalorder %s87, 0
      %s90 = sadd.s32 %s89, 1
      %s91 = scalar_select %p88, %s89, %s90
      %p94 = pneg %p88
      %p95 = scmp.eq.s32.totalorder %s13, 3
      %p96 = por %p94, %p95
      %p97 = scmp.ne.s32.totalorder %s89, %s92
      %p98 = scmp.eq.s32.totalorder %s13, 0
      %p99 = por %p97, %p98
      %p100 = scmp.ne.s32.totalorder %s89, %s92
      %p101 = scmp.eq.s32.totalorder %s18, 3
      %p102 = por %p100, %p101
      %p103 = scmp.ne.s32.totalorder %s92, %s93
      %p104 = scmp.eq.s32.totalorder %s18, 0
      %p105 = por %p103, %p104
      %p106 = scmp.ne.s32.totalorder %s92, %s93
      %p107 = scmp.eq.s32.totalorder %s19, 3
      %p108 = por %p106, %p107
      %p110 = scmp.ne.s32.totalorder %s93, %s109
      %p111 = scmp.eq.s32.totalorder %s19, 0
      %p112 = por %p110, %p111
      %s113 = ssub.s32 %s20, %s32
      %s114 = ssub.s32 %s21, %s28
      %s115 = sor.u32 %s113, %s114
      %p116 = scmp.eq.s32.totalorder %s115, 0
      %s118 = sadd.s32 %s117, 1
      %s119 = scalar_select %p116, %s117, %s118
      %p122 = pneg %p116
      %p123 = scmp.eq.s32.totalorder %s13, 3
      %p124 = por %p122, %p123
      %p125 = scmp.ne.s32.totalorder %s117, %s120
      %p126 = scmp.eq.s32.totalorder %s13, 0
      %p127 = por %p125, %p126
      %p128 = scmp.ne.s32.totalorder %s117, %s120
      %p129 = scmp.eq.s32.totalorder %s18, 3
      %p130 = por %p128, %p129
      %p131 = scmp.ne.s32.totalorder %s120, %s121
      %p132 = scmp.eq.s32.totalorder %s18, 0
      %p133 = por %p131, %p132
      %p134 = scmp.ne.s32.totalorder %s120, %s121
      %p135 = scmp.eq.s32.totalorder %s19, 3
      %p136 = por %p134, %p135
      %p138 = scmp.ne.s32.totalorder %s121, %s137
      %p139 = scmp.eq.s32.totalorder %s19, 0
      %p140 = por %p138, %p139
      %s141 = ssub.s32 %s20, %s32
      %s142 = ssub.s32 %s21, %s28
      %s143 = sor.u32 %s141, %s142
      %p144 = scmp.eq.s32.totalorder %s143, 0
      %s146 = sadd.s32 %s145, 1
      %s147 = scalar_select %p144, %s145, %s146
      %p150 = pneg %p144
      %p151 = scmp.eq.s32.totalorder %s13, 3
      %p152 = por %p150, %p151
      %p153 = scmp.ne.s32.totalorder %s145, %s148
      %p154 = scmp.eq.s32.totalorder %s13, 0
      %p155 = por %p153, %p154
      %p156 = scmp.ne.s32.totalorder %s145, %s148
      %p157 = scmp.eq.s32.totalorder %s18, 3
      %p158 = por %p156, %p157
      %p159 = scmp.ne.s32.totalorder %s148, %s149
      %p160 = scmp.eq.s32.totalorder %s18, 0
      %p161 = por %p159, %p160
      %p162 = scmp.ne.s32.totalorder %s148, %s149
      %p163 = scmp.eq.s32.totalorder %s19, 3
      %p164 = por %p162, %p163
      %p166 = scmp.ne.s32.totalorder %s149, %s165
      %p167 = scmp.eq.s32.totalorder %s19, 0
      %p168 = por %p166, %p167
      %s169 = ssub.s32 %s20, %s32
      %s170 = ssub.s32 %s21, %s28
      %s171 = sor.u32 %s169, %s170
      %p172 = scmp.eq.s32.totalorder %s171, 0
      %s174 = sadd.s32 %s173, 1
      %s175 = scalar_select %p172, %s173, %s174
      %p178 = pneg %p172
      %p179 = scmp.eq.s32.totalorder %s13, 3
      %p180 = por %p178, %p179
      %p181 = scmp.ne.s32.totalorder %s173, %s176
      %p182 = scmp.eq.s32.totalorder %s13, 0
      %p183 = por %p181, %p182
      %p184 = scmp.ne.s32.totalorder %s173, %s176
      %p185 = scmp.eq.s32.totalorder %s18, 3
      %p186 = por %p184, %p185
      %p187 = scmp.ne.s32.totalorder %s176, %s177
      %p188 = scmp.eq.s32.totalorder %s18, 0
      %p189 = por %p187, %p188
      %p190 = scmp.ne.s32.totalorder %s176, %s177
      %p191 = scmp.eq.s32.totalorder %s19, 3
      %p192 = por %p190, %p191
      %p194 = scmp.ne.s32.totalorder %s177, %s193
      %p195 = scmp.eq.s32.totalorder %s19, 0
      %p196 = por %p194, %p195
      %s197 = ssub.s32 %s20, %s32
      %s198 = ssub.s32 %s21, %s28
      %s199 = sor.u32 %s197, %s198
      %p200 = scmp.eq.s32.totalorder %s199, 0
      %s202 = sadd.s32 %s201, 1
      %s203 = scalar_select %p200, %s201, %s202
      %p206 = pneg %p200
      %p207 = scmp.eq.s32.totalorder %s13, 3
      %p208 = por %p206, %p207
      %p209 = scmp.ne.s32.totalorder %s201, %s204
      %p210 = scmp.eq.s32.totalorder %s13, 0
      %p211 = por %p209, %p210
      %p212 = scmp.ne.s32.totalorder %s201, %s204
      %p213 = scmp.eq.s32.totalorder %s18, 3
      %p214 = por %p212, %p213
      %p215 = scmp.ne.s32.totalorder %s204, %s205
      %p216 = scmp.eq.s32.totalorder %s18, 0
      %p217 = por %p215, %p216
      %p218 = scmp.ne.s32.totalorder %s204, %s205
      %p219 = scmp.eq.s32.totalorder %s19, 3
      %p220 = por %p218, %p219
      %p222 = scmp.ne.s32.totalorder %s205, %s221
      %p223 = scmp.eq.s32.totalorder %s19, 0
      %p224 = por %p222, %p223
      %p225 = scmp.le.s32.totalorder 1, %s13
      %p226 = scmp.lt.s32.totalorder %s13, 5
      %p227 = pnand %p225, %p226
      %p228 = pneg %p227
      // Predicated region
      $region9: #{spatial_emb_loss_forward.3} parent=5 // pred_check
        _
      $region10: #{spatial_emb_loss_forward.3} parent=5 // pred_check_branch
        %230 = sbr.rel (%p227) target = $region12
      $region11: #{spatial_emb_loss_forward.3} parent=5 // pred_region
        %s231 = ssub.s32 %s13, 1
      $region12: #{spatial_emb_loss_forward.3} parent=5 // pred_fallthru
        _
      %p232 = scmp.lt.s32.totalorder %s13, 4
      // Predicated region
      $region13: #{spatial_emb_loss_forward.3} parent=5 // pred_check
        %p233 = pneg %p232
      $region14: #{spatial_emb_loss_forward.3} parent=5 // pred_check_branch
        %235 = sbr.rel (%p233) target = $region16
      $region15: #{spatial_emb_loss_forward.3} parent=5 // pred_region
        // Predicated region
        $region17: #{spatial_emb_loss_forward.3} parent=15 // pred_check
          %p236 = pneg %p45
        $region18: #{spatial_emb_loss_forward.3} parent=15 // pred_check_branch
          %238 = sbr.rel (%p236) target = $region20
        $region19: #{spatial_emb_loss_forward.3} parent=15 // pred_region
          %p239 = scmp.lt.s32.totalorder %s20, 1
          %s240 = scalar_select %p239, %s20, 1
          %s241 = smul.addr %s240, 8
          %s242 = scalar_lea.vmem %s0, %s241
        $region20: #{spatial_emb_loss_forward.3} parent=15 // pred_fallthru
          _
        // Predicated region
        $region21: #{spatial_emb_loss_forward.3} parent=15 // pred_check
          %p243 = pneg %p71
        $region22: #{spatial_emb_loss_forward.3} parent=15 // pred_check_branch
          %245 = sbr.rel (%p243) target = $region24
        $region23: #{spatial_emb_loss_forward.3} parent=15 // pred_region
          %p246 = scmp.lt.s32.totalorder %s20, 1
          %s247 = scalar_select %p246, %s20, 1
          %s248 = smul.addr %s247, 8
          %s249 = scalar_lea.vmem %s1, %s248
        $region24: #{spatial_emb_loss_forward.3} parent=15 // pred_fallthru
          _
        // Predicated region
        $region25: #{spatial_emb_loss_forward.3} parent=15 // pred_check
          %p250 = pneg %p99
        $region26: #{spatial_emb_loss_forward.3} parent=15 // pred_check_branch
          %252 = sbr.rel (%p250) target = $region28
        $region27: #{spatial_emb_loss_forward.3} parent=15 // pred_region
          %s253 = smul.u32 8, %s21
          %s254 = ssub.s32 12, %s253
          %p255 = scmp.lt.s32.totalorder %s254, 8
          %s256 = scalar_select %p255, %s254, 8
          %s257 = smul.u32 8, %s256
          %p258 = scmp.lt.s32.totalorder %s20, 1
          %s259 = scalar_select %p258, %s20, 1
          %p260 = scmp.lt.s32.totalorder %s253, 11
          %s261 = scalar_select %p260, %s253, 11
          %s262 = smul.addr %s259, 12
          %s263 = sadd.s32 %s261, %s262
          %s264 = smul.addr %s263, 8
          %s265 = scalar_lea.vmem %s2, %s264
          %s266 = smul.u32 8, %s21
          %s267 = ssub.s32 12, %s266
          %p268 = scmp.lt.s32.totalorder %s267, 8
          %s269 = scalar_select %p268, %s267, 8
          %s270 = smul.u32 8, %s269
        $region28: #{spatial_emb_loss_forward.3} parent=15 // pred_fallthru
          _
        // Predicated region
        $region29: #{spatial_emb_loss_forward.3} parent=15 // pred_check
          %p271 = pneg %p127
        $region30: #{spatial_emb_loss_forward.3} parent=15 // pred_check_branch
          %273 = sbr.rel (%p271) target = $region32
        $region31: #{spatial_emb_loss_forward.3} parent=15 // pred_region
          %s274 = smul.u32 8, %s21
          %s275 = ssub.s32 12, %s274
          %p276 = scmp.lt.s32.totalorder %s275, 8
          %s277 = scalar_select %p276, %s275, 8
          %p278 = scmp.lt.s32.totalorder %s20, 1
          %s279 = scalar_select %p278, %s20, 1
          %p280 = scmp.lt.s32.totalorder %s274, 11
          %s281 = scalar_select %p280, %s274, 11
          %s282 = smul.addr %s279, 12
          %s283 = sadd.s32 %s281, %s282
          %s284 = scalar_lea.vmem %s3, %s283
          %s285 = smul.u32 8, %s21
          %s286 = ssub.s32 12, %s285
          %p287 = scmp.lt.s32.totalorder %s286, 8
          %s288 = scalar_select %p287, %s286, 8
        $region32: #{spatial_emb_loss_forward.3} parent=15 // pred_fallthru
          _
        // Predicated region
        $region33: #{spatial_emb_loss_forward.3} parent=15 // pred_check
          %p289 = pneg %p155
        $region34: #{spatial_emb_loss_forward.3} parent=15 // pred_check_branch
          %291 = sbr.rel (%p289) target = $region36
        $region35: #{spatial_emb_loss_forward.3} parent=15 // pred_region
          %s292 = smul.u32 8, %s21
          %s293 = ssub.s32 12, %s292
          %p294 = scmp.lt.s32.totalorder %s293, 8
          %s295 = scalar_select %p294, %s293, 8
          %p296 = scmp.lt.s32.totalorder %s20, 1
          %s297 = scalar_select %p296, %s20, 1
          %p298 = scmp.lt.s32.totalorder %s292, 11
          %s299 = scalar_select %p298, %s292, 11
          %s300 = smul.addr %s297, 12
          %s301 = sadd.s32 %s299, %s300
          %s302 = scalar_lea.vmem %s4, %s301
          %s303 = smul.u32 8, %s21
          %s304 = ssub.s32 12, %s303
          %p305 = scmp.lt.s32.totalorder %s304, 8
          %s306 = scalar_select %p305, %s304, 8
        $region36: #{spatial_emb_loss_forward.3} parent=15 // pred_fallthru
          _
      $region16: #{spatial_emb_loss_forward.3} parent=5 // pred_fallthru
        _
      %p307 = scmp.le.s32.totalorder 1, %s13
      %p308 = scmp.lt.s32.totalorder %s13, 5
      %p309 = pnand %p307, %p308
      %p310 = pneg %p309
      // Predicated region
      $region37: #{spatial_emb_loss_forward.3} parent=5 // pred_check
        _
      $region38: #{spatial_emb_loss_forward.3} parent=5 // pred_check_branch
        %312 = sbr.rel (%p309) target = $region40
      $region39: #{spatial_emb_loss_forward.3} parent=5 // pred_region
        %s313 = ssub.s32 %s13, 1
        %p314 = scmp.lt.s32.totalorder %s22, 1
        %s315 = scalar_select %p314, %s22, 1
        %s316 = smul.addr %s315, 8
        %s317 = scalar_lea.vmem %s0, %s316
        %p318 = pneg %p51
        %p319 = pneg %p48
        %p320 = scmp.lt.s32.totalorder %s22, 1
        %s321 = scalar_select %p320, %s22, 1
        %s322 = smul.addr %s321, 8
        %s323 = scalar_lea.vmem %s1, %s322
        %p324 = pneg %p77
        %p325 = pneg %p74
        %s326 = smul.u32 8, %s23
        %s327 = ssub.s32 12, %s326
        %p328 = scmp.lt.s32.totalorder %s327, 8
        %s329 = scalar_select %p328, %s327, 8
        %s330 = smul.u32 8, %s329
        %p331 = scmp.lt.s32.totalorder %s22, 1
        %s332 = scalar_select %p331, %s22, 1
        %p333 = scmp.lt.s32.totalorder %s326, 11
        %s334 = scalar_select %p333, %s326, 11
        %s335 = smul.addr %s332, 12
        %s336 = sadd.s32 %s334, %s335
        %s337 = smul.addr %s336, 8
        %s338 = scalar_lea.vmem %s2, %s337
        %p339 = pneg %p105
        %p340 = pneg %p102
        %s341 = smul.u32 8, %s23
        %s342 = ssub.s32 12, %s341
        %p343 = scmp.lt.s32.totalorder %s342, 8
        %s344 = scalar_select %p343, %s342, 8
        %p345 = scmp.lt.s32.totalorder %s22, 1
        %s346 = scalar_select %p345, %s22, 1
        %p347 = scmp.lt.s32.totalorder %s341, 11
        %s348 = scalar_select %p347, %s341, 11
        %s349 = smul.addr %s346, 12
        %s350 = sadd.s32 %s348, %s349
        %s351 = scalar_lea.vmem %s3, %s350
        %p352 = pneg %p133
        %p353 = pneg %p130
        %s354 = smul.u32 8, %s23
        %s355 = ssub.s32 12, %s354
        %p356 = scmp.lt.s32.totalorder %s355, 8
        %s357 = scalar_select %p356, %s355, 8
        %p358 = scmp.lt.s32.totalorder %s22, 1
        %s359 = scalar_select %p358, %s22, 1
        %p360 = scmp.lt.s32.totalorder %s354, 11
        %s361 = scalar_select %p360, %s354, 11
        %s362 = smul.addr %s359, 12
        %s363 = sadd.s32 %s361, %s362
        %s364 = scalar_lea.vmem %s4, %s363
        %p365 = pneg %p161
        %p366 = pneg %p158
        %p367 = pneg %p189
        %p368 = pneg %p186
        %s369 = sand.u32 %s176, 1
        %s370 = sand.u32 %s176, 1
        %s371 = smul.addr %s370, 32
        %s372 = scalar_lea.vmem [#allocation2], %s371
        %p373 = pneg %p217
        %p374 = pneg %p214
        %p375 = scmp.lt.s32.totalorder %s22, 1
        %s376 = scalar_select %p375, %s22, 1
        %p377 = scmp.lt.s32.totalorder %s23, 1
        %s378 = scalar_select %p377, %s23, 1
        %s379 = smul.addr %s376, 2
        %s380 = sadd.s32 %s378, %s379
        %s381 = scalar_lea.vmem %s6, %s380
        %p382 = scmp.lt.s32.totalorder %s22, 1
        %s383 = scalar_select %p382, %s22, 1
        %s384 = smul.addr %s383, 8
        %s385 = scalar_lea.vmem %s0, %s384
        %p386 = scmp.lt.s32.totalorder %s22, 1
        %s387 = scalar_select %p386, %s22, 1
        %s388 = smul.addr %s387, 8
        %s389 = scalar_lea.vmem %s1, %s388
        %s390 = smul.u32 8, %s23
        %s391 = ssub.s32 12, %s390
        %p392 = scmp.lt.s32.totalorder %s391, 8
        %s393 = scalar_select %p392, %s391, 8
        %s394 = smul.u32 8, %s393
        %p395 = scmp.lt.s32.totalorder %s22, 1
        %s396 = scalar_select %p395, %s22, 1
        %p397 = scmp.lt.s32.totalorder %s390, 11
        %s398 = scalar_select %p397, %s390, 11
        %s399 = smul.addr %s396, 12
        %s400 = sadd.s32 %s398, %s399
        %s401 = smul.addr %s400, 8
        %s402 = scalar_lea.vmem %s2, %s401
        %s403 = smul.u32 8, %s23
        %s404 = ssub.s32 12, %s403
        %p405 = scmp.lt.s32.totalorder %s404, 8
        %s406 = scalar_select %p405, %s404, 8
        %s407 = smul.u32 8, %s406
        %s408 = smul.u32 8, %s23
        %s409 = ssub.s32 12, %s408
        %p410 = scmp.lt.s32.totalorder %s409, 8
        %s411 = scalar_select %p410, %s409, 8
        %p412 = scmp.lt.s32.totalorder %s22, 1
        %s413 = scalar_select %p412, %s22, 1
        %p414 = scmp.lt.s32.totalorder %s408, 11
        %s415 = scalar_select %p414, %s408, 11
        %s416 = smul.addr %s413, 12
        %s417 = sadd.s32 %s415, %s416
        %s418 = scalar_lea.vmem %s3, %s417
        %s419 = smul.u32 8, %s23
        %s420 = ssub.s32 12, %s419
        %p421 = scmp.lt.s32.totalorder %s420, 8
        %s422 = scalar_select %p421, %s420, 8
        %s423 = smul.u32 8, %s23
        %s424 = ssub.s32 12, %s423
        %p425 = scmp.lt.s32.totalorder %s424, 8
        %s426 = scalar_select %p425, %s424, 8
        %p427 = scmp.lt.s32.totalorder %s22, 1
        %s428 = scalar_select %p427, %s22, 1
        %p429 = scmp.lt.s32.totalorder %s423, 11
        %s430 = scalar_select %p429, %s423, 11
        %s431 = smul.addr %s428, 12
        %s432 = sadd.s32 %s430, %s431
        %s433 = scalar_lea.vmem %s4, %s432
        %s434 = smul.u32 8, %s23
        %s435 = ssub.s32 12, %s434
        %p436 = scmp.lt.s32.totalorder %s435, 8
        %s437 = scalar_select %p436, %s435, 8
        %s438 = smul.u32 8, %s23
        %s439 = ssub.s32 12, %s438
        %p440 = scmp.lt.s32.totalorder %s439, 8
        %s441 = scalar_select %p440, %s439, 8
        %s442 = smul.u32 4, %s441
        %p443 = scmp.lt.s32.totalorder %s22, 1
        %s444 = scalar_select %p443, %s22, 1
        %p445 = scmp.lt.s32.totalorder %s23, 1
        %s446 = scalar_select %p445, %s23, 1
        %s447 = smul.addr %s444, 2
        %s448 = sadd.s32 %s446, %s447
        %s449 = scalar_lea.vmem %s6, %s448
        %s450 = smul.u32 %s23, 1024
        %v451 = vlaneseq
        %v452 = vand.u32 %v451, 127
        %v453 = vadd.s32 %v452, 128
        %v454 = vadd.s32 %v452, 256
        %v455 = vadd.s32 %v452, 384
        %v456 = vadd.s32 %v452, 512
        %v457 = vadd.s32 %v452, 640
        %v458 = vadd.s32 %v452, 768
        %v459 = vadd.s32 %v452, 896
        %v460 = vstv %s450
        %v461 = vadd.s32 %v460, %v452
        %v462 = vadd.s32 %v460, %v453
        %v463 = vadd.s32 %v460, %v454
        %v464 = vadd.s32 %v460, %v455
        %v465 = vadd.s32 %v460, %v456
        %v466 = vadd.s32 %v460, %v457
        %v467 = vadd.s32 %v460, %v458
        %v468 = vadd.s32 %v460, %v459
        %vm469 = vcmp.lt.s32.totalorder %v461, 1536
        %vm470 = vcmp.lt.s32.totalorder %v462, 1536
        %vm471 = vcmp.lt.s32.totalorder %v463, 1536
        %vm472 = vcmp.lt.s32.totalorder %v464, 1536
        %vm473 = vcmp.lt.s32.totalorder %v465, 1536
        %vm474 = vcmp.lt.s32.totalorder %v466, 1536
        %vm475 = vcmp.lt.s32.totalorder %v467, 1536
        %vm476 = vcmp.lt.s32.totalorder %v468, 1536
        %v477 = vshra.s32 %v461, 8
        %v478 = vshra.s32 %v462, 8
        %v479 = vshra.s32 %v463, 8
        %v480 = vshra.s32 %v464, 8
        %v481 = vshra.s32 %v465, 8
        %v482 = vshra.s32 %v466, 8
        %v483 = vshra.s32 %v467, 8
        %v484 = vshra.s32 %v468, 8
        %v485 = vand.u32 %v461, 255
        %v486 = vand.u32 %v462, 255
        %v487 = vand.u32 %v463, 255
        %v488 = vand.u32 %v464, 255
        %v489 = vand.u32 %v465, 255
        %v490 = vand.u32 %v466, 255
        %v491 = vand.u32 %v467, 255
        %v492 = vand.u32 %v468, 255
        %v493 = vshra.s32 %v485, 4
        %v494 = vshra.s32 %v486, 4
        %v495 = vshra.s32 %v487, 4
        %v496 = vshra.s32 %v488, 4
        %v497 = vshra.s32 %v489, 4
        %v498 = vshra.s32 %v490, 4
        %v499 = vshra.s32 %v491, 4
        %v500 = vshra.s32 %v492, 4
        %v501 = vand.u32 %v485, 15
        %v502 = vand.u32 %v486, 15
        %v503 = vand.u32 %v487, 15
        %v504 = vand.u32 %v488, 15
        %v505 = vand.u32 %v489, 15
        %v506 = vand.u32 %v490, 15
        %v507 = vand.u32 %v491, 15
        %v508 = vand.u32 %v492, 15
        %v509 = vlaneseq
        %v510 = vshrl.u32 %v509, 7
        %vm511 = vcmp.eq.s32.totalorder %v510, 0
        %vm512 = vcmp.eq.s32.totalorder %v510, 1
        %v513 = vsel %vm512, %v493, %v477
        %v514 = vsel %vm512, %v494, %v478
        %v515 = vsel %vm512, %v495, %v479
        %v516 = vsel %vm512, %v496, %v480
        %v517 = vsel %vm512, %v497, %v481
        %v518 = vsel %vm512, %v498, %v482
        %v519 = vsel %vm512, %v499, %v483
        %v520 = vsel %vm512, %v500, %v484
        %v521 = vsel %vm511, %v501, %v513
        %v522 = vsel %vm511, %v502, %v514
        %v523 = vsel %vm511, %v503, %v515
        %v524 = vsel %vm511, %v504, %v516
        %v525 = vsel %vm511, %v505, %v517
        %v526 = vsel %vm511, %v506, %v518
        %v527 = vsel %vm511, %v507, %v519
        %v528 = vsel %vm511, %v508, %v520
        %v529 = vcvt.s32.f32 %v521
        %v530 = vcvt.s32.f32 %v522
        %v531 = vcvt.s32.f32 %v523
        %v532 = vcvt.s32.f32 %v524
        %v533 = vcvt.s32.f32 %v525
        %v534 = vcvt.s32.f32 %v526
        %v535 = vcvt.s32.f32 %v527
        %v536 = vcvt.s32.f32 %v528
        %v537 = vsel %vm512, 0.0009775171, 0.032258064
        %v538 = vsel %vm511, 0.0009775171, %v537
        %v539 = vmul.f32 %v529, %v538
        %v540 = vmul.f32 %v530, %v538
        %v541 = vmul.f32 %v531, %v538
        %v542 = vmul.f32 %v532, %v538
        %v543 = vmul.f32 %v533, %v538
        %v544 = vmul.f32 %v534, %v538
        %v545 = vmul.f32 %v535, %v538
        %v546 = vmul.f32 %v536, %v538
        %v547 = vld [vmem:[%s385] sm:$0xff]
        %v548 = vld [vmem:[%s389] sm:$0xff]
        %v549 = vld [vmem:[%s418] sm:$0xff]
        %v550 = vld [vmem:[%s433] sm:$0xff]
        %v551 = vld [vmem:[%s402] sm:$0x7]
        %v552 = vld [vmem:[%s402 + $0x8] sm:$0x7]
        %v553 = vld [vmem:[%s402 + $0x10] sm:$0x7]
        %v554 = vld [vmem:[%s402 + $0x18] sm:$0x7]
        %v555 = vld [vmem:[%s402 + $0x20] sm:$0x7]
        %v556 = vld [vmem:[%s402 + $0x28] sm:$0x7]
        %v557 = vld [vmem:[%s402 + $0x30] sm:$0x7]
        %v558 = vld [vmem:[%s402 + $0x38] sm:$0x7]
        %v559 = vtanh.pop %v551
        %v560 = vtanh.pop %v552
        %v561 = vtanh.pop %v553
        %v562 = vtanh.pop %v554
        %v563 = vtanh.pop %v555
        %v564 = vtanh.pop %v556
        %v565 = vtanh.pop %v557
        %v566 = vtanh.pop %v558
        %v567 = vadd.f32 %v559, %v539
        %v568 = vadd.f32 %v560, %v540
        %v569 = vadd.f32 %v561, %v541
        %v570 = vadd.f32 %v562, %v542
        %v571 = vadd.f32 %v563, %v543
        %v572 = vadd.f32 %v564, %v544
        %v573 = vadd.f32 %v565, %v545
        %v574 = vadd.f32 %v566, %v546
        %s575 = scalar_lea.vmem %s402, 6
        %v576 = vld [vmem:[%s575] ss:$8 sm:$0xf]
        %v577 = vld [vmem:[%s575] ss:$8 sm:$0xf0]
        %v578 = vor.u32 %v576, %v577
        %v579 = vxor.u32 %v578, 2147483648
        %v580 = vmul.f32 %v579, 1.442695
        %v581 = vpow.pop %v580
        %v582 = vadd.f32 %v581, 1.0
        %v583 = vrcp.pop %v582
        %v584 = vmul.f32 %v582, %v583
        %v585 = vsub.f32 1.0, %v584
        %v586 = vmul.f32 %v583, %v585
        %v587 = vadd.f32 %v583, %v586
        %vm588 = vweird.f32 %v582
        %vm589 = vweird.f32 %v583
        %vm590 = vmor %vm588, %vm589
        %v591 = vsel %vm590, %v583, %v587
        %v592 = vand.u32 2147483647, %v582
        %vm593 = vcmp.eq.f32.partialorder %v592, 8.507059e+37
        %v594 = vand.u32 %v582, 2147483648
        %v595 = vor.u32 1.1754944e-38, %v594
        %v596 = vsel %vm593, %v595, %v591
        %v597 = vmul.f32 1.0, %v596
        %v598 = vmul.f32 %v567, %v567
        %v599 = vmul.f32 %v568, %v568
        %v600 = vmul.f32 %v569, %v569
        %v601 = vmul.f32 %v570, %v570
        %v602 = vmul.f32 %v571, %v571
        %v603 = vmul.f32 %v572, %v572
        %v604 = vmul.f32 %v573, %v573
        %v605 = vmul.f32 %v574, %v574
        %607 = vrot.lane.b32.xlu0 %v548, 125
        %v608 = vpop.permute.xlu0 %607
        %vm609 = vcmask 23552
        %v610 = vsel %vm609, %v608, 0
        %vm612 = vcmask 1042432
        %v614 = vsel %vm612, %v567, 0
        %v617 = vsel %vm612, %v568, 0
        %v620 = vsel %vm612, %v569, 0
        %v623 = vsel %vm612, %v570, 0
        %v626 = vsel %vm612, %v571, 0
        %v629 = vsel %vm612, %v572, 0
        %v632 = vsel %vm612, %v573, 0
        %v635 = vsel %vm612, %v574, 0
        %637 = vmatpush.msra.mxu0 0.0
        %638 = vmatpush.msra.mxu0 0.0
        %639 = vmatpush.msra.mxu0 0.0
        %640 = vmatpush.msra.mxu0 0.0
        %641 = vmatpush.msra.mxu0 0.0
        %642 = vmatpush.msra.mxu0 0.0
        %643 = vmatpush.msra.mxu0 0.0
        %644 = vmatpush.msra.mxu0 0.0
        %645 = vmatpush.msra.mxu0 0.0
        %646 = vmatpush.msra.mxu0 0.0
        %647 = vmatpush.msra.mxu0 0.0
        %648 = vmatpush.msra.mxu0 0.0
        %649 = vmatpush.msra.mxu0 0.0
        %650 = vmatpush.msra.mxu0 0.0
        %651 = vmatpush.msra.mxu0 0.0
        %652 = vmatpush.msra.mxu0 %v614
        %653 = vmatmul.f32.gmra.mxu0 %v610
        %v654 = vpop.f32.mrf.mxu0
        %v655 = vadd.f32 0.0, %v654
        %656 = vdwg.mxu0
        %657 = vmatpush.msra.mxu0 0.0
        %658 = vmatpush.msra.mxu0 0.0
        %659 = vmatpush.msra.mxu0 0.0
        %660 = vmatpush.msra.mxu0 0.0
        %661 = vmatpush.msra.mxu0 0.0
        %662 = vmatpush.msra.mxu0 0.0
        %663 = vmatpush.msra.mxu0 0.0
        %664 = vmatpush.msra.mxu0 0.0
        %665 = vmatpush.msra.mxu0 0.0
        %666 = vmatpush.msra.mxu0 0.0
        %667 = vmatpush.msra.mxu0 0.0
        %668 = vmatpush.msra.mxu0 0.0
        %669 = vmatpush.msra.mxu0 0.0
        %670 = vmatpush.msra.mxu0 0.0
        %671 = vmatpush.msra.mxu0 0.0
        %672 = vmatpush.msra.mxu0 %v617
        %673 = vmatmul.f32.gmra.mxu0 %v610
        %v674 = vpop.f32.mrf.mxu0
        %v675 = vadd.f32 0.0, %v674
        %676 = vdwg.mxu0
        %677 = vmatpush.msra.mxu0 0.0
        %678 = vmatpush.msra.mxu0 0.0
        %679 = vmatpush.msra.mxu0 0.0
        %680 = vmatpush.msra.mxu0 0.0
        %681 = vmatpush.msra.mxu0 0.0
        %682 = vmatpush.msra.mxu0 0.0
        %683 = vmatpush.msra.mxu0 0.0
        %684 = vmatpush.msra.mxu0 0.0
        %685 = vmatpush.msra.mxu0 0.0
        %686 = vmatpush.msra.mxu0 0.0
        %687 = vmatpush.msra.mxu0 0.0
        %688 = vmatpush.msra.mxu0 0.0
        %689 = vmatpush.msra.mxu0 0.0
        %690 = vmatpush.msra.mxu0 0.0
        %691 = vmatpush.msra.mxu0 0.0
        %692 = vmatpush.msra.mxu0 %v620
        %693 = vmatmul.f32.gmra.mxu0 %v610
        %v694 = vpop.f32.mrf.mxu0
        %v695 = vadd.f32 0.0, %v694
        %696 = vdwg.mxu0
        %697 = vmatpush.msra.mxu0 0.0
        %698 = vmatpush.msra.mxu0 0.0
        %699 = vmatpush.msra.mxu0 0.0
        %700 = vmatpush.msra.mxu0 0.0
        %701 = vmatpush.msra.mxu0 0.0
        %702 = vmatpush.msra.mxu0 0.0
        %703 = vmatpush.msra.mxu0 0.0
        %704 = vmatpush.msra.mxu0 0.0
        %705 = vmatpush.msra.mxu0 0.0
        %706 = vmatpush.msra.mxu0 0.0
        %707 = vmatpush.msra.mxu0 0.0
        %708 = vmatpush.msra.mxu0 0.0
        %709 = vmatpush.msra.mxu0 0.0
        %710 = vmatpush.msra.mxu0 0.0
        %711 = vmatpush.msra.mxu0 0.0
        %712 = vmatpush.msra.mxu0 %v623
        %713 = vmatmul.f32.gmra.mxu0 %v610
        %v714 = vpop.f32.mrf.mxu0
        %v715 = vadd.f32 0.0, %v714
        %716 = vdwg.mxu0
        %717 = vmatpush.msra.mxu0 0.0
        %718 = vmatpush.msra.mxu0 0.0
        %719 = vmatpush.msra.mxu0 0.0
        %720 = vmatpush.msra.mxu0 0.0
        %721 = vmatpush.msra.mxu0 0.0
        %722 = vmatpush.msra.mxu0 0.0
        %723 = vmatpush.msra.mxu0 0.0
        %724 = vmatpush.msra.mxu0 0.0
        %725 = vmatpush.msra.mxu0 0.0
        %726 = vmatpush.msra.mxu0 0.0
        %727 = vmatpush.msra.mxu0 0.0
        %728 = vmatpush.msra.mxu0 0.0
        %729 = vmatpush.msra.mxu0 0.0
        %730 = vmatpush.msra.mxu0 0.0
        %731 = vmatpush.msra.mxu0 0.0
        %732 = vmatpush.msra.mxu0 %v626
        %733 = vmatmul.f32.gmra.mxu0 %v610
        %v734 = vpop.f32.mrf.mxu0
        %v735 = vadd.f32 0.0, %v734
        %736 = vdwg.mxu0
        %737 = vmatpush.msra.mxu0 0.0
        %738 = vmatpush.msra.mxu0 0.0
        %739 = vmatpush.msra.mxu0 0.0
        %740 = vmatpush.msra.mxu0 0.0
        %741 = vmatpush.msra.mxu0 0.0
        %742 = vmatpush.msra.mxu0 0.0
        %743 = vmatpush.msra.mxu0 0.0
        %744 = vmatpush.msra.mxu0 0.0
        %745 = vmatpush.msra.mxu0 0.0
        %746 = vmatpush.msra.mxu0 0.0
        %747 = vmatpush.msra.mxu0 0.0
        %748 = vmatpush.msra.mxu0 0.0
        %749 = vmatpush.msra.mxu0 0.0
        %750 = vmatpush.msra.mxu0 0.0
        %751 = vmatpush.msra.mxu0 0.0
        %752 = vmatpush.msra.mxu0 %v629
        %753 = vmatmul.f32.gmra.mxu0 %v610
        %v754 = vpop.f32.mrf.mxu0
        %v755 = vadd.f32 0.0, %v754
        %756 = vdwg.mxu0
        %757 = vmatpush.msra.mxu0 0.0
        %758 = vmatpush.msra.mxu0 0.0
        %759 = vmatpush.msra.mxu0 0.0
        %760 = vmatpush.msra.mxu0 0.0
        %761 = vmatpush.msra.mxu0 0.0
        %762 = vmatpush.msra.mxu0 0.0
        %763 = vmatpush.msra.mxu0 0.0
        %764 = vmatpush.msra.mxu0 0.0
        %765 = vmatpush.msra.mxu0 0.0
        %766 = vmatpush.msra.mxu0 0.0
        %767 = vmatpush.msra.mxu0 0.0
        %768 = vmatpush.msra.mxu0 0.0
        %769 = vmatpush.msra.mxu0 0.0
        %770 = vmatpush.msra.mxu0 0.0
        %771 = vmatpush.msra.mxu0 0.0
        %772 = vmatpush.msra.mxu0 %v632
        %773 = vmatmul.f32.gmra.mxu0 %v610
        %v774 = vpop.f32.mrf.mxu0
        %v775 = vadd.f32 0.0, %v774
        %776 = vdwg.mxu0
        %777 = vmatpush.msra.mxu0 0.0
        %778 = vmatpush.msra.mxu0 0.0
        %779 = vmatpush.msra.mxu0 0.0
        %780 = vmatpush.msra.mxu0 0.0
        %781 = vmatpush.msra.mxu0 0.0
        %782 = vmatpush.msra.mxu0 0.0
        %783 = vmatpush.msra.mxu0 0.0
        %784 = vmatpush.msra.mxu0 0.0
        %785 = vmatpush.msra.mxu0 0.0
        %786 = vmatpush.msra.mxu0 0.0
        %787 = vmatpush.msra.mxu0 0.0
        %788 = vmatpush.msra.mxu0 0.0
        %789 = vmatpush.msra.mxu0 0.0
        %790 = vmatpush.msra.mxu0 0.0
        %791 = vmatpush.msra.mxu0 0.0
        %792 = vmatpush.msra.mxu0 %v635
        %793 = vmatmul.f32.gmra.mxu0 %v610
        %v794 = vpop.f32.mrf.mxu0
        %v795 = vadd.f32 0.0, %v794
        %796 = vdwg.mxu0
        %v797 = vsel %vm609, %v548, 0
        %v800 = vsel %vm612, %v598, 0
        %v803 = vsel %vm612, %v599, 0
        %v806 = vsel %vm612, %v600, 0
        %v809 = vsel %vm612, %v601, 0
        %v812 = vsel %vm612, %v602, 0
        %v815 = vsel %vm612, %v603, 0
        %v818 = vsel %vm612, %v604, 0
        %v821 = vsel %vm612, %v605, 0
        %823 = vmatpush.msra.mxu0 0.0
        %824 = vmatpush.msra.mxu0 0.0
        %825 = vmatpush.msra.mxu0 0.0
        %826 = vmatpush.msra.mxu0 0.0
        %827 = vmatpush.msra.mxu0 0.0
        %828 = vmatpush.msra.mxu0 0.0
        %829 = vmatpush.msra.mxu0 0.0
        %830 = vmatpush.msra.mxu0 0.0
        %831 = vmatpush.msra.mxu0 0.0
        %832 = vmatpush.msra.mxu0 0.0
        %833 = vmatpush.msra.mxu0 0.0
        %834 = vmatpush.msra.mxu0 0.0
        %835 = vmatpush.msra.mxu0 0.0
        %836 = vmatpush.msra.mxu0 0.0
        %837 = vmatpush.msra.mxu0 0.0
        %838 = vmatpush.msra.mxu0 %v800
        %839 = vmatmul.f32.gmra.mxu0 %v797
        %v840 = vpop.f32.mrf.mxu0
        %v841 = vadd.f32 %v655, %v840
        %842 = vdwg.mxu0
        %843 = vmatpush.msra.mxu0 0.0
        %844 = vmatpush.msra.mxu0 0.0
        %845 = vmatpush.msra.mxu0 0.0
        %846 = vmatpush.msra.mxu0 0.0
        %847 = vmatpush.msra.mxu0 0.0
        %848 = vmatpush.msra.mxu0 0.0
        %849 = vmatpush.msra.mxu0 0.0
        %850 = vmatpush.msra.mxu0 0.0
        %851 = vmatpush.msra.mxu0 0.0
        %852 = vmatpush.msra.mxu0 0.0
        %853 = vmatpush.msra.mxu0 0.0
        %854 = vmatpush.msra.mxu0 0.0
        %855 = vmatpush.msra.mxu0 0.0
        %856 = vmatpush.msra.mxu0 0.0
        %857 = vmatpush.msra.mxu0 0.0
        %858 = vmatpush.msra.mxu0 %v803
        %859 = vmatmul.f32.gmra.mxu0 %v797
        %v860 = vpop.f32.mrf.mxu0
        %v861 = vadd.f32 %v675, %v860
        %862 = vdwg.mxu0
        %863 = vmatpush.msra.mxu0 0.0
        %864 = vmatpush.msra.mxu0 0.0
        %865 = vmatpush.msra.mxu0 0.0
        %866 = vmatpush.msra.mxu0 0.0
        %867 = vmatpush.msra.mxu0 0.0
        %868 = vmatpush.msra.mxu0 0.0
        %869 = vmatpush.msra.mxu0 0.0
        %870 = vmatpush.msra.mxu0 0.0
        %871 = vmatpush.msra.mxu0 0.0
        %872 = vmatpush.msra.mxu0 0.0
        %873 = vmatpush.msra.mxu0 0.0
        %874 = vmatpush.msra.mxu0 0.0
        %875 = vmatpush.msra.mxu0 0.0
        %876 = vmatpush.msra.mxu0 0.0
        %877 = vmatpush.msra.mxu0 0.0
        %878 = vmatpush.msra.mxu0 %v806
        %879 = vmatmul.f32.gmra.mxu0 %v797
        %v880 = vpop.f32.mrf.mxu0
        %v881 = vadd.f32 %v695, %v880
        %882 = vdwg.mxu0
        %883 = vmatpush.msra.mxu0 0.0
        %884 = vmatpush.msra.mxu0 0.0
        %885 = vmatpush.msra.mxu0 0.0
        %886 = vmatpush.msra.mxu0 0.0
        %887 = vmatpush.msra.mxu0 0.0
        %888 = vmatpush.msra.mxu0 0.0
        %889 = vmatpush.msra.mxu0 0.0
        %890 = vmatpush.msra.mxu0 0.0
        %891 = vmatpush.msra.mxu0 0.0
        %892 = vmatpush.msra.mxu0 0.0
        %893 = vmatpush.msra.mxu0 0.0
        %894 = vmatpush.msra.mxu0 0.0
        %895 = vmatpush.msra.mxu0 0.0
        %896 = vmatpush.msra.mxu0 0.0
        %897 = vmatpush.msra.mxu0 0.0
        %898 = vmatpush.msra.mxu0 %v809
        %899 = vmatmul.f32.gmra.mxu0 %v797
        %v900 = vpop.f32.mrf.mxu0
        %v901 = vadd.f32 %v715, %v900
        %902 = vdwg.mxu0
        %903 = vmatpush.msra.mxu0 0.0
        %904 = vmatpush.msra.mxu0 0.0
        %905 = vmatpush.msra.mxu0 0.0
        %906 = vmatpush.msra.mxu0 0.0
        %907 = vmatpush.msra.mxu0 0.0
        %908 = vmatpush.msra.mxu0 0.0
        %909 = vmatpush.msra.mxu0 0.0
        %910 = vmatpush.msra.mxu0 0.0
        %911 = vmatpush.msra.mxu0 0.0
        %912 = vmatpush.msra.mxu0 0.0
        %913 = vmatpush.msra.mxu0 0.0
        %914 = vmatpush.msra.mxu0 0.0
        %915 = vmatpush.msra.mxu0 0.0
        %916 = vmatpush.msra.mxu0 0.0
        %917 = vmatpush.msra.mxu0 0.0
        %918 = vmatpush.msra.mxu0 %v812
        %919 = vmatmul.f32.gmra.mxu0 %v797
        %v920 = vpop.f32.mrf.mxu0
        %v921 = vadd.f32 %v735, %v920
        %922 = vdwg.mxu0
        %923 = vmatpush.msra.mxu0 0.0
        %924 = vmatpush.msra.mxu0 0.0
        %925 = vmatpush.msra.mxu0 0.0
        %926 = vmatpush.msra.mxu0 0.0
        %927 = vmatpush.msra.mxu0 0.0
        %928 = vmatpush.msra.mxu0 0.0
        %929 = vmatpush.msra.mxu0 0.0
        %930 = vmatpush.msra.mxu0 0.0
        %931 = vmatpush.msra.mxu0 0.0
        %932 = vmatpush.msra.mxu0 0.0
        %933 = vmatpush.msra.mxu0 0.0
        %934 = vmatpush.msra.mxu0 0.0
        %935 = vmatpush.msra.mxu0 0.0
        %936 = vmatpush.msra.mxu0 0.0
        %937 = vmatpush.msra.mxu0 0.0
        %938 = vmatpush.msra.mxu0 %v815
        %939 = vmatmul.f32.gmra.mxu0 %v797
        %v940 = vpop.f32.mrf.mxu0
        %v941 = vadd.f32 %v755, %v940
        %942 = vdwg.mxu0
        %943 = vmatpush.msra.mxu0 0.0
        %944 = vmatpush.msra.mxu0 0.0
        %945 = vmatpush.msra.mxu0 0.0
        %946 = vmatpush.msra.mxu0 0.0
        %947 = vmatpush.msra.mxu0 0.0
        %948 = vmatpush.msra.mxu0 0.0
        %949 = vmatpush.msra.mxu0 0.0
        %950 = vmatpush.msra.mxu0 0.0
        %951 = vmatpush.msra.mxu0 0.0
        %952 = vmatpush.msra.mxu0 0.0
        %953 = vmatpush.msra.mxu0 0.0
        %954 = vmatpush.msra.mxu0 0.0
        %955 = vmatpush.msra.mxu0 0.0
        %956 = vmatpush.msra.mxu0 0.0
        %957 = vmatpush.msra.mxu0 0.0
        %958 = vmatpush.msra.mxu0 %v818
        %959 = vmatmul.f32.gmra.mxu0 %v797
        %v960 = vpop.f32.mrf.mxu0
        %v961 = vadd.f32 %v775, %v960
        %962 = vdwg.mxu0
        %963 = vmatpush.msra.mxu0 0.0
        %964 = vmatpush.msra.mxu0 0.0
        %965 = vmatpush.msra.mxu0 0.0
        %966 = vmatpush.msra.mxu0 0.0
        %967 = vmatpush.msra.mxu0 0.0
        %968 = vmatpush.msra.mxu0 0.0
        %969 = vmatpush.msra.mxu0 0.0
        %970 = vmatpush.msra.mxu0 0.0
        %971 = vmatpush.msra.mxu0 0.0
        %972 = vmatpush.msra.mxu0 0.0
        %973 = vmatpush.msra.mxu0 0.0
        %974 = vmatpush.msra.mxu0 0.0
        %975 = vmatpush.msra.mxu0 0.0
        %976 = vmatpush.msra.mxu0 0.0
        %977 = vmatpush.msra.mxu0 0.0
        %978 = vmatpush.msra.mxu0 %v821
        %979 = vmatmul.f32.gmra.mxu0 %v797
        %v980 = vpop.f32.mrf.mxu0
        %v981 = vadd.f32 %v795, %v980
        %982 = vdwg.mxu0
        %983 = vset.pattern.permute.xlu0 6
        %984 = vperm.xlu0 %983, %v548
        %v985 = vpop.permute.xlu0 %984
        %v987 = vadd.f32 %v841, %v985
        %v988 = vadd.f32 %v861, %v985
        %v989 = vadd.f32 %v881, %v985
        %v990 = vadd.f32 %v901, %v985
        %v991 = vadd.f32 %v921, %v985
        %v992 = vadd.f32 %v941, %v985
        %v993 = vadd.f32 %v961, %v985
        %v994 = vadd.f32 %v981, %v985
        %v995 = vsub.f32 0.0, %v987
        %v996 = vsub.f32 0.0, %v988
        %v997 = vsub.f32 0.0, %v989
        %v998 = vsub.f32 0.0, %v990
        %v999 = vsub.f32 0.0, %v991
        %v1000 = vsub.f32 0.0, %v992
        %v1001 = vsub.f32 0.0, %v993
        %v1002 = vsub.f32 0.0, %v994
        %v1003 = vmul.f32 %v995, 1.442695
        %v1004 = vpow.pop %v1003
        %v1005 = vmul.f32 %v996, 1.442695
        %v1006 = vpow.pop %v1005
        %v1007 = vmul.f32 %v997, 1.442695
        %v1008 = vpow.pop %v1007
        %v1009 = vmul.f32 %v998, 1.442695
        %v1010 = vpow.pop %v1009
        %v1011 = vmul.f32 %v999, 1.442695
        %v1012 = vpow.pop %v1011
        %v1013 = vmul.f32 %v1000, 1.442695
        %v1014 = vpow.pop %v1013
        %v1015 = vmul.f32 %v1001, 1.442695
        %v1016 = vpow.pop %v1015
        %v1017 = vmul.f32 %v1002, 1.442695
        %v1018 = vpow.pop %v1017
        %v1019 = vpack.c.bf16 %v1006, %v1004
        %v1020 = vpack.c.bf16 %v1010, %v1008
        %v1021 = vpack.c.bf16 %v1014, %v1012
        %v1022 = vpack.c.bf16 %v1018, %v1016
        %1023 = vst [vmem:[%s372] sm:$0xff] %v1019
        %1024 = vst [vmem:[%s372 + $0x8] sm:$0xff] %v1020
        %1025 = vst [vmem:[%s372 + $0x10] sm:$0xff] %v1021
        %1026 = vst [vmem:[%s372 + $0x18] sm:$0xff] %v1022
        %v1027 = vperm.slane %v549, 0
        %v1028 = vperm.slane %v549, 1
        %v1029 = vperm.slane %v549, 2
        %v1030 = vperm.slane %v549, 3
        %v1031 = vperm.slane %v549, 4
        %v1032 = vperm.slane %v549, 5
        %v1033 = vperm.slane %v549, 6
        %v1034 = vperm.slane %v549, 7
        %1035 = vset.pattern.permute.xlu0 0
        %1036 = vperm.xlu0 %1035, %v547
        %v1037 = vpop.permute.xlu0 %1036
        %vm1038 = vcmp.eq.s32.totalorder %v1027, %v1037
        %vm1039 = vcmp.eq.s32.totalorder %v1028, %v1037
        %vm1040 = vcmp.eq.s32.totalorder %v1029, %v1037
        %vm1041 = vcmp.eq.s32.totalorder %v1030, %v1037
        %vm1042 = vcmp.eq.s32.totalorder %v1031, %v1037
        %vm1043 = vcmp.eq.s32.totalorder %v1032, %v1037
        %vm1044 = vcmp.eq.s32.totalorder %v1033, %v1037
        %vm1045 = vcmp.eq.s32.totalorder %v1034, %v1037
        %vm1046 = vcmp.ne.s32.totalorder %v547, 0
        %v1047 = vsel %vm1046, 1, 0
        %1048 = vset.pattern.permute.xlu0 0
        %1049 = vperm.xlu0 %1048, %v1047
        %v1050 = vpop.permute.xlu0 %1049
        %vm1051 = vcmp.eq.s32.totalorder %v1050, 1
        %vm1052 = vmand %vm1038, %vm1051
        %vm1053 = vmand %vm1039, %vm1051
        %vm1054 = vmand %vm1040, %vm1051
        %vm1055 = vmand %vm1041, %vm1051
        %vm1056 = vmand %vm1042, %vm1051
        %vm1057 = vmand %vm1043, %vm1051
        %vm1058 = vmand %vm1044, %vm1051
        %vm1059 = vmand %vm1045, %vm1051
        %v1060 = vsel %vm469, 1, 0
        %v1061 = vsel %vm470, 1, 0
        %v1062 = vsel %vm471, 1, 0
        %v1063 = vsel %vm472, 1, 0
        %v1064 = vsel %vm473, 1, 0
        %v1065 = vsel %vm474, 1, 0
        %v1066 = vsel %vm475, 1, 0
        %v1067 = vsel %vm476, 1, 0
        %vm1068 = vcmp.eq.s32.totalorder %v1060, 1
        %vm1069 = vcmp.eq.s32.totalorder %v1061, 1
        %vm1070 = vcmp.eq.s32.totalorder %v1062, 1
        %vm1071 = vcmp.eq.s32.totalorder %v1063, 1
        %vm1072 = vcmp.eq.s32.totalorder %v1064, 1
        %vm1073 = vcmp.eq.s32.totalorder %v1065, 1
        %vm1074 = vcmp.eq.s32.totalorder %v1066, 1
        %vm1075 = vcmp.eq.s32.totalorder %v1067, 1
        %vm1076 = vmand %vm1052, %vm1068
        %vm1077 = vmand %vm1053, %vm1069
        %vm1078 = vmand %vm1054, %vm1070
        %vm1079 = vmand %vm1055, %vm1071
        %vm1080 = vmand %vm1056, %vm1072
        %vm1081 = vmand %vm1057, %vm1073
        %vm1082 = vmand %vm1058, %vm1074
        %vm1083 = vmand %vm1059, %vm1075
        %vm1084 = vcmp.eq.s32.totalorder %v550, 0
        %v1085 = vrot.slane %v1061, 7
        %v1086 = vrot.slane %v1062, 6
        %v1087 = vrot.slane %v1063, 5
        %v1088 = vrot.slane %v1064, 4
        %v1089 = vrot.slane %v1065, 3
        %v1090 = vrot.slane %v1066, 2
        %v1091 = vrot.slane %v1067, 1
        %vm1092 = vcmask 1040384
        %v1093 = vsel %vm1092, %v1060, %v1085
        %vm1094 = vcmask 1042434
        %v1095 = vsel %vm1094, %v1086, %v1087
        %vm1096 = vcmask 1041408
        %v1097 = vsel %vm1096, %v1093, %v1095
        %vm1098 = vcmask 1044484
        %v1099 = vsel %vm1098, %v1088, %v1089
        %vm1100 = vcmask 1046534
        %v1101 = vsel %vm1100, %v1090, %v1091
        %vm1102 = vcmask 1045508
        %v1103 = vsel %vm1102, %v1099, %v1101
        %vm1104 = vcmask 1043456
        %v1105 = vsel %vm1104, %v1097, %v1103
        %vm1106 = vcmp.ne.s32.totalorder %v1105, 0
        %vm1107 = vmand %vm1084, %vm1106
        %v1108 = vmul.f32 %v597, %v597
        %v1109 = vsel %vm1107, %v1108, 0.0
        %v1111 = vperm.slane %v597, 0
        %v1112 = vperm.slane %v597, 1
        %v1113 = vperm.slane %v597, 2
        %v1114 = vperm.slane %v597, 3
        %v1115 = vperm.slane %v597, 4
        %v1116 = vperm.slane %v597, 5
        %v1117 = vperm.slane %v597, 6
        %v1118 = vperm.slane %v597, 7
        %v1127 = vsub.f32 %v1111, %v1004
        %v1128 = vsub.f32 %v1112, %v1006
        %v1129 = vsub.f32 %v1113, %v1008
        %v1130 = vsub.f32 %v1114, %v1010
        %v1131 = vsub.f32 %v1115, %v1012
        %v1132 = vsub.f32 %v1116, %v1014
        %v1133 = vsub.f32 %v1117, %v1016
        %v1134 = vsub.f32 %v1118, %v1018
        %v1135 = vmul.f32 %v1127, %v1127
        %v1136 = vmul.f32 %v1128, %v1128
        %v1137 = vmul.f32 %v1129, %v1129
        %v1138 = vmul.f32 %v1130, %v1130
        %v1139 = vmul.f32 %v1131, %v1131
        %v1140 = vmul.f32 %v1132, %v1132
        %v1141 = vmul.f32 %v1133, %v1133
        %v1142 = vmul.f32 %v1134, %v1134
        %v1143 = vsel %vm1076, %v1135, 0.0
        %v1144 = vsel %vm1077, %v1136, 0.0
        %v1145 = vsel %vm1078, %v1137, 0.0
        %v1146 = vsel %vm1079, %v1138, 0.0
        %v1147 = vsel %vm1080, %v1139, 0.0
        %v1148 = vsel %vm1081, %v1140, 0.0
        %v1149 = vsel %vm1082, %v1141, 0.0
        %v1150 = vsel %vm1083, %v1142, 0.0
        %v1152 = vperm.slane %v1109, 0
        %v1153 = vperm.slane %v1109, 1
        %v1154 = vperm.slane %v1109, 2
        %v1155 = vperm.slane %v1109, 3
        %v1156 = vperm.slane %v1109, 4
        %v1157 = vperm.slane %v1109, 5
        %v1158 = vperm.slane %v1109, 6
        %v1159 = vperm.slane %v1109, 7
        %v1168 = vsel %vm1092, %v1152, 0.0
        %v1169 = vsel %vm1092, %v1153, 0.0
        %v1170 = vadd.f32 %v1168, %v1169
        %v1171 = vsel %vm1092, %v1154, 0.0
        %v1172 = vadd.f32 %v1170, %v1171
        %v1173 = vsel %vm1092, %v1155, 0.0
        %v1174 = vadd.f32 %v1172, %v1173
        %v1175 = vsel %vm1092, %v1156, 0.0
        %v1176 = vadd.f32 %v1174, %v1175
        %v1177 = vsel %vm1092, %v1157, 0.0
        %v1178 = vadd.f32 %v1176, %v1177
        %v1179 = vsel %vm1092, %v1158, 0.0
        %v1180 = vadd.f32 %v1178, %v1179
        %v1181 = vsel %vm1092, %v1159, 0.0
        %v1182 = vadd.f32 %v1180, %v1181
        %1183 = vadd.xlane.f32.xlu0 %v1182
        %v1184 = vpop.xlane.xlu0 %1183
        %v1185 = vadd.f32 %v1143, %v1144
        %v1186 = vadd.f32 %v1185, %v1145
        %v1187 = vadd.f32 %v1186, %v1146
        %v1188 = vadd.f32 %v1187, %v1147
        %v1189 = vadd.f32 %v1188, %v1148
        %v1190 = vadd.f32 %v1189, %v1149
        %v1191 = vadd.f32 %v1190, %v1150
        %1192 = vadd.xlane.f32.xlu0 %v1191
        %v1193 = vpop.xlane.xlu0 %1192
        %v1194 = vrot.slane %v1193, 4
        %v1195 = vadd.f32 %v1193, %v1194
        %v1196 = vrot.slane %v1195, 2
        %v1197 = vadd.f32 %v1195, %v1196
        %v1198 = vrot.slane %v1197, 1
        %v1199 = vadd.f32 %v1197, %v1198
        %v1200 = vmul.f32 %v1199, 10.0
        %v1201 = vadd.f32 %v1184, %v1200
        %vm1202 = vcmask 0
        %1203 = vst.msk [vmem:[%s449] sm:$0x1] %vm1202, %v1201
        %s1204 = sand.u32 %s176, 1
        %s1205 = sand.u32 %s176, 1
        %s1206 = smul.addr %s1205, 32
        %s1207 = scalar_lea.vmem [#allocation2], %s1206
        %p1208 = scmp.lt.s32.totalorder %s22, 1
        %s1209 = scalar_select %p1208, %s22, 1
        %p1210 = scmp.lt.s32.totalorder %s23, 1
        %s1211 = scalar_select %p1210, %s23, 1
        %s1212 = smul.addr %s1209, 2
        %s1213 = sadd.s32 %s1211, %s1212
        %s1214 = scalar_lea.vmem %s6, %s1213
        // Predicated region
        $region41: #{spatial_emb_loss_forward.3} parent=39 // pred_check
          %p1215 = pneg %p186
        $region42: #{spatial_emb_loss_forward.3} parent=39 // pred_check_branch
          %1217 = sbr.rel (%p1215) target = $region44
        $region43: #{spatial_emb_loss_forward.3} parent=39 // pred_region
          %s1218 = smul.u32 8, %s23
          %s1219 = ssub.s32 12, %s1218
          %p1220 = scmp.lt.s32.totalorder %s1219, 8
          %s1221 = scalar_select %p1220, %s1219, 8
          %s1222 = smul.u32 4, %s1221
          %p1223 = scmp.ne.s32.totalorder 0, %s1222
          %s1224 = smul.addr %s22, 12
          %s1225 = sadd.s32 %s1218, %s1224
          %s1226 = smul.addr %s1225, 4
          %s1227 = scalar_lea.vmem %s5, %s1226
          %s1228 = smul.u32 %s1221, 4
          // Predicated region
          $region45: #{spatial_emb_loss_forward.3} parent=43 // pred_check
            %p1229 = pneg %p1223
          $region46: #{spatial_emb_loss_forward.3} parent=43 // pred_check_branch
            %1231 = sbr.rel (%p1229) target = $region48
          $region47: #{spatial_emb_loss_forward.3} parent=43 // pred_region
            %p1232 = scmp.lt.u32.totalorder %s1228, 8
            %p1233 = pneg %p1232
            // Predicated region
            $region49: #{spatial_emb_loss_forward.3} parent=47 // pred_check
              _
            $region50: #{spatial_emb_loss_forward.3} parent=47 // pred_check_branch
              %1235 = sbr.rel (%p1232) target = $region52
            $region51: #{spatial_emb_loss_forward.3} parent=47 // pred_region
              %s1251 = sand.u32 %s1228, 7
              %p1252 = scmp.eq.s32.totalorder %s1251, 0
              // Predicated region
              $region64: #{spatial_emb_loss_forward.3} parent=51 // pred_check
                %p1253 = pneg %p1252
              $region65: #{spatial_emb_loss_forward.3} parent=51 // pred_check_branch
                %1255 = sbr.rel (%p1253) target = $region67
              $region66: #{spatial_emb_loss_forward.3} parent=51 // pred_region
                %s1256 = sshrl.u32 %s1228, 3
                %s1257 = sshrl.u32 %s1256, 5
                // While loop
                $region68: #{spatial_emb_loss_forward.3} parent=66 // loop_pre_header
                  _
                $region69: #{spatial_emb_loss_forward.3} parent=66 // loop_header
                  %s1259 = sphi 0, %s1261
                  %p1260 = scmp.ge.s32.totalorder %s1259, %s1257
                  %s1264 = sphi 0, %s1333
                  %s1265 = sphi %s1207, %s1336
                  %s1266 = sphi %s1227, %s1337
                $region70: #{spatial_emb_loss_forward.3} parent=66 // loop_header_branch
                  %1263 = sbr.rel (%p1260) target = $region74
                $region71: #{spatial_emb_loss_forward.3} parent=66 // loop_body
                  %v1267 = vld [vmem:[%s1265] sm:$0xff]
                  %1268 = vst [vmem:[%s1266] sm:$0xff] %v1267
                  %v1269 = vld [vmem:[%s1265 + $0x8] sm:$0xff]
                  %1270 = vst [vmem:[%s1266 + $0x8] sm:$0xff] %v1269
                  %v1271 = vld [vmem:[%s1265 + $0x10] sm:$0xff]
                  %1272 = vst [vmem:[%s1266 + $0x10] sm:$0xff] %v1271
                  %v1273 = vld [vmem:[%s1265 + $0x18] sm:$0xff]
                  %1274 = vst [vmem:[%s1266 + $0x18] sm:$0xff] %v1273
                  %v1275 = vld [vmem:[%s1265 + $0x20] sm:$0xff]
                  %1276 = vst [vmem:[%s1266 + $0x20] sm:$0xff] %v1275
                  %v1277 = vld [vmem:[%s1265 + $0x28] sm:$0xff]
                  %1278 = vst [vmem:[%s1266 + $0x28] sm:$0xff] %v1277
                  %v1279 = vld [vmem:[%s1265 + $0x30] sm:$0xff]
                  %1280 = vst [vmem:[%s1266 + $0x30] sm:$0xff] %v1279
                  %v1281 = vld [vmem:[%s1265 + $0x38] sm:$0xff]
                  %1282 = vst [vmem:[%s1266 + $0x38] sm:$0xff] %v1281
                  %v1283 = vld [vmem:[%s1265 + $0x40] sm:$0xff]
                  %1284 = vst [vmem:[%s1266 + $0x40] sm:$0xff] %v1283
                  %v1285 = vld [vmem:[%s1265 + $0x48] sm:$0xff]
                  %1286 = vst [vmem:[%s1266 + $0x48] sm:$0xff] %v1285
                  %v1287 = vld [vmem:[%s1265 + $0x50] sm:$0xff]
                  %1288 = vst [vmem:[%s1266 + $0x50] sm:$0xff] %v1287
                  %v1289 = vld [vmem:[%s1265 + $0x58] sm:$0xff]
                  %1290 = vst [vmem:[%s1266 + $0x58] sm:$0xff] %v1289
                  %v1291 = vld [vmem:[%s1265 + $0x60] sm:$0xff]
                  %1292 = vst [vmem:[%s1266 + $0x60] sm:$0xff] %v1291
                  %v1293 = vld [vmem:[%s1265 + $0x68] sm:$0xff]
                  %1294 = vst [vmem:[%s1266 + $0x68] sm:$0xff] %v1293
                  %v1295 = vld [vmem:[%s1265 + $0x70] sm:$0xff]
                  %1296 = vst [vmem:[%s1266 + $0x70] sm:$0xff] %v1295
                  %v1297 = vld [vmem:[%s1265 + $0x78] sm:$0xff]
                  %1298 = vst [vmem:[%s1266 + $0x78] sm:$0xff] %v1297
                  %v1299 = vld [vmem:[%s1265 + $0x80] sm:$0xff]
                  %1300 = vst [vmem:[%s1266 + $0x80] sm:$0xff] %v1299
                  %v1301 = vld [vmem:[%s1265 + $0x88] sm:$0xff]
                  %1302 = vst [vmem:[%s1266 + $0x88] sm:$0xff] %v1301
                  %v1303 = vld [vmem:[%s1265 + $0x90] sm:$0xff]
                  %1304 = vst [vmem:[%s1266 + $0x90] sm:$0xff] %v1303
                  %v1305 = vld [vmem:[%s1265 + $0x98] sm:$0xff]
                  %1306 = vst [vmem:[%s1266 + $0x98] sm:$0xff] %v1305
                  %v1307 = vld [vmem:[%s1265 + $0xa0] sm:$0xff]
                  %1308 = vst [vmem:[%s1266 + $0xa0] sm:$0xff] %v1307
                  %v1309 = vld [vmem:[%s1265 + $0xa8] sm:$0xff]
                  %1310 = vst [vmem:[%s1266 + $0xa8] sm:$0xff] %v1309
                  %v1311 = vld [vmem:[%s1265 + $0xb0] sm:$0xff]
                  %1312 = vst [vmem:[%s1266 + $0xb0] sm:$0xff] %v1311
                  %v1313 = vld [vmem:[%s1265 + $0xb8] sm:$0xff]
                  %1314 = vst [vmem:[%s1266 + $0xb8] sm:$0xff] %v1313
                  %v1315 = vld [vmem:[%s1265 + $0xc0] sm:$0xff]
                  %1316 = vst [vmem:[%s1266 + $0xc0] sm:$0xff] %v1315
                  %v1317 = vld [vmem:[%s1265 + $0xc8] sm:$0xff]
                  %1318 = vst [vmem:[%s1266 + $0xc8] sm:$0xff] %v1317
                  %v1319 = vld [vmem:[%s1265 + $0xd0] sm:$0xff]
                  %1320 = vst [vmem:[%s1266 + $0xd0] sm:$0xff] %v1319
                  %v1321 = vld [vmem:[%s1265 + $0xd8] sm:$0xff]
                  %1322 = vst [vmem:[%s1266 + $0xd8] sm:$0xff] %v1321
                  %v1323 = vld [vmem:[%s1265 + $0xe0] sm:$0xff]
                  %1324 = vst [vmem:[%s1266 + $0xe0] sm:$0xff] %v1323
                  %v1325 = vld [vmem:[%s1265 + $0xe8] sm:$0xff]
                  %1326 = vst [vmem:[%s1266 + $0xe8] sm:$0xff] %v1325
                  %v1327 = vld [vmem:[%s1265 + $0xf0] sm:$0xff]
                  %1328 = vst [vmem:[%s1266 + $0xf0] sm:$0xff] %v1327
                  %v1329 = vld [vmem:[%s1265 + $0xf8] sm:$0xff]
                  %1330 = vst [vmem:[%s1266 + $0xf8] sm:$0xff] %v1329
                  %s1331 = sadd.s32 1, %s1264
                  %p1332 = scmp.ge.s32.totalorder %s1331, %s1257
                  %s1333 = scalar_select %p1332, 0, %s1331
                  %s1334 = smul.u32 %s1333, 256
                  %s1335 = smul.u32 %s1333, 256
                  %s1336 = scalar_lea.vmem %s1207, %s1334 [#allocation2]
                  %s1337 = scalar_lea.vmem %s1227, %s1335
                $region72: #{spatial_emb_loss_forward.3} parent=66 // loop_footer
                  %s1261 = sadd.s32 %s1259, 1
                $region73: #{spatial_emb_loss_forward.3} parent=66 // loop_footer_branch
                  %1258 = sbr.rel target = $region69
                $region74: #{spatial_emb_loss_forward.3} parent=66 // loop_exit
                  _
                %s1338 = sshrl.u32 %s1256, 5
                %s1339 = sand.u32 %s1256, 31
                %s1340 = smul.u32 %s1338, 32
                %s1341 = smul.u32 8, %s1340
                %s1342 = scalar_lea.vmem %s1207, %s1341 [#allocation2]
                %s1343 = smul.u32 8, %s1340
                %s1344 = scalar_lea.vmem %s1227, %s1343
                // While loop
                $region75: #{spatial_emb_loss_forward.3} parent=66 // loop_pre_header
                  _
                $region76: #{spatial_emb_loss_forward.3} parent=66 // loop_header
                  %s1346 = sphi 0, %s1348
                  %p1347 = scmp.ge.s32.totalorder %s1346, %s1339
                  %s1351 = sphi 0, %s1358
                  %s1352 = sphi %s1342, %s1361
                  %s1353 = sphi %s1344, %s1362
                $region77: #{spatial_emb_loss_forward.3} parent=66 // loop_header_branch
                  %1350 = sbr.rel (%p1347) target = $region81
                $region78: #{spatial_emb_loss_forward.3} parent=66 // loop_body
                  %v1354 = vld [vmem:[%s1352] sm:$0xff]
                  %1355 = vst [vmem:[%s1353] sm:$0xff] %v1354
                  %s1356 = sadd.s32 1, %s1351
                  %p1357 = scmp.ge.s32.totalorder %s1356, %s1339
                  %s1358 = scalar_select %p1357, 0, %s1356
                  %s1359 = smul.u32 %s1358, 8
                  %s1360 = smul.u32 %s1358, 8
                  %s1361 = scalar_lea.vmem %s1342, %s1359 [#allocation2]
                  %s1362 = scalar_lea.vmem %s1344, %s1360
                $region79: #{spatial_emb_loss_forward.3} parent=66 // loop_footer
                  %s1348 = sadd.s32 %s1346, 1
                $region80: #{spatial_emb_loss_forward.3} parent=66 // loop_footer_branch
                  %1345 = sbr.rel target = $region76
                $region81: #{spatial_emb_loss_forward.3} parent=66 // loop_exit
                  _
              $region67: #{spatial_emb_loss_forward.3} parent=51 // pred_fallthru
                _
              %p1363 = pneg %p1252
              // Predicated region
              $region82: #{spatial_emb_loss_forward.3} parent=51 // pred_check
                _
              $region83: #{spatial_emb_loss_forward.3} parent=51 // pred_check_branch
                %1365 = sbr.rel (%p1252) target = $region85
              $region84: #{spatial_emb_loss_forward.3} parent=51 // pred_region
                %s1366 = sand.u32 %s1228, 7
                %s1367 = ssub.s32 %s1228, %s1366
                %s1368 = scalar_lea.vmem %s1207, %s1367 [#allocation2]
                %s1369 = ssub.s32 %s1228, %s1366
                %s1370 = scalar_lea.vmem %s1227, %s1369
                %s1371 = sshrl.u32 %s1228, 3
                %s1372 = sshrl.u32 %s1371, 5
                // While loop
                $region86: #{spatial_emb_loss_forward.3} parent=84 // loop_pre_header
                  _
                $region87: #{spatial_emb_loss_forward.3} parent=84 // loop_header
                  %s1374 = sphi 0, %s1376
                  %p1375 = scmp.ge.s32.totalorder %s1374, %s1372
                  %s1379 = sphi 0, %s1448
                  %s1380 = sphi %s1207, %s1451
                  %s1381 = sphi %s1227, %s1452
                $region88: #{spatial_emb_loss_forward.3} parent=84 // loop_header_branch
                  %1378 = sbr.rel (%p1375) target = $region92
                $region89: #{spatial_emb_loss_forward.3} parent=84 // loop_body
                  %v1382 = vld [vmem:[%s1380] sm:$0xff]
                  %1383 = vst [vmem:[%s1381] sm:$0xff] %v1382
                  %v1384 = vld [vmem:[%s1380 + $0x8] sm:$0xff]
                  %1385 = vst [vmem:[%s1381 + $0x8] sm:$0xff] %v1384
                  %v1386 = vld [vmem:[%s1380 + $0x10] sm:$0xff]
                  %1387 = vst [vmem:[%s1381 + $0x10] sm:$0xff] %v1386
                  %v1388 = vld [vmem:[%s1380 + $0x18] sm:$0xff]
                  %1389 = vst [vmem:[%s1381 + $0x18] sm:$0xff] %v1388
                  %v1390 = vld [vmem:[%s1380 + $0x20] sm:$0xff]
                  %1391 = vst [vmem:[%s1381 + $0x20] sm:$0xff] %v1390
                  %v1392 = vld [vmem:[%s1380 + $0x28] sm:$0xff]
                  %1393 = vst [vmem:[%s1381 + $0x28] sm:$0xff] %v1392
                  %v1394 = vld [vmem:[%s1380 + $0x30] sm:$0xff]
                  %1395 = vst [vmem:[%s1381 + $0x30] sm:$0xff] %v1394
                  %v1396 = vld [vmem:[%s1380 + $0x38] sm:$0xff]
                  %1397 = vst [vmem:[%s1381 + $0x38] sm:$0xff] %v1396
                  %v1398 = vld [vmem:[%s1380 + $0x40] sm:$0xff]
                  %1399 = vst [vmem:[%s1381 + $0x40] sm:$0xff] %v1398
                  %v1400 = vld [vmem:[%s1380 + $0x48] sm:$0xff]
                  %1401 = vst [vmem:[%s1381 + $0x48] sm:$0xff] %v1400
                  %v1402 = vld [vmem:[%s1380 + $0x50] sm:$0xff]
                  %1403 = vst [vmem:[%s1381 + $0x50] sm:$0xff] %v1402
                  %v1404 = vld [vmem:[%s1380 + $0x58] sm:$0xff]
                  %1405 = vst [vmem:[%s1381 + $0x58] sm:$0xff] %v1404
                  %v1406 = vld [vmem:[%s1380 + $0x60] sm:$0xff]
                  %1407 = vst [vmem:[%s1381 + $0x60] sm:$0xff] %v1406
                  %v1408 = vld [vmem:[%s1380 + $0x68] sm:$0xff]
                  %1409 = vst [vmem:[%s1381 + $0x68] sm:$0xff] %v1408
                  %v1410 = vld [vmem:[%s1380 + $0x70] sm:$0xff]
                  %1411 = vst [vmem:[%s1381 + $0x70] sm:$0xff] %v1410
                  %v1412 = vld [vmem:[%s1380 + $0x78] sm:$0xff]
                  %1413 = vst [vmem:[%s1381 + $0x78] sm:$0xff] %v1412
                  %v1414 = vld [vmem:[%s1380 + $0x80] sm:$0xff]
                  %1415 = vst [vmem:[%s1381 + $0x80] sm:$0xff] %v1414
                  %v1416 = vld [vmem:[%s1380 + $0x88] sm:$0xff]
                  %1417 = vst [vmem:[%s1381 + $0x88] sm:$0xff] %v1416
                  %v1418 = vld [vmem:[%s1380 + $0x90] sm:$0xff]
                  %1419 = vst [vmem:[%s1381 + $0x90] sm:$0xff] %v1418
                  %v1420 = vld [vmem:[%s1380 + $0x98] sm:$0xff]
                  %1421 = vst [vmem:[%s1381 + $0x98] sm:$0xff] %v1420
                  %v1422 = vld [vmem:[%s1380 + $0xa0] sm:$0xff]
                  %1423 = vst [vmem:[%s1381 + $0xa0] sm:$0xff] %v1422
                  %v1424 = vld [vmem:[%s1380 + $0xa8] sm:$0xff]
                  %1425 = vst [vmem:[%s1381 + $0xa8] sm:$0xff] %v1424
                  %v1426 = vld [vmem:[%s1380 + $0xb0] sm:$0xff]
                  %1427 = vst [vmem:[%s1381 + $0xb0] sm:$0xff] %v1426
                  %v1428 = vld [vmem:[%s1380 + $0xb8] sm:$0xff]
                  %1429 = vst [vmem:[%s1381 + $0xb8] sm:$0xff] %v1428
                  %v1430 = vld [vmem:[%s1380 + $0xc0] sm:$0xff]
                  %1431 = vst [vmem:[%s1381 + $0xc0] sm:$0xff] %v1430
                  %v1432 = vld [vmem:[%s1380 + $0xc8] sm:$0xff]
                  %1433 = vst [vmem:[%s1381 + $0xc8] sm:$0xff] %v1432
                  %v1434 = vld [vmem:[%s1380 + $0xd0] sm:$0xff]
                  %1435 = vst [vmem:[%s1381 + $0xd0] sm:$0xff] %v1434
                  %v1436 = vld [vmem:[%s1380 + $0xd8] sm:$0xff]
                  %1437 = vst [vmem:[%s1381 + $0xd8] sm:$0xff] %v1436
                  %v1438 = vld [vmem:[%s1380 + $0xe0] sm:$0xff]
                  %1439 = vst [vmem:[%s1381 + $0xe0] sm:$0xff] %v1438
                  %v1440 = vld [vmem:[%s1380 + $0xe8] sm:$0xff]
                  %1441 = vst [vmem:[%s1381 + $0xe8] sm:$0xff] %v1440
                  %v1442 = vld [vmem:[%s1380 + $0xf0] sm:$0xff]
                  %1443 = vst [vmem:[%s1381 + $0xf0] sm:$0xff] %v1442
                  %v1444 = vld [vmem:[%s1380 + $0xf8] sm:$0xff]
                  %1445 = vst [vmem:[%s1381 + $0xf8] sm:$0xff] %v1444
                  %s1446 = sadd.s32 1, %s1379
                  %p1447 = scmp.ge.s32.totalorder %s1446, %s1372
                  %s1448 = scalar_select %p1447, 0, %s1446
                  %s1449 = smul.u32 %s1448, 256
                  %s1450 = smul.u32 %s1448, 256
                  %s1451 = scalar_lea.vmem %s1207, %s1449 [#allocation2]
                  %s1452 = scalar_lea.vmem %s1227, %s1450
                $region90: #{spatial_emb_loss_forward.3} parent=84 // loop_footer
                  %s1376 = sadd.s32 %s1374, 1
                $region91: #{spatial_emb_loss_forward.3} parent=84 // loop_footer_branch
                  %1373 = sbr.rel target = $region87
                $region92: #{spatial_emb_loss_forward.3} parent=84 // loop_exit
                  _
                %s1453 = sshrl.u32 %s1371, 5
                %s1454 = sand.u32 %s1371, 31
                %s1455 = smul.u32 %s1453, 32
                %s1456 = smul.u32 8, %s1455
                %s1457 = scalar_lea.vmem %s1207, %s1456 [#allocation2]
                %s1458 = smul.u32 8, %s1455
                %s1459 = scalar_lea.vmem %s1227, %s1458
                // While loop
                $region93: #{spatial_emb_loss_forward.3} parent=84 // loop_pre_header
                  _
                $region94: #{spatial_emb_loss_forward.3} parent=84 // loop_header
                  %s1461 = sphi 0, %s1463
                  %p1462 = scmp.ge.s32.totalorder %s1461, %s1454
                  %s1466 = sphi 0, %s1473
                  %s1467 = sphi %s1457, %s1476
                  %s1468 = sphi %s1459, %s1477
                $region95: #{spatial_emb_loss_forward.3} parent=84 // loop_header_branch
                  %1465 = sbr.rel (%p1462) target = $region99
                $region96: #{spatial_emb_loss_forward.3} parent=84 // loop_body
                  %v1469 = vld [vmem:[%s1467] sm:$0xff]
                  %1470 = vst [vmem:[%s1468] sm:$0xff] %v1469
                  %s1471 = sadd.s32 1, %s1466
                  %p1472 = scmp.ge.s32.totalorder %s1471, %s1454
                  %s1473 = scalar_select %p1472, 0, %s1471
                  %s1474 = smul.u32 %s1473, 8
                  %s1475 = smul.u32 %s1473, 8
                  %s1476 = scalar_lea.vmem %s1457, %s1474 [#allocation2]
                  %s1477 = scalar_lea.vmem %s1459, %s1475
                $region97: #{spatial_emb_loss_forward.3} parent=84 // loop_footer
                  %s1463 = sadd.s32 %s1461, 1
                $region98: #{spatial_emb_loss_forward.3} parent=84 // loop_footer_branch
                  %1460 = sbr.rel target = $region94
                $region99: #{spatial_emb_loss_forward.3} parent=84 // loop_exit
                  _
                %s1478 = sshll.u32 1, %s1366
                %s1479 = ssub.s32 %s1478, 1
                loop: start=0, step=1, limit=1
                $region100: #{spatial_emb_loss_forward.3} parent=84 // loop_pre_header
                  _
                $region101: #{spatial_emb_loss_forward.3} parent=84 // loop_header
                  %s1481 = sphi 0, %s1485
                  %p1482 = scmp.ge.s32.totalorder %s1481, 1
                  %s1486 = sphi %s1368, %s1368
                  %s1487 = sphi %s1370, %s1370
                $region102: #{spatial_emb_loss_forward.3} parent=84 // loop_header_branch
                  %1484 = sbr.rel (%p1482) target = $region106
                $region103: #{spatial_emb_loss_forward.3} parent=84 // loop_body
                  %v1488 = vld [vmem:[%s1486] sm:%s1479]
                  %1489 = vst [vmem:[%s1487] sm:%s1479] %v1488
                $region104: #{spatial_emb_loss_forward.3} parent=84 // loop_footer
                  %s1485 = sadd.s32 1, %s1481
                $region105: #{spatial_emb_loss_forward.3} parent=84 // loop_footer_branch
                  %1480 = sbr.rel target = $region101
                $region106: #{spatial_emb_loss_forward.3} parent=84 // loop_exit
                  _
              $region85: #{spatial_emb_loss_forward.3} parent=51 // pred_fallthru
                _
            $region52: #{spatial_emb_loss_forward.3} parent=47 // pred_fallthru
              _
            // Predicated region
            $region53: #{spatial_emb_loss_forward.3} parent=47 // pred_check
              %p1236 = pneg %p1232
            $region54: #{spatial_emb_loss_forward.3} parent=47 // pred_check_branch
              %1238 = sbr.rel (%p1236) target = $region56
            $region55: #{spatial_emb_loss_forward.3} parent=47 // pred_region
              %s1239 = sshll.u32 1, %s1228
              %s1240 = ssub.s32 %s1239, 1
              loop: start=0, step=1, limit=1
              $region57: #{spatial_emb_loss_forward.3} parent=55 // loop_pre_header
                _
              $region58: #{spatial_emb_loss_forward.3} parent=55 // loop_header
                %s1242 = sphi 0, %s1246
                %p1243 = scmp.ge.s32.totalorder %s1242, 1
                %s1247 = sphi %s1207, %s1207
                %s1248 = sphi %s1227, %s1227
              $region59: #{spatial_emb_loss_forward.3} parent=55 // loop_header_branch
                %1245 = sbr.rel (%p1243) target = $region63
              $region60: #{spatial_emb_loss_forward.3} parent=55 // loop_body
                %v1249 = vld [vmem:[%s1247] sm:%s1240]
                %1250 = vst [vmem:[%s1248] sm:%s1240] %v1249
              $region61: #{spatial_emb_loss_forward.3} parent=55 // loop_footer
                %s1246 = sadd.s32 1, %s1242
              $region62: #{spatial_emb_loss_forward.3} parent=55 // loop_footer_branch
                %1241 = sbr.rel target = $region58
              $region63: #{spatial_emb_loss_forward.3} parent=55 // loop_exit
                _
            $region56: #{spatial_emb_loss_forward.3} parent=47 // pred_fallthru
              _
          $region48: #{spatial_emb_loss_forward.3} parent=43 // pred_fallthru
            _
          %1490 = vnop
        $region44: #{spatial_emb_loss_forward.3} parent=39 // pred_fallthru
          _
        // Predicated region
        $region107: #{spatial_emb_loss_forward.3} parent=39 // pred_check
          %p1491 = pneg %p214
        $region108: #{spatial_emb_loss_forward.3} parent=39 // pred_check_branch
          %1493 = sbr.rel (%p1491) target = $region110
        $region109: #{spatial_emb_loss_forward.3} parent=39 // pred_region
          _
        $region110: #{spatial_emb_loss_forward.3} parent=39 // pred_fallthru
          _
      $region40: #{spatial_emb_loss_forward.3} parent=5 // pred_fallthru
        _
      %p1494 = scmp.le.s32.totalorder 2, %s13
      // Predicated region
      $region111: #{spatial_emb_loss_forward.3} parent=5 // pred_check
        %p1495 = pneg %p1494
      $region112: #{spatial_emb_loss_forward.3} parent=5 // pred_check_branch
        %1497 = sbr.rel (%p1495) target = $region114
      $region113: #{spatial_emb_loss_forward.3} parent=5 // pred_region
        %s1498 = ssub.s32 %s13, 2
        // Predicated region
        $region115: #{spatial_emb_loss_forward.3} parent=113 // pred_check
          %p1499 = pneg %p192
        $region116: #{spatial_emb_loss_forward.3} parent=113 // pred_check_branch
          %1501 = sbr.rel (%p1499) target = $region118
        $region117: #{spatial_emb_loss_forward.3} parent=113 // pred_region
          %s1502 = sand.u32 %s177, 1
          %s1503 = sand.u32 %s177, 1
          %s1504 = smul.addr %s1503, 32
          %s1505 = scalar_lea.vmem [#allocation2], %s1504
        $region118: #{spatial_emb_loss_forward.3} parent=113 // pred_fallthru
          _
        // Predicated region
        $region119: #{spatial_emb_loss_forward.3} parent=113 // pred_check
          %p1506 = pneg %p220
        $region120: #{spatial_emb_loss_forward.3} parent=113 // pred_check_branch
          %1508 = sbr.rel (%p1506) target = $region122
        $region121: #{spatial_emb_loss_forward.3} parent=113 // pred_region
          %p1509 = scmp.lt.s32.totalorder %s24, 1
          %s1510 = scalar_select %p1509, %s24, 1
          %p1511 = scmp.lt.s32.totalorder %s25, 1
          %s1512 = scalar_select %p1511, %s25, 1
          %s1513 = smul.addr %s1510, 2
          %s1514 = sadd.s32 %s1512, %s1513
          %s1515 = scalar_lea.vmem %s6, %s1514
        $region122: #{spatial_emb_loss_forward.3} parent=113 // pred_fallthru
          _
      $region114: #{spatial_emb_loss_forward.3} parent=5 // pred_fallthru
        _
    $region6: #{spatial_emb_loss_forward.3} parent=1 // loop_footer
      %s17 = sadd.s32 1, %s13
    $region7: #{spatial_emb_loss_forward.3} parent=1 // loop_footer_branch
      %12 = sbr.rel target = $region3
    $region8: #{spatial_emb_loss_forward.3} parent=1 // loop_exit
      _

</llo_original>
